<compile_context>
chip_gen: v7x
topology: tpu7x:2x2x1
jax: 0.10.0
libtpu: 0.0.40
codegen_flags: <defaults>
</compile_context>

<pallas_src>
import jax
import jax.numpy as jnp
from jax import lax
from jax.experimental import pallas as pl
from jax.experimental.pallas import tpu as pltpu

C1 = 16          # conv channels (K1 = 1)
LANES = 128      # lane-dense padded channel width
VMEM_LIMIT = 32 * 1024 * 1024


# ----------------------------------------------------------------------------
# Pallas kernels
# ----------------------------------------------------------------------------
def _conv_pool_kernel(p_ref, w_ref, b_ref, o_ref):
    """conv (as matmul over pre-extracted patches) + 2x2 maxpool + bias + ReLU.

    p_ref: [4, R, K]   bf16 -- 4 pool candidates (di,dj), R pooled rows, K patch dim
    w_ref: [K, 128]    bf16 (cout zero-padded 16->128)
    b_ref: [1, 128]    f32
    o_ref: [R, 128]    bf16 (lane-dense)
    """
    w = w_ref[...]
    d0 = jnp.dot(p_ref[0], w, preferred_element_type=jnp.float32)
    d1 = jnp.dot(p_ref[1], w, preferred_element_type=jnp.float32)
    d2 = jnp.dot(p_ref[2], w, preferred_element_type=jnp.float32)
    d3 = jnp.dot(p_ref[3], w, preferred_element_type=jnp.float32)
    pooled = jnp.maximum(jnp.maximum(d0, d1), jnp.maximum(d2, d3))
    # bias + ReLU hoisted out of the pool branches (exactly equivalent).
    o_ref[...] = jnp.maximum(pooled + b_ref[...], 0.0).astype(o_ref.dtype)


def _mlp_kernel(x_ref, w1_ref, b1_ref, w2_ref, b2_ref, w3_ref, b3_ref, o_ref):
    """fc1+ReLU -> fc2+ReLU -> fc3; bf16 matmul operands, f32 accumulation."""
    h1 = jnp.dot(x_ref[...], w1_ref[...], preferred_element_type=jnp.float32) + b1_ref[...]
    h1 = jnp.maximum(h1, 0.0).astype(jnp.bfloat16)
    h2 = jnp.dot(h1, w2_ref[...], preferred_element_type=jnp.float32) + b2_ref[...]
    h2 = jnp.maximum(h2, 0.0).astype(jnp.bfloat16)
    out = jnp.dot(h2, w3_ref[...], preferred_element_type=jnp.float32) + b3_ref[...]
    o_ref[...] = out  # f32, lane-dense (128 cols)


# ----------------------------------------------------------------------------
# helpers
# ----------------------------------------------------------------------------
def _round_up(n, m):
    return ((n + m - 1) // m) * m


def _pad_axis(a, axis, target):
    if a.shape[axis] == target:
        return a
    pad = [(0, 0)] * a.ndim
    pad[axis] = (0, target - a.shape[axis])
    return jnp.pad(a, pad)


def _choose_row_block(rows, cap=512):
    """Largest block <= cap (multiple of 8) that still yields >= 2 grid steps
    whenever rows allow (keeps pipelining alive and feeds both v7x cores)."""
    half = _round_up((rows + 1) // 2, 8)
    return max(8, min(cap, half))


# ----------------------------------------------------------------------------
# pallas_call wrappers
# ----------------------------------------------------------------------------
def _conv_pool_call(patches, w, b):
    """patches: [4, R, K] bf16, w: [K, 128] bf16, b: [1, 128] f32 -> [R, 128] bf16."""
    n_pool, rows, kdim = patches.shape
    cout = w.shape[1]

    row_block = _choose_row_block(rows)
    rows_padded = _round_up(rows, row_block)
    if rows_padded != rows:
        patches = _pad_axis(patches, 1, rows_padded)      # zero rows, sliced off below
    grid = (rows_padded // row_block,)

    flops = 2 * n_pool * rows_padded * kdim * cout
    bytes_accessed = (patches.size * 2 + w.size * 2 + b.size * 4
                      + rows_padded * cout * 2)

    out = pl.pallas_call(
        _conv_pool_kernel,
        out_shape=jax.ShapeDtypeStruct((rows_padded, cout), jnp.bfloat16),
        grid=grid,
        in_specs=[
            pl.BlockSpec((n_pool, row_block, kdim), lambda i: (0, i, 0)),
            pl.BlockSpec((kdim, cout), lambda i: (0, 0)),      # weights resident
            pl.BlockSpec((1, cout), lambda i: (0, 0)),
        ],
        out_specs=pl.BlockSpec((row_block, cout), lambda i: (i, 0)),
        compiler_params=pltpu.CompilerParams(
            dimension_semantics=("parallel",),
            vmem_limit_bytes=VMEM_LIMIT),
        cost_estimate=pl.CostEstimate(flops=flops, transcendentals=0,
                                      bytes_accessed=bytes_accessed),
    )(patches, w, b)
    return out[:rows]


def _mlp_call(x, w1, b1, w2, b2, w3, b3):
    """x: [B, 512] bf16 -> [B, 128] f32 (lane-dense padded logits)."""
    B = x.shape[0]
    row_block = max(8, min(256, _round_up(B, 8)))
    b_padded = _round_up(B, row_block)
    if b_padded != B:
        x = _pad_axis(x, 0, b_padded)
    grid = (b_padded // row_block,)

    flops = 2 * b_padded * (512 * 256 + 256 * 128 + 128 * 128)
    bytes_accessed = (x.size * 2 + (w1.size + w2.size + w3.size) * 2
                      + (b1.size + b2.size + b3.size) * 4 + b_padded * 128 * 4)

    out = pl.pallas_call(
        _mlp_kernel,
        out_shape=jax.ShapeDtypeStruct((b_padded, 128), jnp.float32),
        grid=grid,
        in_specs=[
            pl.BlockSpec((row_block, 512), lambda i: (i, 0)),
            pl.BlockSpec((512, 256), lambda i: (0, 0)),        # weights resident
            pl.BlockSpec((1, 256), lambda i: (0, 0)),
            pl.BlockSpec((256, 128), lambda i: (0, 0)),
            pl.BlockSpec((1, 128), lambda i: (0, 0)),
            pl.BlockSpec((128, 128), lambda i: (0, 0)),
            pl.BlockSpec((1, 128), lambda i: (0, 0)),
        ],
        out_specs=pl.BlockSpec((row_block, 128), lambda i: (i, 0)),
        compiler_params=pltpu.CompilerParams(
            dimension_semantics=("parallel",),
            vmem_limit_bytes=VMEM_LIMIT),
        cost_estimate=pl.CostEstimate(flops=flops, transcendentals=0,
                                      bytes_accessed=bytes_accessed),
    )(x, w1, b1, w2, b2, w3, b3)
    return out[:B]


# ----------------------------------------------------------------------------
# Wrapper-side data movement (im2col / padding; no FLOPs here)
# ----------------------------------------------------------------------------
def _pool_grouped_patches(x_nhwc, k):
    """im2col patches, rows grouped so each leading index is one 2x2 pool candidate.

    x_nhwc: [B, H, W, C] -> [4, B*(oh//2)*(ow//2), k*k*C]  (patch lanes in (dh,dw,c) order)
    """
    B, H, W, C = x_nhwc.shape
    oh = H - k + 1
    half = oh // 2
    cols = [x_nhwc[:, dh:dh + oh, dw:dw + oh, :] for dh in range(k) for dw in range(k)]
    p = jnp.stack(cols, axis=3)                  # [B, oh, oh, k*k, C]
    p = p.reshape(B, oh, oh, k * k * C)          # lane order (dh, dw, c)
    p = p.reshape(B, half, 2, half, 2, k * k * C)
    p = jnp.transpose(p, (2, 4, 0, 1, 3, 5))     # [2(di), 2(dj), B, half, half, KC]
    return p.reshape(4, B * half * half, k * k * C)


def _pad_conv_weights(w, b, kdim_pad):
    """[kh,kw,cin,cout] -> ([kdim_pad,128] bf16, [1,128] f32) with zero padding."""
    kh, kw, cin, cout = w.shape
    w2 = w.reshape(kh * kw * cin, cout).astype(jnp.bfloat16)
    w2 = _pad_axis(_pad_axis(w2, 0, kdim_pad), 1, LANES)
    b2 = _pad_axis(b.reshape(1, cout).astype(jnp.float32), 1, LANES)
    return w2, b2


def student_cnn_cifar10_forward(x, params):
    """x: [B, 3, 32, 32] float32 -> logits [B, 10] float32."""
    bf16, f32 = jnp.bfloat16, jnp.float32
    B = x.shape[0]

    # ---- conv1 + ReLU + pool ------------------------------------------------
    x_nhwc = jnp.transpose(x, (0, 2, 3, 1)).astype(bf16)        # bf16 BEFORE im2col
    p1 = _pool_grouped_patches(x_nhwc, k=5)                     # [4, B*196, 75] bf16
    p1 = _pad_axis(p1, 2, 128)                                  # K 75 -> 128
    w1, b1 = _pad_conv_weights(params["w1"], params["b1"], 128)
    a1 = _conv_pool_call(p1, w1, b1)[:, :C1]                    # [B*196, 16] bf16

    # ---- conv2 + ReLU + pool ------------------------------------------------
    a1_nhwc = a1.reshape(B, 14, 14, C1)
    p2 = _pool_grouped_patches(a1_nhwc, k=5)                    # [4, B*25, 400] bf16
    p2 = _pad_axis(p2, 2, 512)                                  # K 400 -> 512
    w2, b2 = _pad_conv_weights(params["w2"], params["b2"], 512)
    a2 = _conv_pool_call(p2, w2, b2)[:, :C1]                    # [B*25, 16] bf16

    # ---- flatten + FC head --------------------------------------------------
    feat = _pad_axis(a2.reshape(B, 25 * C1), 1, 512)            # [B, 512] bf16 (zero pad)
    fc1_w = _pad_axis(_pad_axis(params["fc1_w"].astype(bf16), 0, 512), 1, 256)
    fc1_b = _pad_axis(params["fc1_b"].reshape(1, -1).astype(f32), 1, 256)
    fc2_w = _pad_axis(_pad_axis(params["fc2_w"].astype(bf16), 0, 256), 1, 128)
    fc2_b = _pad_axis(params["fc2_b"].reshape(1, -1).astype(f32), 1, 128)
    fc3_w = _pad_axis(_pad_axis(params["fc3_w"].astype(bf16), 0, 128), 1, 128)
    fc3_b = _pad_axis(params["fc3_b"].reshape(1, -1).astype(f32), 1, 128)

    logits_padded = _mlp_call(feat, fc1_w, fc1_b, fc2_w, fc2_b, fc3_w, fc3_b)  # [B,128]
    return logits_padded[:, :10]


# ----------------------------------------------------------------------------
# Params + pure-JAX reference (same dtype boundaries, standard conv/pool ops)
# ----------------------------------------------------------------------------
def init_params(key):
    ks = jax.random.split(key, 5)

    def conv_init(k, kh, kw, cin, cout):
        kwk, kbk = jax.random.split(k)
        bound = 1.0 / (cin * kh * kw) ** 0.5
        w = jax.random.uniform(kwk, (kh, kw, cin, cout), jnp.float32, -bound, bound)
        b = jax.random.uniform(kbk, (cout,), jnp.float32, -bound, bound)
        return w, b

    def linear_init(k, fan_in, fan_out):
        kwk, kbk = jax.random.split(k)
        bound = 1.0 / fan_in ** 0.5
        w = jax.random.uniform(kwk, (fan_in, fan_out), jnp.float32, -bound, bound)
        b = jax.random.uniform(kbk, (fan_out,), jnp.float32, -bound, bound)
        return w, b

    w1, b1 = conv_init(ks[0], 5, 5, 3, C1)
    w2, b2 = conv_init(ks[1], 5, 5, C1, C1)
    fc1_w, fc1_b = linear_init(ks[2], 25 * C1, 200)
    fc2_w, fc2_b = linear_init(ks[3], 200, 50)
    fc3_w, fc3_b = linear_init(ks[4], 50, 10)
    return dict(w1=w1, b1=b1, w2=w2, b2=b2, fc1_w=fc1_w, fc1_b=fc1_b,
                fc2_w=fc2_w, fc2_b=fc2_b, fc3_w=fc3_w, fc3_b=fc3_b)


def reference_forward(x, params):
    """Independent pure-JAX reference (lax.conv / reduce_window), same bf16 boundaries."""
    bf16, f32 = jnp.bfloat16, jnp.float32
    dn = ("NHWC", "HWIO", "NHWC")
    a = jnp.transpose(x.astype(f32), (0, 2, 3, 1)).astype(bf16)
    a = lax.conv_general_dilated(a, params["w1"].astype(bf16), (1, 1), "VALID",
                                 dimension_numbers=dn, preferred_element_type=f32)
    a = jnp.maximum(a + params["b1"], 0.0)
    a = lax.reduce_window(a, -jnp.inf, lax.max, (1, 2, 2, 1), (1, 2, 2, 1), "VALID")
    a = a.astype(bf16)
    a = lax.conv_general_dilated(a, params["w2"].astype(bf16), (1, 1), "VALID",
                                 dimension_numbers=dn, preferred_element_type=f32)
    a = jnp.maximum(a + params["b2"], 0.0)
    a = lax.reduce_window(a, -jnp.inf, lax.max, (1, 2, 2, 1), (1, 2, 2, 1), "VALID")
    feat = a.reshape(a.shape[0], -1).astype(bf16)        # (h, w, c) flatten order
    h1 = jnp.maximum(jnp.dot(feat, params["fc1_w"].astype(bf16),
                             preferred_element_type=f32) + params["fc1_b"], 0.0)
    h2 = jnp.maximum(jnp.dot(h1.astype(bf16), params["fc2_w"].astype(bf16),
                             preferred_element_type=f32) + params["fc2_b"], 0.0)
    return jnp.dot(h2.astype(bf16), params["fc3_w"].astype(bf16),
                   preferred_element_type=f32) + params["fc3_b"]


if __name__ == "__main__":
    key = jax.random.PRNGKey(0)
    kp, kx = jax.random.split(key)
    params = init_params(kp)
    x = jax.random.normal(kx, (4, 3, 32, 32), dtype=jnp.float32)  # small CIFAR batch

    fwd = jax.jit(student_cnn_cifar10_forward)
    out = jax.block_until_ready(fwd(x, params))

    ref = jax.jit(reference_forward)(x, params)
    assert out.shape == (4, 10), out.shape
    assert jnp.allclose(out, ref, atol=1e-2, rtol=1e-2), (
        "mismatch vs reference, max abs err = %f" % float(jnp.max(jnp.abs(out - ref))))
    print("KERNEL_OK")
</pallas_src>

<mosaic_0001>
module attributes {stable_mosaic.version = 11 : i64} {
  func.func @_conv_pool_kernel(%arg0: i32, %arg1: memref<4x392x128xbf16, #tpu.memory_space<vmem>>, %arg2: memref<128x128xbf16, #tpu.memory_space<vmem>>, %arg3: memref<1x128xf32, #tpu.memory_space<vmem>>, %arg4: memref<392x128xbf16, #tpu.memory_space<vmem>>) attributes {dimension_semantics = [#tpu.dimension_semantics<parallel>], iteration_bounds = array<i64: 2>, scalar_prefetch = 0 : i64, scratch_operands = 0 : i64, tpu.core_type = #tpu.core_type<tc>, window_params = [{transform_indices = @transform_0, window_bounds = array<i64: 4, 392, 128>}, {pipeline_mode = #tpu.pipeline_mode<synchronous>, transform_indices = @transform_1, window_bounds = array<i64: 128, 128>}, {pipeline_mode = #tpu.pipeline_mode<synchronous>, transform_indices = @transform_2, window_bounds = array<i64: 1, 128>}, {transform_indices = @transform_3, window_bounds = array<i64: 392, 128>}]} {
    %c0 = arith.constant 0 : index
    %c0_0 = arith.constant 0 : index
    %0 = vector.load %arg2[%c0, %c0_0] : memref<128x128xbf16, #tpu.memory_space<vmem>>, vector<128x128xbf16>
    %c0_1 = arith.constant 0 : index
    %c0_2 = arith.constant 0 : index
    %c0_3 = arith.constant 0 : index
    %1 = vector.load %arg1[%c0_1, %c0_2, %c0_3] : memref<4x392x128xbf16, #tpu.memory_space<vmem>>, vector<1x392x128xbf16>
    %2 = vector.shape_cast %1 : vector<1x392x128xbf16> to vector<392x128xbf16>
    %cst = arith.constant dense<0.000000e+00> : vector<392x128xf32>
    %3 = tpu.matmul %2, %0, %cst {dimension_numbers = #tpu.dot_dimension_numbers<[1], [0], [0], [1], [0, 0, 1, 1], [], []>} : vector<392x128xbf16>, vector<128x128xbf16>, vector<392x128xf32> -> vector<392x128xf32>
    %c1 = arith.constant 1 : index
    %c0_4 = arith.constant 0 : index
    %c0_5 = arith.constant 0 : index
    %4 = vector.load %arg1[%c1, %c0_4, %c0_5] : memref<4x392x128xbf16, #tpu.memory_space<vmem>>, vector<1x392x128xbf16>
    %5 = vector.shape_cast %4 : vector<1x392x128xbf16> to vector<392x128xbf16>
    %cst_6 = arith.constant dense<0.000000e+00> : vector<392x128xf32>
    %6 = tpu.matmul %5, %0, %cst_6 {dimension_numbers = #tpu.dot_dimension_numbers<[1], [0], [0], [1], [0, 0, 1, 1], [], []>} : vector<392x128xbf16>, vector<128x128xbf16>, vector<392x128xf32> -> vector<392x128xf32>
    %c2 = arith.constant 2 : index
    %c0_7 = arith.constant 0 : index
    %c0_8 = arith.constant 0 : index
    %7 = vector.load %arg1[%c2, %c0_7, %c0_8] : memref<4x392x128xbf16, #tpu.memory_space<vmem>>, vector<1x392x128xbf16>
    %8 = vector.shape_cast %7 : vector<1x392x128xbf16> to vector<392x128xbf16>
    %cst_9 = arith.constant dense<0.000000e+00> : vector<392x128xf32>
    %9 = tpu.matmul %8, %0, %cst_9 {dimension_numbers = #tpu.dot_dimension_numbers<[1], [0], [0], [1], [0, 0, 1, 1], [], []>} : vector<392x128xbf16>, vector<128x128xbf16>, vector<392x128xf32> -> vector<392x128xf32>
    %c3 = arith.constant 3 : index
    %c0_10 = arith.constant 0 : index
    %c0_11 = arith.constant 0 : index
    %10 = vector.load %arg1[%c3, %c0_10, %c0_11] : memref<4x392x128xbf16, #tpu.memory_space<vmem>>, vector<1x392x128xbf16>
    %11 = vector.shape_cast %10 : vector<1x392x128xbf16> to vector<392x128xbf16>
    %cst_12 = arith.constant dense<0.000000e+00> : vector<392x128xf32>
    %12 = tpu.matmul %11, %0, %cst_12 {dimension_numbers = #tpu.dot_dimension_numbers<[1], [0], [0], [1], [0, 0, 1, 1], [], []>} : vector<392x128xbf16>, vector<128x128xbf16>, vector<392x128xf32> -> vector<392x128xf32>
    %13 = arith.maximumf %3, %6 : vector<392x128xf32>
    %14 = arith.maximumf %9, %12 : vector<392x128xf32>
    %15 = arith.maximumf %13, %14 : vector<392x128xf32>
    %c0_13 = arith.constant 0 : index
    %c0_14 = arith.constant 0 : index
    %16 = vector.load %arg3[%c0_13, %c0_14] : memref<1x128xf32, #tpu.memory_space<vmem>>, vector<1x128xf32>
    %17 = vector.broadcast %16 : vector<1x128xf32> to vector<392x128xf32>
    %18 = arith.addf %15, %17 : vector<392x128xf32>
    %cst_15 = arith.constant 0.000000e+00 : f32
    %19 = vector.broadcast %cst_15 : f32 to vector<392x128xf32>
    %20 = arith.maximumf %18, %19 : vector<392x128xf32>
    %21 = arith.truncf %20 : vector<392x128xf32> to vector<392x128xbf16>
    %c0_16 = arith.constant 0 : index
    %c0_17 = arith.constant 0 : index
    %22 = vector.load %arg4[%c0_16, %c0_17] : memref<392x128xbf16, #tpu.memory_space<vmem>>, vector<392x128xbf16>
    tpu.vector_store %arg4[%c0_16, %c0_17], %21 {strides = array<i32>} : memref<392x128xbf16, #tpu.memory_space<vmem>>, vector<392x128xbf16>,
    return
  }
  func.func @transform_0(%arg0: i32) -> (i32, i32, i32) {
    %c0_i32 = arith.constant 0 : i32
    %c0_i32_0 = arith.constant 0 : i32
    %c0_i32_1 = arith.constant 0 : i32
    return %c0_i32, %arg0, %c0_i32_0 : i32, i32, i32
  }
  func.func @transform_1(%arg0: i32) -> (i32, i32) {
    %c0_i32 = arith.constant 0 : i32
    %c0_i32_0 = arith.constant 0 : i32
    %c0_i32_1 = arith.constant 0 : i32
    return %c0_i32, %c0_i32_0 : i32, i32
  }
  func.func @transform_2(%arg0: i32) -> (i32, i32) {
    %c0_i32 = arith.constant 0 : i32
    %c0_i32_0 = arith.constant 0 : i32
    %c0_i32_1 = arith.constant 0 : i32
    return %c0_i32, %c0_i32_0 : i32, i32
  }
  func.func @transform_3(%arg0: i32) -> (i32, i32) {
    %c0_i32 = arith.constant 0 : i32
    %c0_i32_0 = arith.constant 0 : i32
    return %arg0, %c0_i32 : i32, i32
  }
}

module attributes {stable_mosaic.version = 11 : i64} {
  func.func @_conv_pool_kernel(%arg0: i32, %arg1: memref<4x56x512xbf16, #tpu.memory_space<vmem>>, %arg2: memref<512x128xbf16, #tpu.memory_space<vmem>>, %arg3: memref<1x128xf32, #tpu.memory_space<vmem>>, %arg4: memref<56x128xbf16, #tpu.memory_space<vmem>>) attributes {dimension_semantics = [#tpu.dimension_semantics<parallel>], iteration_bounds = array<i64: 2>, scalar_prefetch = 0 : i64, scratch_operands = 0 : i64, tpu.core_type = #tpu.core_type<tc>, window_params = [{transform_indices = @transform_0, window_bounds = array<i64: 4, 56, 512>}, {pipeline_mode = #tpu.pipeline_mode<synchronous>, transform_indices = @transform_1, window_bounds = array<i64: 512, 128>}, {pipeline_mode = #tpu.pipeline_mode<synchronous>, transform_indices = @transform_2, window_bounds = array<i64: 1, 128>}, {transform_indices = @transform_3, window_bounds = array<i64: 56, 128>}]} {
    %c0 = arith.constant 0 : index
    %c0_0 = arith.constant 0 : index
    %0 = vector.load %arg2[%c0, %c0_0] : memref<512x128xbf16, #tpu.memory_space<vmem>>, vector<512x128xbf16>
    %c0_1 = arith.constant 0 : index
    %c0_2 = arith.constant 0 : index
    %c0_3 = arith.constant 0 : index
    %1 = vector.load %arg1[%c0_1, %c0_2, %c0_3] : memref<4x56x512xbf16, #tpu.memory_space<vmem>>, vector<1x56x512xbf16>
    %2 = vector.shape_cast %1 : vector<1x56x512xbf16> to vector<56x512xbf16>
    %cst = arith.constant dense<0.000000e+00> : vector<56x128xf32>
    %3 = tpu.matmul %2, %0, %cst {dimension_numbers = #tpu.dot_dimension_numbers<[1], [0], [0], [1], [0, 0, 1, 1], [], []>} : vector<56x512xbf16>, vector<512x128xbf16>, vector<56x128xf32> -> vector<56x128xf32>
    %c1 = arith.constant 1 : index
    %c0_4 = arith.constant 0 : index
    %c0_5 = arith.constant 0 : index
    %4 = vector.load %arg1[%c1, %c0_4, %c0_5] : memref<4x56x512xbf16, #tpu.memory_space<vmem>>, vector<1x56x512xbf16>
    %5 = vector.shape_cast %4 : vector<1x56x512xbf16> to vector<56x512xbf16>
    %cst_6 = arith.constant dense<0.000000e+00> : vector<56x128xf32>
    %6 = tpu.matmul %5, %0, %cst_6 {dimension_numbers = #tpu.dot_dimension_numbers<[1], [0], [0], [1], [0, 0, 1, 1], [], []>} : vector<56x512xbf16>, vector<512x128xbf16>, vector<56x128xf32> -> vector<56x128xf32>
    %c2 = arith.constant 2 : index
    %c0_7 = arith.constant 0 : index
    %c0_8 = arith.constant 0 : index
    %7 = vector.load %arg1[%c2, %c0_7, %c0_8] : memref<4x56x512xbf16, #tpu.memory_space<vmem>>, vector<1x56x512xbf16>
    %8 = vector.shape_cast %7 : vector<1x56x512xbf16> to vector<56x512xbf16>
    %cst_9 = arith.constant dense<0.000000e+00> : vector<56x128xf32>
    %9 = tpu.matmul %8, %0, %cst_9 {dimension_numbers = #tpu.dot_dimension_numbers<[1], [0], [0], [1], [0, 0, 1, 1], [], []>} : vector<56x512xbf16>, vector<512x128xbf16>, vector<56x128xf32> -> vector<56x128xf32>
    %c3 = arith.constant 3 : index
    %c0_10 = arith.constant 0 : index
    %c0_11 = arith.constant 0 : index
    %10 = vector.load %arg1[%c3, %c0_10, %c0_11] : memref<4x56x512xbf16, #tpu.memory_space<vmem>>, vector<1x56x512xbf16>
    %11 = vector.shape_cast %10 : vector<1x56x512xbf16> to vector<56x512xbf16>
    %cst_12 = arith.constant dense<0.000000e+00> : vector<56x128xf32>
    %12 = tpu.matmul %11, %0, %cst_12 {dimension_numbers = #tpu.dot_dimension_numbers<[1], [0], [0], [1], [0, 0, 1, 1], [], []>} : vector<56x512xbf16>, vector<512x128xbf16>, vector<56x128xf32> -> vector<56x128xf32>
    %13 = arith.maximumf %3, %6 : vector<56x128xf32>
    %14 = arith.maximumf %9, %12 : vector<56x128xf32>
    %15 = arith.maximumf %13, %14 : vector<56x128xf32>
    %c0_13 = arith.constant 0 : index
    %c0_14 = arith.constant 0 : index
    %16 = vector.load %arg3[%c0_13, %c0_14] : memref<1x128xf32, #tpu.memory_space<vmem>>, vector<1x128xf32>
    %17 = vector.broadcast %16 : vector<1x128xf32> to vector<56x128xf32>
    %18 = arith.addf %15, %17 : vector<56x128xf32>
    %cst_15 = arith.constant 0.000000e+00 : f32
    %19 = vector.broadcast %cst_15 : f32 to vector<56x128xf32>
    %20 = arith.maximumf %18, %19 : vector<56x128xf32>
    %21 = arith.truncf %20 : vector<56x128xf32> to vector<56x128xbf16>
    %c0_16 = arith.constant 0 : index
    %c0_17 = arith.constant 0 : index
    %22 = vector.load %arg4[%c0_16, %c0_17] : memref<56x128xbf16, #tpu.memory_space<vmem>>, vector<56x128xbf16>
    tpu.vector_store %arg4[%c0_16, %c0_17], %21 {strides = array<i32>} : memref<56x128xbf16, #tpu.memory_space<vmem>>, vector<56x128xbf16>,
    return
  }
  func.func @transform_0(%arg0: i32) -> (i32, i32, i32) {
    %c0_i32 = arith.constant 0 : i32
    %c0_i32_0 = arith.constant 0 : i32
    %c0_i32_1 = arith.constant 0 : i32
    return %c0_i32, %arg0, %c0_i32_0 : i32, i32, i32
  }
  func.func @transform_1(%arg0: i32) -> (i32, i32) {
    %c0_i32 = arith.constant 0 : i32
    %c0_i32_0 = arith.constant 0 : i32
    %c0_i32_1 = arith.constant 0 : i32
    return %c0_i32, %c0_i32_0 : i32, i32
  }
  func.func @transform_2(%arg0: i32) -> (i32, i32) {
    %c0_i32 = arith.constant 0 : i32
    %c0_i32_0 = arith.constant 0 : i32
    %c0_i32_1 = arith.constant 0 : i32
    return %c0_i32, %c0_i32_0 : i32, i32
  }
  func.func @transform_3(%arg0: i32) -> (i32, i32) {
    %c0_i32 = arith.constant 0 : i32
    %c0_i32_0 = arith.constant 0 : i32
    return %arg0, %c0_i32 : i32, i32
  }
}

module attributes {stable_mosaic.version = 11 : i64} {
  func.func @_mlp_kernel(%arg0: i32, %arg1: memref<8x512xbf16, #tpu.memory_space<vmem>>, %arg2: memref<512x256xbf16, #tpu.memory_space<vmem>>, %arg3: memref<1x256xf32, #tpu.memory_space<vmem>>, %arg4: memref<256x128xbf16, #tpu.memory_space<vmem>>, %arg5: memref<1x128xf32, #tpu.memory_space<vmem>>, %arg6: memref<128x128xbf16, #tpu.memory_space<vmem>>, %arg7: memref<1x128xf32, #tpu.memory_space<vmem>>, %arg8: memref<8x128xf32, #tpu.memory_space<vmem>>) attributes {dimension_semantics = [#tpu.dimension_semantics<parallel>], iteration_bounds = array<i64: 1>, scalar_prefetch = 0 : i64, scratch_operands = 0 : i64, tpu.core_type = #tpu.core_type<tc>, window_params = [{transform_indices = @transform_0, window_bounds = array<i64: 8, 512>}, {pipeline_mode = #tpu.pipeline_mode<synchronous>, transform_indices = @transform_1, window_bounds = array<i64: 512, 256>}, {pipeline_mode = #tpu.pipeline_mode<synchronous>, transform_indices = @transform_2, window_bounds = array<i64: 1, 256>}, {pipeline_mode = #tpu.pipeline_mode<synchronous>, transform_indices = @transform_3, window_bounds = array<i64: 256, 128>}, {pipeline_mode = #tpu.pipeline_mode<synchronous>, transform_indices = @transform_4, window_bounds = array<i64: 1, 128>}, {pipeline_mode = #tpu.pipeline_mode<synchronous>, transform_indices = @transform_5, window_bounds = array<i64: 128, 128>}, {pipeline_mode = #tpu.pipeline_mode<synchronous>, transform_indices = @transform_6, window_bounds = array<i64: 1, 128>}, {transform_indices = @transform_7, window_bounds = array<i64: 8, 128>}]} {
    %c0 = arith.constant 0 : index
    %c0_0 = arith.constant 0 : index
    %0 = vector.load %arg1[%c0, %c0_0] : memref<8x512xbf16, #tpu.memory_space<vmem>>, vector<8x512xbf16>
    %c0_1 = arith.constant 0 : index
    %c0_2 = arith.constant 0 : index
    %1 = vector.load %arg2[%c0_1, %c0_2] : memref<512x256xbf16, #tpu.memory_space<vmem>>, vector<512x256xbf16>
    %cst = arith.constant dense<0.000000e+00> : vector<8x256xf32>
    %2 = tpu.matmul %0, %1, %cst {dimension_numbers = #tpu.dot_dimension_numbers<[1], [0], [0], [1], [0, 0, 1, 1], [], []>} : vector<8x512xbf16>, vector<512x256xbf16>, vector<8x256xf32> -> vector<8x256xf32>
    %c0_3 = arith.constant 0 : index
    %c0_4 = arith.constant 0 : index
    %3 = vector.load %arg3[%c0_3, %c0_4] : memref<1x256xf32, #tpu.memory_space<vmem>>, vector<1x256xf32>
    %4 = vector.broadcast %3 : vector<1x256xf32> to vector<8x256xf32>
    %5 = arith.addf %2, %4 : vector<8x256xf32>
    %cst_5 = arith.constant 0.000000e+00 : f32
    %6 = vector.broadcast %cst_5 : f32 to vector<8x256xf32>
    %7 = arith.maximumf %5, %6 : vector<8x256xf32>
    %8 = arith.truncf %7 : vector<8x256xf32> to vector<8x256xbf16>
    %c0_6 = arith.constant 0 : index
    %c0_7 = arith.constant 0 : index
    %9 = vector.load %arg4[%c0_6, %c0_7] : memref<256x128xbf16, #tpu.memory_space<vmem>>, vector<256x128xbf16>
    %cst_8 = arith.constant dense<0.000000e+00> : vector<8x128xf32>
    %10 = tpu.matmul %8, %9, %cst_8 {dimension_numbers = #tpu.dot_dimension_numbers<[1], [0], [0], [1], [0, 0, 1, 1], [], []>} : vector<8x256xbf16>, vector<256x128xbf16>, vector<8x128xf32> -> vector<8x128xf32>
    %c0_9 = arith.constant 0 : index
    %c0_10 = arith.constant 0 : index
    %11 = vector.load %arg5[%c0_9, %c0_10] : memref<1x128xf32, #tpu.memory_space<vmem>>, vector<1x128xf32>
    %12 = vector.broadcast %11 : vector<1x128xf32> to vector<8x128xf32>
    %13 = arith.addf %10, %12 : vector<8x128xf32>
    %cst_11 = arith.constant 0.000000e+00 : f32
    %14 = vector.broadcast %cst_11 : f32 to vector<8x128xf32>
    %15 = arith.maximumf %13, %14 : vector<8x128xf32>
    %16 = arith.truncf %15 : vector<8x128xf32> to vector<8x128xbf16>
    %c0_12 = arith.constant 0 : index
    %c0_13 = arith.constant 0 : index
    %17 = vector.load %arg6[%c0_12, %c0_13] : memref<128x128xbf16, #tpu.memory_space<vmem>>, vector<128x128xbf16>
    %cst_14 = arith.constant dense<0.000000e+00> : vector<8x128xf32>
    %18 = tpu.matmul %16, %17, %cst_14 {dimension_numbers = #tpu.dot_dimension_numbers<[1], [0], [0], [1], [0, 0, 1, 1], [], []>} : vector<8x128xbf16>, vector<128x128xbf16>, vector<8x128xf32> -> vector<8x128xf32>
    %c0_15 = arith.constant 0 : index
    %c0_16 = arith.constant 0 : index
    %19 = vector.load %arg7[%c0_15, %c0_16] : memref<1x128xf32, #tpu.memory_space<vmem>>, vector<1x128xf32>
    %20 = vector.broadcast %19 : vector<1x128xf32> to vector<8x128xf32>
    %21 = arith.addf %18, %20 : vector<8x128xf32>
    %c0_17 = arith.constant 0 : index
    %c0_18 = arith.constant 0 : index
    %22 = vector.load %arg8[%c0_17, %c0_18] : memref<8x128xf32, #tpu.memory_space<vmem>>, vector<8x128xf32>
    tpu.vector_store %arg8[%c0_17, %c0_18], %21 {strides = array<i32>} : memref<8x128xf32, #tpu.memory_space<vmem>>, vector<8x128xf32>,
    return
  }
  func.func @transform_0(%arg0: i32) -> (i32, i32) {
    %c0_i32 = arith.constant 0 : i32
    %c0_i32_0 = arith.constant 0 : i32
    return %arg0, %c0_i32 : i32, i32
  }
  func.func @transform_1(%arg0: i32) -> (i32, i32) {
    %c0_i32 = arith.constant 0 : i32
    %c0_i32_0 = arith.constant 0 : i32
    %c0_i32_1 = arith.constant 0 : i32
    return %c0_i32, %c0_i32_0 : i32, i32
  }
  func.func @transform_2(%arg0: i32) -> (i32, i32) {
    %c0_i32 = arith.constant 0 : i32
    %c0_i32_0 = arith.constant 0 : i32
    %c0_i32_1 = arith.constant 0 : i32
    return %c0_i32, %c0_i32_0 : i32, i32
  }
  func.func @transform_3(%arg0: i32) -> (i32, i32) {
    %c0_i32 = arith.constant 0 : i32
    %c0_i32_0 = arith.constant 0 : i32
    %c0_i32_1 = arith.constant 0 : i32
    return %c0_i32, %c0_i32_0 : i32, i32
  }
  func.func @transform_4(%arg0: i32) -> (i32, i32) {
    %c0_i32 = arith.constant 0 : i32
    %c0_i32_0 = arith.constant 0 : i32
    %c0_i32_1 = arith.constant 0 : i32
    return %c0_i32, %c0_i32_0 : i32, i32
  }
  func.func @transform_5(%arg0: i32) -> (i32, i32) {
    %c0_i32 = arith.constant 0 : i32
    %c0_i32_0 = arith.constant 0 : i32
    %c0_i32_1 = arith.constant 0 : i32
    return %c0_i32, %c0_i32_0 : i32, i32
  }
  func.func @transform_6(%arg0: i32) -> (i32, i32) {
    %c0_i32 = arith.constant 0 : i32
    %c0_i32_0 = arith.constant 0 : i32
    %c0_i32_1 = arith.constant 0 : i32
    return %c0_i32, %c0_i32_0 : i32, i32
  }
  func.func @transform_7(%arg0: i32) -> (i32, i32) {
    %c0_i32 = arith.constant 0 : i32
    %c0_i32_0 = arith.constant 0 : i32
    return %arg0, %c0_i32 : i32, i32
  }
}

</mosaic_0001>

<llo_original>
// kernel: student_cnn_cifar10_forward.3
$region0: #{student_cnn_cifar10_forward.3}
  #allocation0 [shape = 'u32[]', space=smem, size = 0x4, offset = 0x4, fixed_abs, tag = 'smem constant byte address 0x4 - core index']
  #allocation1 [shape = 'u32[144,128]{1,0:T(1,128)}', space=vmem, size = 0x12000, scoped, tag = 'internal scratch']
  %s0 = inlined_call_operand.vmem [shape: bf16[4,784,128], index: 0, kind: input, shape index: {}]
  %s1 = inlined_call_operand.vmem [shape: bf16[128,128], index: 1, kind: input, shape index: {}]
  %s2 = inlined_call_operand.vmem [shape: f32[1,128], index: 2, kind: input, shape index: {}]
  %s3 = inlined_call_operand.vmem [shape: bf16[784,128], index: 3, kind: output, shape index: {}]
  %s4 = sld [smem:[#allocation0]]
  $region86: #{student_cnn_cifar10_forward.3} parent=0
    _
  %s6 = ssub.s32 1, %s4
  %s7 = scalar_select 0, %s6, %s4
  $region1: #{student_cnn_cifar10_forward.3} parent=0
    #allocation2 [shape = 'u8[802816]{0}', space=vmem, size = 0xc4000, scoped, tag = 'input window, operand 0']
    loop: start=0, step=1, limit=4
    $region2: #{student_cnn_cifar10_forward.3} parent=1 // loop_pre_header
      _
    $region3: #{student_cnn_cifar10_forward.3} parent=1 // loop_header
      %s9 = sphi 0, %s13
      %p10 = scmp.ge.s32.totalorder %s9, 4
      %s19 = sphi 0, %s21
      %s22 = sphi 0, %s19
      %s23 = sphi 0, %s22
      %s39 = sphi 0, %s23
      %s43 = sphi 0, %s43
      %s45 = sphi 0, %s43
      %s46 = sphi 0, %s45
      %s60 = sphi 0, %s46
      %s64 = sphi 0, %s64
      %s66 = sphi 0, %s64
      %s67 = sphi 0, %s66
      %s81 = sphi 0, %s67
      %s87 = sphi 0, %s89
      %s90 = sphi 0, %s87
      %s91 = sphi 0, %s90
      %s107 = sphi 0, %s91
    $region4: #{student_cnn_cifar10_forward.3} parent=1 // loop_header_branch
      %12 = sbr.rel (%p10) target = $region8
    $region5: #{student_cnn_cifar10_forward.3} parent=1 // loop_body
      %s14 = ssub.s32 %s9, 1
      %s15 = ssub.s32 %s9, 2
      %s16 = sadd.s32 %s9, 1
      %s17 = ssub.s32 %s9, %s16
      %p18 = scmp.eq.s32.totalorder %s17, 0
      %s20 = sadd.s32 %s19, 1
      %s21 = scalar_select %p18, %s19, %s20
      %p24 = pneg %p18
      %p25 = scmp.eq.s32.totalorder %s9, 1
      %p26 = por %p24, %p25
      %p27 = scmp.ne.s32.totalorder %s19, %s22
      %p28 = scmp.eq.s32.totalorder %s9, 0
      %p29 = por %p27, %p28
      %p30 = scmp.ne.s32.totalorder %s19, %s22
      %p31 = scmp.eq.s32.totalorder %s14, 1
      %p32 = por %p30, %p31
      %p33 = scmp.ne.s32.totalorder %s22, %s23
      %p34 = scmp.eq.s32.totalorder %s14, 0
      %p35 = por %p33, %p34
      %p36 = scmp.ne.s32.totalorder %s22, %s23
      %p37 = scmp.eq.s32.totalorder %s15, 1
      %p38 = por %p36, %p37
      %p40 = scmp.ne.s32.totalorder %s23, %s39
      %p41 = scmp.eq.s32.totalorder %s15, 0
      %p42 = por %p40, %p41
      %s44 = sadd.s32 %s43, 1
      %p47 = scmp.eq.s32.totalorder %s9, 1
      %p48 = scmp.ne.s32.totalorder %s43, %s45
      %p49 = scmp.eq.s32.totalorder %s9, 0
      %p50 = por %p48, %p49
      %p51 = scmp.ne.s32.totalorder %s43, %s45
      %p52 = scmp.eq.s32.totalorder %s14, 1
      %p53 = por %p51, %p52
      %p54 = scmp.ne.s32.totalorder %s45, %s46
      %p55 = scmp.eq.s32.totalorder %s14, 0
      %p56 = por %p54, %p55
      %p57 = scmp.ne.s32.totalorder %s45, %s46
      %p58 = scmp.eq.s32.totalorder %s15, 1
      %p59 = por %p57, %p58
      %p61 = scmp.ne.s32.totalorder %s46, %s60
      %p62 = scmp.eq.s32.totalorder %s15, 0
      %p63 = por %p61, %p62
      %s65 = sadd.s32 %s64, 1
      %p68 = scmp.eq.s32.totalorder %s9, 1
      %p69 = scmp.ne.s32.totalorder %s64, %s66
      %p70 = scmp.eq.s32.totalorder %s9, 0
      %p71 = por %p69, %p70
      %p72 = scmp.ne.s32.totalorder %s64, %s66
      %p73 = scmp.eq.s32.totalorder %s14, 1
      %p74 = por %p72, %p73
      %p75 = scmp.ne.s32.totalorder %s66, %s67
      %p76 = scmp.eq.s32.totalorder %s14, 0
      %p77 = por %p75, %p76
      %p78 = scmp.ne.s32.totalorder %s66, %s67
      %p79 = scmp.eq.s32.totalorder %s15, 1
      %p80 = por %p78, %p79
      %p82 = scmp.ne.s32.totalorder %s67, %s81
      %p83 = scmp.eq.s32.totalorder %s15, 0
      %p84 = por %p82, %p83
      %s85 = ssub.s32 %s9, %s16
      %p86 = scmp.eq.s32.totalorder %s85, 0
      %s88 = sadd.s32 %s87, 1
      %s89 = scalar_select %p86, %s87, %s88
      %p92 = pneg %p86
      %p93 = scmp.eq.s32.totalorder %s9, 1
      %p94 = por %p92, %p93
      %p95 = scmp.ne.s32.totalorder %s87, %s90
      %p96 = scmp.eq.s32.totalorder %s9, 0
      %p97 = por %p95, %p96
      %p98 = scmp.ne.s32.totalorder %s87, %s90
      %p99 = scmp.eq.s32.totalorder %s14, 1
      %p100 = por %p98, %p99
      %p101 = scmp.ne.s32.totalorder %s90, %s91
      %p102 = scmp.eq.s32.totalorder %s14, 0
      %p103 = por %p101, %p102
      %p104 = scmp.ne.s32.totalorder %s90, %s91
      %p105 = scmp.eq.s32.totalorder %s15, 1
      %p106 = por %p104, %p105
      %p108 = scmp.ne.s32.totalorder %s91, %s107
      %p109 = scmp.eq.s32.totalorder %s15, 0
      %p110 = por %p108, %p109
      %p111 = scmp.le.s32.totalorder 1, %s9
      %p112 = scmp.lt.s32.totalorder %s9, 3
      %p113 = pnand %p111, %p112
      %p114 = pneg %p113
      // Predicated region
      $region9: #{student_cnn_cifar10_forward.3} parent=5 // pred_check
        _
      $region10: #{student_cnn_cifar10_forward.3} parent=5 // pred_check_branch
        %116 = sbr.rel (%p113) target = $region12
      $region11: #{student_cnn_cifar10_forward.3} parent=5 // pred_region
        %s117 = ssub.s32 %s9, 1
        // Predicated region
        $region13: #{student_cnn_cifar10_forward.3} parent=11 // pred_check
          %p118 = pneg %p56
        $region14: #{student_cnn_cifar10_forward.3} parent=11 // pred_check_branch
          %120 = sbr.rel (%p118) target = $region16
        $region15: #{student_cnn_cifar10_forward.3} parent=11 // pred_region
          _
        $region16: #{student_cnn_cifar10_forward.3} parent=11 // pred_fallthru
          _
        // Predicated region
        $region17: #{student_cnn_cifar10_forward.3} parent=11 // pred_check
          %p121 = pneg %p77
        $region18: #{student_cnn_cifar10_forward.3} parent=11 // pred_check_branch
          %123 = sbr.rel (%p121) target = $region20
        $region19: #{student_cnn_cifar10_forward.3} parent=11 // pred_region
          _
        $region20: #{student_cnn_cifar10_forward.3} parent=11 // pred_fallthru
          _
      $region12: #{student_cnn_cifar10_forward.3} parent=5 // pred_fallthru
        _
      %p124 = scmp.lt.s32.totalorder %s9, 2
      // Predicated region
      $region21: #{student_cnn_cifar10_forward.3} parent=5 // pred_check
        %p125 = pneg %p124
      $region22: #{student_cnn_cifar10_forward.3} parent=5 // pred_check_branch
        %127 = sbr.rel (%p125) target = $region24
      $region23: #{student_cnn_cifar10_forward.3} parent=5 // pred_region
        // Predicated region
        $region25: #{student_cnn_cifar10_forward.3} parent=23 // pred_check
          %p128 = pneg %p29
        $region26: #{student_cnn_cifar10_forward.3} parent=23 // pred_check_branch
          %130 = sbr.rel (%p128) target = $region28
        $region27: #{student_cnn_cifar10_forward.3} parent=23 // pred_region
          %s131 = sand.u32 %s19, 1
          %s132 = sand.u32 %s19, 1
          %s133 = smul.addr %s132, 784
          %s134 = scalar_lea.vmem [#allocation2], %s133
          %s135 = smul.u32 49, %s9
          %s136 = smul.addr %s135, 4
          %s137 = scalar_lea.vmem %s0, %s136
          // Predicated region
          $region29: #{student_cnn_cifar10_forward.3} parent=27 // pred_check
            _
          $region30: #{student_cnn_cifar10_forward.3} parent=27 // pred_check_branch
            %139 = sbr.rel (0) target = $region32
          $region31: #{student_cnn_cifar10_forward.3} parent=27 // pred_region
            // Predicated region
            $region33: #{student_cnn_cifar10_forward.3} parent=31 // pred_check
              _
            $region34: #{student_cnn_cifar10_forward.3} parent=31 // pred_check_branch
              %141 = sbr.rel target = $region36
            $region35: #{student_cnn_cifar10_forward.3} parent=31 // pred_region
              // Predicated region
              $region48: #{student_cnn_cifar10_forward.3} parent=35 // pred_check
                _
              $region49: #{student_cnn_cifar10_forward.3} parent=35 // pred_check_branch
                %546 = sbr.rel (0) target = $region51
              $region50: #{student_cnn_cifar10_forward.3} parent=35 // pred_region
                loop: start=0, step=1, limit=1
                $region52: #{student_cnn_cifar10_forward.3} parent=50 // loop_pre_header
                  _
                $region53: #{student_cnn_cifar10_forward.3} parent=50 // loop_header
                  %s548 = sphi 0, %s552
                  %p549 = scmp.ge.s32.totalorder %s548, 1
                  %s553 = sphi %s137, %s137
                  %s554 = sphi %s134, %s134
                $region54: #{student_cnn_cifar10_forward.3} parent=50 // loop_header_branch
                  %551 = sbr.rel (%p549) target = $region58
                $region55: #{student_cnn_cifar10_forward.3} parent=50 // loop_body
                  _
                $region56: #{student_cnn_cifar10_forward.3} parent=50 // loop_footer
                  %s552 = sadd.s32 1, %s548
                $region57: #{student_cnn_cifar10_forward.3} parent=50 // loop_footer_branch
                  %547 = sbr.rel target = $region53
                $region58: #{student_cnn_cifar10_forward.3} parent=50 // loop_exit
                  _
                loop: start=0, step=1, limit=1
                $region59: #{student_cnn_cifar10_forward.3} parent=50 // loop_pre_header
                  _
                $region60: #{student_cnn_cifar10_forward.3} parent=50 // loop_header
                  %s557 = sphi 0, %s561
                  %p558 = scmp.ge.s32.totalorder %s557, 1
                  %s562 = sphi %s137, %s137
                  %s563 = sphi %s134, %s134
                $region61: #{student_cnn_cifar10_forward.3} parent=50 // loop_header_branch
                  %560 = sbr.rel (%p558) target = $region65
                $region62: #{student_cnn_cifar10_forward.3} parent=50 // loop_body
                  %v564 = vld [vmem:[%s562] sm:$0xf]
                  %565 = vst [vmem:[%s563] sm:$0xf] %v564
                  %v566 = vld [vmem:[%s562 + $0x4] sm:$0xf]
                  %567 = vst [vmem:[%s563 + $0x4] sm:$0xf] %v566
                  %v568 = vld [vmem:[%s562 + $0x8] sm:$0xf]
                  %569 = vst [vmem:[%s563 + $0x8] sm:$0xf] %v568
                  %v570 = vld [vmem:[%s562 + $0xc] sm:$0xf]
                  %571 = vst [vmem:[%s563 + $0xc] sm:$0xf] %v570
                  %v572 = vld [vmem:[%s562 + $0x10] sm:$0xf]
                  %573 = vst [vmem:[%s563 + $0x10] sm:$0xf] %v572
                  %v574 = vld [vmem:[%s562 + $0x14] sm:$0xf]
                  %575 = vst [vmem:[%s563 + $0x14] sm:$0xf] %v574
                  %v576 = vld [vmem:[%s562 + $0x18] sm:$0xf]
                  %577 = vst [vmem:[%s563 + $0x18] sm:$0xf] %v576
                  %v578 = vld [vmem:[%s562 + $0x1c] sm:$0xf]
                  %579 = vst [vmem:[%s563 + $0x1c] sm:$0xf] %v578
                  %v580 = vld [vmem:[%s562 + $0x20] sm:$0xf]
                  %581 = vst [vmem:[%s563 + $0x20] sm:$0xf] %v580
                  %v582 = vld [vmem:[%s562 + $0x24] sm:$0xf]
                  %583 = vst [vmem:[%s563 + $0x24] sm:$0xf] %v582
                  %v584 = vld [vmem:[%s562 + $0x28] sm:$0xf]
                  %585 = vst [vmem:[%s563 + $0x28] sm:$0xf] %v584
                  %v586 = vld [vmem:[%s562 + $0x2c] sm:$0xf]
                  %587 = vst [vmem:[%s563 + $0x2c] sm:$0xf] %v586
                  %v588 = vld [vmem:[%s562 + $0x30] sm:$0xf]
                  %589 = vst [vmem:[%s563 + $0x30] sm:$0xf] %v588
                  %v590 = vld [vmem:[%s562 + $0x34] sm:$0xf]
                  %591 = vst [vmem:[%s563 + $0x34] sm:$0xf] %v590
                  %v592 = vld [vmem:[%s562 + $0x38] sm:$0xf]
                  %593 = vst [vmem:[%s563 + $0x38] sm:$0xf] %v592
                  %v594 = vld [vmem:[%s562 + $0x3c] sm:$0xf]
                  %595 = vst [vmem:[%s563 + $0x3c] sm:$0xf] %v594
                  %v596 = vld [vmem:[%s562 + $0x40] sm:$0xf]
                  %597 = vst [vmem:[%s563 + $0x40] sm:$0xf] %v596
                  %v598 = vld [vmem:[%s562 + $0x44] sm:$0xf]
                  %599 = vst [vmem:[%s563 + $0x44] sm:$0xf] %v598
                  %v600 = vld [vmem:[%s562 + $0x48] sm:$0xf]
                  %601 = vst [vmem:[%s563 + $0x48] sm:$0xf] %v600
                  %v602 = vld [vmem:[%s562 + $0x4c] sm:$0xf]
                  %603 = vst [vmem:[%s563 + $0x4c] sm:$0xf] %v602
                  %v604 = vld [vmem:[%s562 + $0x50] sm:$0xf]
                  %605 = vst [vmem:[%s563 + $0x50] sm:$0xf] %v604
                  %v606 = vld [vmem:[%s562 + $0x54] sm:$0xf]
                  %607 = vst [vmem:[%s563 + $0x54] sm:$0xf] %v606
                  %v608 = vld [vmem:[%s562 + $0x58] sm:$0xf]
                  %609 = vst [vmem:[%s563 + $0x58] sm:$0xf] %v608
                  %v610 = vld [vmem:[%s562 + $0x5c] sm:$0xf]
                  %611 = vst [vmem:[%s563 + $0x5c] sm:$0xf] %v610
                  %v612 = vld [vmem:[%s562 + $0x60] sm:$0xf]
                  %613 = vst [vmem:[%s563 + $0x60] sm:$0xf] %v612
                  %v614 = vld [vmem:[%s562 + $0x64] sm:$0xf]
                  %615 = vst [vmem:[%s563 + $0x64] sm:$0xf] %v614
                  %v616 = vld [vmem:[%s562 + $0x68] sm:$0xf]
                  %617 = vst [vmem:[%s563 + $0x68] sm:$0xf] %v616
                  %v618 = vld [vmem:[%s562 + $0x6c] sm:$0xf]
                  %619 = vst [vmem:[%s563 + $0x6c] sm:$0xf] %v618
                  %v620 = vld [vmem:[%s562 + $0x70] sm:$0xf]
                  %621 = vst [vmem:[%s563 + $0x70] sm:$0xf] %v620
                  %v622 = vld [vmem:[%s562 + $0x74] sm:$0xf]
                  %623 = vst [vmem:[%s563 + $0x74] sm:$0xf] %v622
                  %v624 = vld [vmem:[%s562 + $0x78] sm:$0xf]
                  %625 = vst [vmem:[%s563 + $0x78] sm:$0xf] %v624
                  %v626 = vld [vmem:[%s562 + $0x7c] sm:$0xf]
                  %627 = vst [vmem:[%s563 + $0x7c] sm:$0xf] %v626
                  %v628 = vld [vmem:[%s562 + $0x80] sm:$0xf]
                  %629 = vst [vmem:[%s563 + $0x80] sm:$0xf] %v628
                  %v630 = vld [vmem:[%s562 + $0x84] sm:$0xf]
                  %631 = vst [vmem:[%s563 + $0x84] sm:$0xf] %v630
                  %v632 = vld [vmem:[%s562 + $0x88] sm:$0xf]
                  %633 = vst [vmem:[%s563 + $0x88] sm:$0xf] %v632
                  %v634 = vld [vmem:[%s562 + $0x8c] sm:$0xf]
                  %635 = vst [vmem:[%s563 + $0x8c] sm:$0xf] %v634
                  %v636 = vld [vmem:[%s562 + $0x90] sm:$0xf]
                  %637 = vst [vmem:[%s563 + $0x90] sm:$0xf] %v636
                  %v638 = vld [vmem:[%s562 + $0x94] sm:$0xf]
                  %639 = vst [vmem:[%s563 + $0x94] sm:$0xf] %v638
                  %v640 = vld [vmem:[%s562 + $0x98] sm:$0xf]
                  %641 = vst [vmem:[%s563 + $0x98] sm:$0xf] %v640
                  %v642 = vld [vmem:[%s562 + $0x9c] sm:$0xf]
                  %643 = vst [vmem:[%s563 + $0x9c] sm:$0xf] %v642
                  %v644 = vld [vmem:[%s562 + $0xa0] sm:$0xf]
                  %645 = vst [vmem:[%s563 + $0xa0] sm:$0xf] %v644
                  %v646 = vld [vmem:[%s562 + $0xa4] sm:$0xf]
                  %647 = vst [vmem:[%s563 + $0xa4] sm:$0xf] %v646
                  %v648 = vld [vmem:[%s562 + $0xa8] sm:$0xf]
                  %649 = vst [vmem:[%s563 + $0xa8] sm:$0xf] %v648
                  %v650 = vld [vmem:[%s562 + $0xac] sm:$0xf]
                  %651 = vst [vmem:[%s563 + $0xac] sm:$0xf] %v650
                  %v652 = vld [vmem:[%s562 + $0xb0] sm:$0xf]
                  %653 = vst [vmem:[%s563 + $0xb0] sm:$0xf] %v652
                  %v654 = vld [vmem:[%s562 + $0xb4] sm:$0xf]
                  %655 = vst [vmem:[%s563 + $0xb4] sm:$0xf] %v654
                  %v656 = vld [vmem:[%s562 + $0xb8] sm:$0xf]
                  %657 = vst [vmem:[%s563 + $0xb8] sm:$0xf] %v656
                  %v658 = vld [vmem:[%s562 + $0xbc] sm:$0xf]
                  %659 = vst [vmem:[%s563 + $0xbc] sm:$0xf] %v658
                  %v660 = vld [vmem:[%s562 + $0xc0] sm:$0xf]
                  %661 = vst [vmem:[%s563 + $0xc0] sm:$0xf] %v660
                  %v662 = vld [vmem:[%s562 + $0x188] sm:$0xf]
                  %663 = vst [vmem:[%s563 + $0xc4] sm:$0xf] %v662
                  %v664 = vld [vmem:[%s562 + $0x18c] sm:$0xf]
                  %665 = vst [vmem:[%s563 + $0xc8] sm:$0xf] %v664
                  %v666 = vld [vmem:[%s562 + $0x190] sm:$0xf]
                  %667 = vst [vmem:[%s563 + $0xcc] sm:$0xf] %v666
                  %v668 = vld [vmem:[%s562 + $0x194] sm:$0xf]
                  %669 = vst [vmem:[%s563 + $0xd0] sm:$0xf] %v668
                  %v670 = vld [vmem:[%s562 + $0x198] sm:$0xf]
                  %671 = vst [vmem:[%s563 + $0xd4] sm:$0xf] %v670
                  %v672 = vld [vmem:[%s562 + $0x19c] sm:$0xf]
                  %673 = vst [vmem:[%s563 + $0xd8] sm:$0xf] %v672
                  %v674 = vld [vmem:[%s562 + $0x1a0] sm:$0xf]
                  %675 = vst [vmem:[%s563 + $0xdc] sm:$0xf] %v674
                  %v676 = vld [vmem:[%s562 + $0x1a4] sm:$0xf]
                  %677 = vst [vmem:[%s563 + $0xe0] sm:$0xf] %v676
                  %v678 = vld [vmem:[%s562 + $0x1a8] sm:$0xf]
                  %679 = vst [vmem:[%s563 + $0xe4] sm:$0xf] %v678
                  %v680 = vld [vmem:[%s562 + $0x1ac] sm:$0xf]
                  %681 = vst [vmem:[%s563 + $0xe8] sm:$0xf] %v680
                  %v682 = vld [vmem:[%s562 + $0x1b0] sm:$0xf]
                  %683 = vst [vmem:[%s563 + $0xec] sm:$0xf] %v682
                  %v684 = vld [vmem:[%s562 + $0x1b4] sm:$0xf]
                  %685 = vst [vmem:[%s563 + $0xf0] sm:$0xf] %v684
                  %v686 = vld [vmem:[%s562 + $0x1b8] sm:$0xf]
                  %687 = vst [vmem:[%s563 + $0xf4] sm:$0xf] %v686
                  %v688 = vld [vmem:[%s562 + $0x1bc] sm:$0xf]
                  %689 = vst [vmem:[%s563 + $0xf8] sm:$0xf] %v688
                  %v690 = vld [vmem:[%s562 + $0x1c0] sm:$0xf]
                  %691 = vst [vmem:[%s563 + $0xfc] sm:$0xf] %v690
                  %v692 = vld [vmem:[%s562 + $0x1c4] sm:$0xf]
                  %693 = vst [vmem:[%s563 + $0x100] sm:$0xf] %v692
                  %v694 = vld [vmem:[%s562 + $0x1c8] sm:$0xf]
                  %695 = vst [vmem:[%s563 + $0x104] sm:$0xf] %v694
                  %v696 = vld [vmem:[%s562 + $0x1cc] sm:$0xf]
                  %697 = vst [vmem:[%s563 + $0x108] sm:$0xf] %v696
                  %v698 = vld [vmem:[%s562 + $0x1d0] sm:$0xf]
                  %699 = vst [vmem:[%s563 + $0x10c] sm:$0xf] %v698
                  %v700 = vld [vmem:[%s562 + $0x1d4] sm:$0xf]
                  %701 = vst [vmem:[%s563 + $0x110] sm:$0xf] %v700
                  %v702 = vld [vmem:[%s562 + $0x1d8] sm:$0xf]
                  %703 = vst [vmem:[%s563 + $0x114] sm:$0xf] %v702
                  %v704 = vld [vmem:[%s562 + $0x1dc] sm:$0xf]
                  %705 = vst [vmem:[%s563 + $0x118] sm:$0xf] %v704
                  %v706 = vld [vmem:[%s562 + $0x1e0] sm:$0xf]
                  %707 = vst [vmem:[%s563 + $0x11c] sm:$0xf] %v706
                  %v708 = vld [vmem:[%s562 + $0x1e4] sm:$0xf]
                  %709 = vst [vmem:[%s563 + $0x120] sm:$0xf] %v708
                  %v710 = vld [vmem:[%s562 + $0x1e8] sm:$0xf]
                  %711 = vst [vmem:[%s563 + $0x124] sm:$0xf] %v710
                  %v712 = vld [vmem:[%s562 + $0x1ec] sm:$0xf]
                  %713 = vst [vmem:[%s563 + $0x128] sm:$0xf] %v712
                  %v714 = vld [vmem:[%s562 + $0x1f0] sm:$0xf]
                  %715 = vst [vmem:[%s563 + $0x12c] sm:$0xf] %v714
                  %v716 = vld [vmem:[%s562 + $0x1f4] sm:$0xf]
                  %717 = vst [vmem:[%s563 + $0x130] sm:$0xf] %v716
                  %v718 = vld [vmem:[%s562 + $0x1f8] sm:$0xf]
                  %719 = vst [vmem:[%s563 + $0x134] sm:$0xf] %v718
                  %v720 = vld [vmem:[%s562 + $0x1fc] sm:$0xf]
                  %721 = vst [vmem:[%s563 + $0x138] sm:$0xf] %v720
                  %v722 = vld [vmem:[%s562 + $0x200] sm:$0xf]
                  %723 = vst [vmem:[%s563 + $0x13c] sm:$0xf] %v722
                  %v724 = vld [vmem:[%s562 + $0x204] sm:$0xf]
                  %725 = vst [vmem:[%s563 + $0x140] sm:$0xf] %v724
                  %v726 = vld [vmem:[%s562 + $0x208] sm:$0xf]
                  %727 = vst [vmem:[%s563 + $0x144] sm:$0xf] %v726
                  %v728 = vld [vmem:[%s562 + $0x20c] sm:$0xf]
                  %729 = vst [vmem:[%s563 + $0x148] sm:$0xf] %v728
                  %v730 = vld [vmem:[%s562 + $0x210] sm:$0xf]
                  %731 = vst [vmem:[%s563 + $0x14c] sm:$0xf] %v730
                  %v732 = vld [vmem:[%s562 + $0x214] sm:$0xf]
                  %733 = vst [vmem:[%s563 + $0x150] sm:$0xf] %v732
                  %v734 = vld [vmem:[%s562 + $0x218] sm:$0xf]
                  %735 = vst [vmem:[%s563 + $0x154] sm:$0xf] %v734
                  %v736 = vld [vmem:[%s562 + $0x21c] sm:$0xf]
                  %737 = vst [vmem:[%s563 + $0x158] sm:$0xf] %v736
                  %v738 = vld [vmem:[%s562 + $0x220] sm:$0xf]
                  %739 = vst [vmem:[%s563 + $0x15c] sm:$0xf] %v738
                  %v740 = vld [vmem:[%s562 + $0x224] sm:$0xf]
                  %741 = vst [vmem:[%s563 + $0x160] sm:$0xf] %v740
                  %v742 = vld [vmem:[%s562 + $0x228] sm:$0xf]
                  %743 = vst [vmem:[%s563 + $0x164] sm:$0xf] %v742
                  %v744 = vld [vmem:[%s562 + $0x22c] sm:$0xf]
                  %745 = vst [vmem:[%s563 + $0x168] sm:$0xf] %v744
                  %v746 = vld [vmem:[%s562 + $0x230] sm:$0xf]
                  %747 = vst [vmem:[%s563 + $0x16c] sm:$0xf] %v746
                  %v748 = vld [vmem:[%s562 + $0x234] sm:$0xf]
                  %749 = vst [vmem:[%s563 + $0x170] sm:$0xf] %v748
                  %v750 = vld [vmem:[%s562 + $0x238] sm:$0xf]
                  %751 = vst [vmem:[%s563 + $0x174] sm:$0xf] %v750
                  %v752 = vld [vmem:[%s562 + $0x23c] sm:$0xf]
                  %753 = vst [vmem:[%s563 + $0x178] sm:$0xf] %v752
                  %v754 = vld [vmem:[%s562 + $0x240] sm:$0xf]
                  %755 = vst [vmem:[%s563 + $0x17c] sm:$0xf] %v754
                  %v756 = vld [vmem:[%s562 + $0x244] sm:$0xf]
                  %757 = vst [vmem:[%s563 + $0x180] sm:$0xf] %v756
                  %v758 = vld [vmem:[%s562 + $0x248] sm:$0xf]
                  %759 = vst [vmem:[%s563 + $0x184] sm:$0xf] %v758
                  %v760 = vld [vmem:[%s562 + $0x310] sm:$0xf]
                  %761 = vst [vmem:[%s563 + $0x188] sm:$0xf] %v760
                  %v762 = vld [vmem:[%s562 + $0x314] sm:$0xf]
                  %763 = vst [vmem:[%s563 + $0x18c] sm:$0xf] %v762
                  %v764 = vld [vmem:[%s562 + $0x318] sm:$0xf]
                  %765 = vst [vmem:[%s563 + $0x190] sm:$0xf] %v764
                  %v766 = vld [vmem:[%s562 + $0x31c] sm:$0xf]
                  %767 = vst [vmem:[%s563 + $0x194] sm:$0xf] %v766
                  %v768 = vld [vmem:[%s562 + $0x320] sm:$0xf]
                  %769 = vst [vmem:[%s563 + $0x198] sm:$0xf] %v768
                  %v770 = vld [vmem:[%s562 + $0x324] sm:$0xf]
                  %771 = vst [vmem:[%s563 + $0x19c] sm:$0xf] %v770
                  %v772 = vld [vmem:[%s562 + $0x328] sm:$0xf]
                  %773 = vst [vmem:[%s563 + $0x1a0] sm:$0xf] %v772
                  %v774 = vld [vmem:[%s562 + $0x32c] sm:$0xf]
                  %775 = vst [vmem:[%s563 + $0x1a4] sm:$0xf] %v774
                  %v776 = vld [vmem:[%s562 + $0x330] sm:$0xf]
                  %777 = vst [vmem:[%s563 + $0x1a8] sm:$0xf] %v776
                  %v778 = vld [vmem:[%s562 + $0x334] sm:$0xf]
                  %779 = vst [vmem:[%s563 + $0x1ac] sm:$0xf] %v778
                  %v780 = vld [vmem:[%s562 + $0x338] sm:$0xf]
                  %781 = vst [vmem:[%s563 + $0x1b0] sm:$0xf] %v780
                  %v782 = vld [vmem:[%s562 + $0x33c] sm:$0xf]
                  %783 = vst [vmem:[%s563 + $0x1b4] sm:$0xf] %v782
                  %v784 = vld [vmem:[%s562 + $0x340] sm:$0xf]
                  %785 = vst [vmem:[%s563 + $0x1b8] sm:$0xf] %v784
                  %v786 = vld [vmem:[%s562 + $0x344] sm:$0xf]
                  %787 = vst [vmem:[%s563 + $0x1bc] sm:$0xf] %v786
                  %v788 = vld [vmem:[%s562 + $0x348] sm:$0xf]
                  %789 = vst [vmem:[%s563 + $0x1c0] sm:$0xf] %v788
                  %v790 = vld [vmem:[%s562 + $0x34c] sm:$0xf]
                  %791 = vst [vmem:[%s563 + $0x1c4] sm:$0xf] %v790
                  %v792 = vld [vmem:[%s562 + $0x350] sm:$0xf]
                  %793 = vst [vmem:[%s563 + $0x1c8] sm:$0xf] %v792
                  %v794 = vld [vmem:[%s562 + $0x354] sm:$0xf]
                  %795 = vst [vmem:[%s563 + $0x1cc] sm:$0xf] %v794
                  %v796 = vld [vmem:[%s562 + $0x358] sm:$0xf]
                  %797 = vst [vmem:[%s563 + $0x1d0] sm:$0xf] %v796
                  %v798 = vld [vmem:[%s562 + $0x35c] sm:$0xf]
                  %799 = vst [vmem:[%s563 + $0x1d4] sm:$0xf] %v798
                  %v800 = vld [vmem:[%s562 + $0x360] sm:$0xf]
                  %801 = vst [vmem:[%s563 + $0x1d8] sm:$0xf] %v800
                  %v802 = vld [vmem:[%s562 + $0x364] sm:$0xf]
                  %803 = vst [vmem:[%s563 + $0x1dc] sm:$0xf] %v802
                  %v804 = vld [vmem:[%s562 + $0x368] sm:$0xf]
                  %805 = vst [vmem:[%s563 + $0x1e0] sm:$0xf] %v804
                  %v806 = vld [vmem:[%s562 + $0x36c] sm:$0xf]
                  %807 = vst [vmem:[%s563 + $0x1e4] sm:$0xf] %v806
                  %v808 = vld [vmem:[%s562 + $0x370] sm:$0xf]
                  %809 = vst [vmem:[%s563 + $0x1e8] sm:$0xf] %v808
                  %v810 = vld [vmem:[%s562 + $0x374] sm:$0xf]
                  %811 = vst [vmem:[%s563 + $0x1ec] sm:$0xf] %v810
                  %v812 = vld [vmem:[%s562 + $0x378] sm:$0xf]
                  %813 = vst [vmem:[%s563 + $0x1f0] sm:$0xf] %v812
                  %v814 = vld [vmem:[%s562 + $0x37c] sm:$0xf]
                  %815 = vst [vmem:[%s563 + $0x1f4] sm:$0xf] %v814
                  %v816 = vld [vmem:[%s562 + $0x380] sm:$0xf]
                  %817 = vst [vmem:[%s563 + $0x1f8] sm:$0xf] %v816
                  %v818 = vld [vmem:[%s562 + $0x384] sm:$0xf]
                  %819 = vst [vmem:[%s563 + $0x1fc] sm:$0xf] %v818
                  %v820 = vld [vmem:[%s562 + $0x388] sm:$0xf]
                  %821 = vst [vmem:[%s563 + $0x200] sm:$0xf] %v820
                  %v822 = vld [vmem:[%s562 + $0x38c] sm:$0xf]
                  %823 = vst [vmem:[%s563 + $0x204] sm:$0xf] %v822
                  %v824 = vld [vmem:[%s562 + $0x390] sm:$0xf]
                  %825 = vst [vmem:[%s563 + $0x208] sm:$0xf] %v824
                  %v826 = vld [vmem:[%s562 + $0x394] sm:$0xf]
                  %827 = vst [vmem:[%s563 + $0x20c] sm:$0xf] %v826
                  %v828 = vld [vmem:[%s562 + $0x398] sm:$0xf]
                  %829 = vst [vmem:[%s563 + $0x210] sm:$0xf] %v828
                  %v830 = vld [vmem:[%s562 + $0x39c] sm:$0xf]
                  %831 = vst [vmem:[%s563 + $0x214] sm:$0xf] %v830
                  %v832 = vld [vmem:[%s562 + $0x3a0] sm:$0xf]
                  %833 = vst [vmem:[%s563 + $0x218] sm:$0xf] %v832
                  %v834 = vld [vmem:[%s562 + $0x3a4] sm:$0xf]
                  %835 = vst [vmem:[%s563 + $0x21c] sm:$0xf] %v834
                  %v836 = vld [vmem:[%s562 + $0x3a8] sm:$0xf]
                  %837 = vst [vmem:[%s563 + $0x220] sm:$0xf] %v836
                  %v838 = vld [vmem:[%s562 + $0x3ac] sm:$0xf]
                  %839 = vst [vmem:[%s563 + $0x224] sm:$0xf] %v838
                  %v840 = vld [vmem:[%s562 + $0x3b0] sm:$0xf]
                  %841 = vst [vmem:[%s563 + $0x228] sm:$0xf] %v840
                  %v842 = vld [vmem:[%s562 + $0x3b4] sm:$0xf]
                  %843 = vst [vmem:[%s563 + $0x22c] sm:$0xf] %v842
                  %v844 = vld [vmem:[%s562 + $0x3b8] sm:$0xf]
                  %845 = vst [vmem:[%s563 + $0x230] sm:$0xf] %v844
                  %v846 = vld [vmem:[%s562 + $0x3bc] sm:$0xf]
                  %847 = vst [vmem:[%s563 + $0x234] sm:$0xf] %v846
                  %v848 = vld [vmem:[%s562 + $0x3c0] sm:$0xf]
                  %849 = vst [vmem:[%s563 + $0x238] sm:$0xf] %v848
                  %v850 = vld [vmem:[%s562 + $0x3c4] sm:$0xf]
                  %851 = vst [vmem:[%s563 + $0x23c] sm:$0xf] %v850
                  %v852 = vld [vmem:[%s562 + $0x3c8] sm:$0xf]
                  %853 = vst [vmem:[%s563 + $0x240] sm:$0xf] %v852
                  %v854 = vld [vmem:[%s562 + $0x3cc] sm:$0xf]
                  %855 = vst [vmem:[%s563 + $0x244] sm:$0xf] %v854
                  %v856 = vld [vmem:[%s562 + $0x3d0] sm:$0xf]
                  %857 = vst [vmem:[%s563 + $0x248] sm:$0xf] %v856
                  %v858 = vld [vmem:[%s562 + $0x498] sm:$0xf]
                  %859 = vst [vmem:[%s563 + $0x24c] sm:$0xf] %v858
                  %v860 = vld [vmem:[%s562 + $0x49c] sm:$0xf]
                  %861 = vst [vmem:[%s563 + $0x250] sm:$0xf] %v860
                  %v862 = vld [vmem:[%s562 + $0x4a0] sm:$0xf]
                  %863 = vst [vmem:[%s563 + $0x254] sm:$0xf] %v862
                  %v864 = vld [vmem:[%s562 + $0x4a4] sm:$0xf]
                  %865 = vst [vmem:[%s563 + $0x258] sm:$0xf] %v864
                  %v866 = vld [vmem:[%s562 + $0x4a8] sm:$0xf]
                  %867 = vst [vmem:[%s563 + $0x25c] sm:$0xf] %v866
                  %v868 = vld [vmem:[%s562 + $0x4ac] sm:$0xf]
                  %869 = vst [vmem:[%s563 + $0x260] sm:$0xf] %v868
                  %v870 = vld [vmem:[%s562 + $0x4b0] sm:$0xf]
                  %871 = vst [vmem:[%s563 + $0x264] sm:$0xf] %v870
                  %v872 = vld [vmem:[%s562 + $0x4b4] sm:$0xf]
                  %873 = vst [vmem:[%s563 + $0x268] sm:$0xf] %v872
                  %v874 = vld [vmem:[%s562 + $0x4b8] sm:$0xf]
                  %875 = vst [vmem:[%s563 + $0x26c] sm:$0xf] %v874
                  %v876 = vld [vmem:[%s562 + $0x4bc] sm:$0xf]
                  %877 = vst [vmem:[%s563 + $0x270] sm:$0xf] %v876
                  %v878 = vld [vmem:[%s562 + $0x4c0] sm:$0xf]
                  %879 = vst [vmem:[%s563 + $0x274] sm:$0xf] %v878
                  %v880 = vld [vmem:[%s562 + $0x4c4] sm:$0xf]
                  %881 = vst [vmem:[%s563 + $0x278] sm:$0xf] %v880
                  %v882 = vld [vmem:[%s562 + $0x4c8] sm:$0xf]
                  %883 = vst [vmem:[%s563 + $0x27c] sm:$0xf] %v882
                  %v884 = vld [vmem:[%s562 + $0x4cc] sm:$0xf]
                  %885 = vst [vmem:[%s563 + $0x280] sm:$0xf] %v884
                  %v886 = vld [vmem:[%s562 + $0x4d0] sm:$0xf]
                  %887 = vst [vmem:[%s563 + $0x284] sm:$0xf] %v886
                  %v888 = vld [vmem:[%s562 + $0x4d4] sm:$0xf]
                  %889 = vst [vmem:[%s563 + $0x288] sm:$0xf] %v888
                  %v890 = vld [vmem:[%s562 + $0x4d8] sm:$0xf]
                  %891 = vst [vmem:[%s563 + $0x28c] sm:$0xf] %v890
                  %v892 = vld [vmem:[%s562 + $0x4dc] sm:$0xf]
                  %893 = vst [vmem:[%s563 + $0x290] sm:$0xf] %v892
                  %v894 = vld [vmem:[%s562 + $0x4e0] sm:$0xf]
                  %895 = vst [vmem:[%s563 + $0x294] sm:$0xf] %v894
                  %v896 = vld [vmem:[%s562 + $0x4e4] sm:$0xf]
                  %897 = vst [vmem:[%s563 + $0x298] sm:$0xf] %v896
                  %v898 = vld [vmem:[%s562 + $0x4e8] sm:$0xf]
                  %899 = vst [vmem:[%s563 + $0x29c] sm:$0xf] %v898
                  %v900 = vld [vmem:[%s562 + $0x4ec] sm:$0xf]
                  %901 = vst [vmem:[%s563 + $0x2a0] sm:$0xf] %v900
                  %v902 = vld [vmem:[%s562 + $0x4f0] sm:$0xf]
                  %903 = vst [vmem:[%s563 + $0x2a4] sm:$0xf] %v902
                  %v904 = vld [vmem:[%s562 + $0x4f4] sm:$0xf]
                  %905 = vst [vmem:[%s563 + $0x2a8] sm:$0xf] %v904
                  %v906 = vld [vmem:[%s562 + $0x4f8] sm:$0xf]
                  %907 = vst [vmem:[%s563 + $0x2ac] sm:$0xf] %v906
                  %v908 = vld [vmem:[%s562 + $0x4fc] sm:$0xf]
                  %909 = vst [vmem:[%s563 + $0x2b0] sm:$0xf] %v908
                  %v910 = vld [vmem:[%s562 + $0x500] sm:$0xf]
                  %911 = vst [vmem:[%s563 + $0x2b4] sm:$0xf] %v910
                  %v912 = vld [vmem:[%s562 + $0x504] sm:$0xf]
                  %913 = vst [vmem:[%s563 + $0x2b8] sm:$0xf] %v912
                  %v914 = vld [vmem:[%s562 + $0x508] sm:$0xf]
                  %915 = vst [vmem:[%s563 + $0x2bc] sm:$0xf] %v914
                  %v916 = vld [vmem:[%s562 + $0x50c] sm:$0xf]
                  %917 = vst [vmem:[%s563 + $0x2c0] sm:$0xf] %v916
                  %v918 = vld [vmem:[%s562 + $0x510] sm:$0xf]
                  %919 = vst [vmem:[%s563 + $0x2c4] sm:$0xf] %v918
                  %v920 = vld [vmem:[%s562 + $0x514] sm:$0xf]
                  %921 = vst [vmem:[%s563 + $0x2c8] sm:$0xf] %v920
                  %v922 = vld [vmem:[%s562 + $0x518] sm:$0xf]
                  %923 = vst [vmem:[%s563 + $0x2cc] sm:$0xf] %v922
                  %v924 = vld [vmem:[%s562 + $0x51c] sm:$0xf]
                  %925 = vst [vmem:[%s563 + $0x2d0] sm:$0xf] %v924
                  %v926 = vld [vmem:[%s562 + $0x520] sm:$0xf]
                  %927 = vst [vmem:[%s563 + $0x2d4] sm:$0xf] %v926
                  %v928 = vld [vmem:[%s562 + $0x524] sm:$0xf]
                  %929 = vst [vmem:[%s563 + $0x2d8] sm:$0xf] %v928
                  %v930 = vld [vmem:[%s562 + $0x528] sm:$0xf]
                  %931 = vst [vmem:[%s563 + $0x2dc] sm:$0xf] %v930
                  %v932 = vld [vmem:[%s562 + $0x52c] sm:$0xf]
                  %933 = vst [vmem:[%s563 + $0x2e0] sm:$0xf] %v932
                  %v934 = vld [vmem:[%s562 + $0x530] sm:$0xf]
                  %935 = vst [vmem:[%s563 + $0x2e4] sm:$0xf] %v934
                  %v936 = vld [vmem:[%s562 + $0x534] sm:$0xf]
                  %937 = vst [vmem:[%s563 + $0x2e8] sm:$0xf] %v936
                  %v938 = vld [vmem:[%s562 + $0x538] sm:$0xf]
                  %939 = vst [vmem:[%s563 + $0x2ec] sm:$0xf] %v938
                  %v940 = vld [vmem:[%s562 + $0x53c] sm:$0xf]
                  %941 = vst [vmem:[%s563 + $0x2f0] sm:$0xf] %v940
                  %v942 = vld [vmem:[%s562 + $0x540] sm:$0xf]
                  %943 = vst [vmem:[%s563 + $0x2f4] sm:$0xf] %v942
                  %v944 = vld [vmem:[%s562 + $0x544] sm:$0xf]
                  %945 = vst [vmem:[%s563 + $0x2f8] sm:$0xf] %v944
                  %v946 = vld [vmem:[%s562 + $0x548] sm:$0xf]
                  %947 = vst [vmem:[%s563 + $0x2fc] sm:$0xf] %v946
                  %v948 = vld [vmem:[%s562 + $0x54c] sm:$0xf]
                  %949 = vst [vmem:[%s563 + $0x300] sm:$0xf] %v948
                  %v950 = vld [vmem:[%s562 + $0x550] sm:$0xf]
                  %951 = vst [vmem:[%s563 + $0x304] sm:$0xf] %v950
                  %v952 = vld [vmem:[%s562 + $0x554] sm:$0xf]
                  %953 = vst [vmem:[%s563 + $0x308] sm:$0xf] %v952
                  %v954 = vld [vmem:[%s562 + $0x558] sm:$0xf]
                  %955 = vst [vmem:[%s563 + $0x30c] sm:$0xf] %v954
                $region63: #{student_cnn_cifar10_forward.3} parent=50 // loop_footer
                  %s561 = sadd.s32 1, %s557
                $region64: #{student_cnn_cifar10_forward.3} parent=50 // loop_footer_branch
                  %556 = sbr.rel target = $region60
                $region65: #{student_cnn_cifar10_forward.3} parent=50 // loop_exit
                  _
              $region51: #{student_cnn_cifar10_forward.3} parent=35 // pred_fallthru
                _
            $region36: #{student_cnn_cifar10_forward.3} parent=31 // pred_fallthru
              _
            // Predicated region
            $region37: #{student_cnn_cifar10_forward.3} parent=31 // pred_check
              _
            $region38: #{student_cnn_cifar10_forward.3} parent=31 // pred_check_branch
              %143 = sbr.rel (0) target = $region40
            $region39: #{student_cnn_cifar10_forward.3} parent=31 // pred_region
              loop: start=0, step=1, limit=1
              $region41: #{student_cnn_cifar10_forward.3} parent=39 // loop_pre_header
                _
              $region42: #{student_cnn_cifar10_forward.3} parent=39 // loop_header
                %s146 = sphi 0, %s150
                %p147 = scmp.ge.s32.totalorder %s146, 1
                %s151 = sphi %s137, %s137
                %s152 = sphi %s134, %s134
              $region43: #{student_cnn_cifar10_forward.3} parent=39 // loop_header_branch
                %149 = sbr.rel (%p147) target = $region47
              $region44: #{student_cnn_cifar10_forward.3} parent=39 // loop_body
                %v153 = vld [vmem:[%s151] sm:$0xf]
                %154 = vst [vmem:[%s152] sm:$0xf] %v153
                %v155 = vld [vmem:[%s151 + $0x4] sm:$0xf]
                %156 = vst [vmem:[%s152 + $0x4] sm:$0xf] %v155
                %v157 = vld [vmem:[%s151 + $0x8] sm:$0xf]
                %158 = vst [vmem:[%s152 + $0x8] sm:$0xf] %v157
                %v159 = vld [vmem:[%s151 + $0xc] sm:$0xf]
                %160 = vst [vmem:[%s152 + $0xc] sm:$0xf] %v159
                %v161 = vld [vmem:[%s151 + $0x10] sm:$0xf]
                %162 = vst [vmem:[%s152 + $0x10] sm:$0xf] %v161
                %v163 = vld [vmem:[%s151 + $0x14] sm:$0xf]
                %164 = vst [vmem:[%s152 + $0x14] sm:$0xf] %v163
                %v165 = vld [vmem:[%s151 + $0x18] sm:$0xf]
                %166 = vst [vmem:[%s152 + $0x18] sm:$0xf] %v165
                %v167 = vld [vmem:[%s151 + $0x1c] sm:$0xf]
                %168 = vst [vmem:[%s152 + $0x1c] sm:$0xf] %v167
                %v169 = vld [vmem:[%s151 + $0x20] sm:$0xf]
                %170 = vst [vmem:[%s152 + $0x20] sm:$0xf] %v169
                %v171 = vld [vmem:[%s151 + $0x24] sm:$0xf]
                %172 = vst [vmem:[%s152 + $0x24] sm:$0xf] %v171
                %v173 = vld [vmem:[%s151 + $0x28] sm:$0xf]
                %174 = vst [vmem:[%s152 + $0x28] sm:$0xf] %v173
                %v175 = vld [vmem:[%s151 + $0x2c] sm:$0xf]
                %176 = vst [vmem:[%s152 + $0x2c] sm:$0xf] %v175
                %v177 = vld [vmem:[%s151 + $0x30] sm:$0xf]
                %178 = vst [vmem:[%s152 + $0x30] sm:$0xf] %v177
                %v179 = vld [vmem:[%s151 + $0x34] sm:$0xf]
                %180 = vst [vmem:[%s152 + $0x34] sm:$0xf] %v179
                %v181 = vld [vmem:[%s151 + $0x38] sm:$0xf]
                %182 = vst [vmem:[%s152 + $0x38] sm:$0xf] %v181
                %v183 = vld [vmem:[%s151 + $0x3c] sm:$0xf]
                %184 = vst [vmem:[%s152 + $0x3c] sm:$0xf] %v183
                %v185 = vld [vmem:[%s151 + $0x40] sm:$0xf]
                %186 = vst [vmem:[%s152 + $0x40] sm:$0xf] %v185
                %v187 = vld [vmem:[%s151 + $0x44] sm:$0xf]
                %188 = vst [vmem:[%s152 + $0x44] sm:$0xf] %v187
                %v189 = vld [vmem:[%s151 + $0x48] sm:$0xf]
                %190 = vst [vmem:[%s152 + $0x48] sm:$0xf] %v189
                %v191 = vld [vmem:[%s151 + $0x4c] sm:$0xf]
                %192 = vst [vmem:[%s152 + $0x4c] sm:$0xf] %v191
                %v193 = vld [vmem:[%s151 + $0x50] sm:$0xf]
                %194 = vst [vmem:[%s152 + $0x50] sm:$0xf] %v193
                %v195 = vld [vmem:[%s151 + $0x54] sm:$0xf]
                %196 = vst [vmem:[%s152 + $0x54] sm:$0xf] %v195
                %v197 = vld [vmem:[%s151 + $0x58] sm:$0xf]
                %198 = vst [vmem:[%s152 + $0x58] sm:$0xf] %v197
                %v199 = vld [vmem:[%s151 + $0x5c] sm:$0xf]
                %200 = vst [vmem:[%s152 + $0x5c] sm:$0xf] %v199
                %v201 = vld [vmem:[%s151 + $0x60] sm:$0xf]
                %202 = vst [vmem:[%s152 + $0x60] sm:$0xf] %v201
                %v203 = vld [vmem:[%s151 + $0x64] sm:$0xf]
                %204 = vst [vmem:[%s152 + $0x64] sm:$0xf] %v203
                %v205 = vld [vmem:[%s151 + $0x68] sm:$0xf]
                %206 = vst [vmem:[%s152 + $0x68] sm:$0xf] %v205
                %v207 = vld [vmem:[%s151 + $0x6c] sm:$0xf]
                %208 = vst [vmem:[%s152 + $0x6c] sm:$0xf] %v207
                %v209 = vld [vmem:[%s151 + $0x70] sm:$0xf]
                %210 = vst [vmem:[%s152 + $0x70] sm:$0xf] %v209
                %v211 = vld [vmem:[%s151 + $0x74] sm:$0xf]
                %212 = vst [vmem:[%s152 + $0x74] sm:$0xf] %v211
                %v213 = vld [vmem:[%s151 + $0x78] sm:$0xf]
                %214 = vst [vmem:[%s152 + $0x78] sm:$0xf] %v213
                %v215 = vld [vmem:[%s151 + $0x7c] sm:$0xf]
                %216 = vst [vmem:[%s152 + $0x7c] sm:$0xf] %v215
                %v217 = vld [vmem:[%s151 + $0x80] sm:$0xf]
                %218 = vst [vmem:[%s152 + $0x80] sm:$0xf] %v217
                %v219 = vld [vmem:[%s151 + $0x84] sm:$0xf]
                %220 = vst [vmem:[%s152 + $0x84] sm:$0xf] %v219
                %v221 = vld [vmem:[%s151 + $0x88] sm:$0xf]
                %222 = vst [vmem:[%s152 + $0x88] sm:$0xf] %v221
                %v223 = vld [vmem:[%s151 + $0x8c] sm:$0xf]
                %224 = vst [vmem:[%s152 + $0x8c] sm:$0xf] %v223
                %v225 = vld [vmem:[%s151 + $0x90] sm:$0xf]
                %226 = vst [vmem:[%s152 + $0x90] sm:$0xf] %v225
                %v227 = vld [vmem:[%s151 + $0x94] sm:$0xf]
                %228 = vst [vmem:[%s152 + $0x94] sm:$0xf] %v227
                %v229 = vld [vmem:[%s151 + $0x98] sm:$0xf]
                %230 = vst [vmem:[%s152 + $0x98] sm:$0xf] %v229
                %v231 = vld [vmem:[%s151 + $0x9c] sm:$0xf]
                %232 = vst [vmem:[%s152 + $0x9c] sm:$0xf] %v231
                %v233 = vld [vmem:[%s151 + $0xa0] sm:$0xf]
                %234 = vst [vmem:[%s152 + $0xa0] sm:$0xf] %v233
                %v235 = vld [vmem:[%s151 + $0xa4] sm:$0xf]
                %236 = vst [vmem:[%s152 + $0xa4] sm:$0xf] %v235
                %v237 = vld [vmem:[%s151 + $0xa8] sm:$0xf]
                %238 = vst [vmem:[%s152 + $0xa8] sm:$0xf] %v237
                %v239 = vld [vmem:[%s151 + $0xac] sm:$0xf]
                %240 = vst [vmem:[%s152 + $0xac] sm:$0xf] %v239
                %v241 = vld [vmem:[%s151 + $0xb0] sm:$0xf]
                %242 = vst [vmem:[%s152 + $0xb0] sm:$0xf] %v241
                %v243 = vld [vmem:[%s151 + $0xb4] sm:$0xf]
                %244 = vst [vmem:[%s152 + $0xb4] sm:$0xf] %v243
                %v245 = vld [vmem:[%s151 + $0xb8] sm:$0xf]
                %246 = vst [vmem:[%s152 + $0xb8] sm:$0xf] %v245
                %v247 = vld [vmem:[%s151 + $0xbc] sm:$0xf]
                %248 = vst [vmem:[%s152 + $0xbc] sm:$0xf] %v247
                %v249 = vld [vmem:[%s151 + $0xc0] sm:$0xf]
                %250 = vst [vmem:[%s152 + $0xc0] sm:$0xf] %v249
                %v251 = vld [vmem:[%s151 + $0x188] sm:$0xf]
                %252 = vst [vmem:[%s152 + $0xc4] sm:$0xf] %v251
                %v253 = vld [vmem:[%s151 + $0x18c] sm:$0xf]
                %254 = vst [vmem:[%s152 + $0xc8] sm:$0xf] %v253
                %v255 = vld [vmem:[%s151 + $0x190] sm:$0xf]
                %256 = vst [vmem:[%s152 + $0xcc] sm:$0xf] %v255
                %v257 = vld [vmem:[%s151 + $0x194] sm:$0xf]
                %258 = vst [vmem:[%s152 + $0xd0] sm:$0xf] %v257
                %v259 = vld [vmem:[%s151 + $0x198] sm:$0xf]
                %260 = vst [vmem:[%s152 + $0xd4] sm:$0xf] %v259
                %v261 = vld [vmem:[%s151 + $0x19c] sm:$0xf]
                %262 = vst [vmem:[%s152 + $0xd8] sm:$0xf] %v261
                %v263 = vld [vmem:[%s151 + $0x1a0] sm:$0xf]
                %264 = vst [vmem:[%s152 + $0xdc] sm:$0xf] %v263
                %v265 = vld [vmem:[%s151 + $0x1a4] sm:$0xf]
                %266 = vst [vmem:[%s152 + $0xe0] sm:$0xf] %v265
                %v267 = vld [vmem:[%s151 + $0x1a8] sm:$0xf]
                %268 = vst [vmem:[%s152 + $0xe4] sm:$0xf] %v267
                %v269 = vld [vmem:[%s151 + $0x1ac] sm:$0xf]
                %270 = vst [vmem:[%s152 + $0xe8] sm:$0xf] %v269
                %v271 = vld [vmem:[%s151 + $0x1b0] sm:$0xf]
                %272 = vst [vmem:[%s152 + $0xec] sm:$0xf] %v271
                %v273 = vld [vmem:[%s151 + $0x1b4] sm:$0xf]
                %274 = vst [vmem:[%s152 + $0xf0] sm:$0xf] %v273
                %v275 = vld [vmem:[%s151 + $0x1b8] sm:$0xf]
                %276 = vst [vmem:[%s152 + $0xf4] sm:$0xf] %v275
                %v277 = vld [vmem:[%s151 + $0x1bc] sm:$0xf]
                %278 = vst [vmem:[%s152 + $0xf8] sm:$0xf] %v277
                %v279 = vld [vmem:[%s151 + $0x1c0] sm:$0xf]
                %280 = vst [vmem:[%s152 + $0xfc] sm:$0xf] %v279
                %v281 = vld [vmem:[%s151 + $0x1c4] sm:$0xf]
                %282 = vst [vmem:[%s152 + $0x100] sm:$0xf] %v281
                %v283 = vld [vmem:[%s151 + $0x1c8] sm:$0xf]
                %284 = vst [vmem:[%s152 + $0x104] sm:$0xf] %v283
                %v285 = vld [vmem:[%s151 + $0x1cc] sm:$0xf]
                %286 = vst [vmem:[%s152 + $0x108] sm:$0xf] %v285
                %v287 = vld [vmem:[%s151 + $0x1d0] sm:$0xf]
                %288 = vst [vmem:[%s152 + $0x10c] sm:$0xf] %v287
                %v289 = vld [vmem:[%s151 + $0x1d4] sm:$0xf]
                %290 = vst [vmem:[%s152 + $0x110] sm:$0xf] %v289
                %v291 = vld [vmem:[%s151 + $0x1d8] sm:$0xf]
                %292 = vst [vmem:[%s152 + $0x114] sm:$0xf] %v291
                %v293 = vld [vmem:[%s151 + $0x1dc] sm:$0xf]
                %294 = vst [vmem:[%s152 + $0x118] sm:$0xf] %v293
                %v295 = vld [vmem:[%s151 + $0x1e0] sm:$0xf]
                %296 = vst [vmem:[%s152 + $0x11c] sm:$0xf] %v295
                %v297 = vld [vmem:[%s151 + $0x1e4] sm:$0xf]
                %298 = vst [vmem:[%s152 + $0x120] sm:$0xf] %v297
                %v299 = vld [vmem:[%s151 + $0x1e8] sm:$0xf]
                %300 = vst [vmem:[%s152 + $0x124] sm:$0xf] %v299
                %v301 = vld [vmem:[%s151 + $0x1ec] sm:$0xf]
                %302 = vst [vmem:[%s152 + $0x128] sm:$0xf] %v301
                %v303 = vld [vmem:[%s151 + $0x1f0] sm:$0xf]
                %304 = vst [vmem:[%s152 + $0x12c] sm:$0xf] %v303
                %v305 = vld [vmem:[%s151 + $0x1f4] sm:$0xf]
                %306 = vst [vmem:[%s152 + $0x130] sm:$0xf] %v305
                %v307 = vld [vmem:[%s151 + $0x1f8] sm:$0xf]
                %308 = vst [vmem:[%s152 + $0x134] sm:$0xf] %v307
                %v309 = vld [vmem:[%s151 + $0x1fc] sm:$0xf]
                %310 = vst [vmem:[%s152 + $0x138] sm:$0xf] %v309
                %v311 = vld [vmem:[%s151 + $0x200] sm:$0xf]
                %312 = vst [vmem:[%s152 + $0x13c] sm:$0xf] %v311
                %v313 = vld [vmem:[%s151 + $0x204] sm:$0xf]
                %314 = vst [vmem:[%s152 + $0x140] sm:$0xf] %v313
                %v315 = vld [vmem:[%s151 + $0x208] sm:$0xf]
                %316 = vst [vmem:[%s152 + $0x144] sm:$0xf] %v315
                %v317 = vld [vmem:[%s151 + $0x20c] sm:$0xf]
                %318 = vst [vmem:[%s152 + $0x148] sm:$0xf] %v317
                %v319 = vld [vmem:[%s151 + $0x210] sm:$0xf]
                %320 = vst [vmem:[%s152 + $0x14c] sm:$0xf] %v319
                %v321 = vld [vmem:[%s151 + $0x214] sm:$0xf]
                %322 = vst [vmem:[%s152 + $0x150] sm:$0xf] %v321
                %v323 = vld [vmem:[%s151 + $0x218] sm:$0xf]
                %324 = vst [vmem:[%s152 + $0x154] sm:$0xf] %v323
                %v325 = vld [vmem:[%s151 + $0x21c] sm:$0xf]
                %326 = vst [vmem:[%s152 + $0x158] sm:$0xf] %v325
                %v327 = vld [vmem:[%s151 + $0x220] sm:$0xf]
                %328 = vst [vmem:[%s152 + $0x15c] sm:$0xf] %v327
                %v329 = vld [vmem:[%s151 + $0x224] sm:$0xf]
                %330 = vst [vmem:[%s152 + $0x160] sm:$0xf] %v329
                %v331 = vld [vmem:[%s151 + $0x228] sm:$0xf]
                %332 = vst [vmem:[%s152 + $0x164] sm:$0xf] %v331
                %v333 = vld [vmem:[%s151 + $0x22c] sm:$0xf]
                %334 = vst [vmem:[%s152 + $0x168] sm:$0xf] %v333
                %v335 = vld [vmem:[%s151 + $0x230] sm:$0xf]
                %336 = vst [vmem:[%s152 + $0x16c] sm:$0xf] %v335
                %v337 = vld [vmem:[%s151 + $0x234] sm:$0xf]
                %338 = vst [vmem:[%s152 + $0x170] sm:$0xf] %v337
                %v339 = vld [vmem:[%s151 + $0x238] sm:$0xf]
                %340 = vst [vmem:[%s152 + $0x174] sm:$0xf] %v339
                %v341 = vld [vmem:[%s151 + $0x23c] sm:$0xf]
                %342 = vst [vmem:[%s152 + $0x178] sm:$0xf] %v341
                %v343 = vld [vmem:[%s151 + $0x240] sm:$0xf]
                %344 = vst [vmem:[%s152 + $0x17c] sm:$0xf] %v343
                %v345 = vld [vmem:[%s151 + $0x244] sm:$0xf]
                %346 = vst [vmem:[%s152 + $0x180] sm:$0xf] %v345
                %v347 = vld [vmem:[%s151 + $0x248] sm:$0xf]
                %348 = vst [vmem:[%s152 + $0x184] sm:$0xf] %v347
                %v349 = vld [vmem:[%s151 + $0x310] sm:$0xf]
                %350 = vst [vmem:[%s152 + $0x188] sm:$0xf] %v349
                %v351 = vld [vmem:[%s151 + $0x314] sm:$0xf]
                %352 = vst [vmem:[%s152 + $0x18c] sm:$0xf] %v351
                %v353 = vld [vmem:[%s151 + $0x318] sm:$0xf]
                %354 = vst [vmem:[%s152 + $0x190] sm:$0xf] %v353
                %v355 = vld [vmem:[%s151 + $0x31c] sm:$0xf]
                %356 = vst [vmem:[%s152 + $0x194] sm:$0xf] %v355
                %v357 = vld [vmem:[%s151 + $0x320] sm:$0xf]
                %358 = vst [vmem:[%s152 + $0x198] sm:$0xf] %v357
                %v359 = vld [vmem:[%s151 + $0x324] sm:$0xf]
                %360 = vst [vmem:[%s152 + $0x19c] sm:$0xf] %v359
                %v361 = vld [vmem:[%s151 + $0x328] sm:$0xf]
                %362 = vst [vmem:[%s152 + $0x1a0] sm:$0xf] %v361
                %v363 = vld [vmem:[%s151 + $0x32c] sm:$0xf]
                %364 = vst [vmem:[%s152 + $0x1a4] sm:$0xf] %v363
                %v365 = vld [vmem:[%s151 + $0x330] sm:$0xf]
                %366 = vst [vmem:[%s152 + $0x1a8] sm:$0xf] %v365
                %v367 = vld [vmem:[%s151 + $0x334] sm:$0xf]
                %368 = vst [vmem:[%s152 + $0x1ac] sm:$0xf] %v367
                %v369 = vld [vmem:[%s151 + $0x338] sm:$0xf]
                %370 = vst [vmem:[%s152 + $0x1b0] sm:$0xf] %v369
                %v371 = vld [vmem:[%s151 + $0x33c] sm:$0xf]
                %372 = vst [vmem:[%s152 + $0x1b4] sm:$0xf] %v371
                %v373 = vld [vmem:[%s151 + $0x340] sm:$0xf]
                %374 = vst [vmem:[%s152 + $0x1b8] sm:$0xf] %v373
                %v375 = vld [vmem:[%s151 + $0x344] sm:$0xf]
                %376 = vst [vmem:[%s152 + $0x1bc] sm:$0xf] %v375
                %v377 = vld [vmem:[%s151 + $0x348] sm:$0xf]
                %378 = vst [vmem:[%s152 + $0x1c0] sm:$0xf] %v377
                %v379 = vld [vmem:[%s151 + $0x34c] sm:$0xf]
                %380 = vst [vmem:[%s152 + $0x1c4] sm:$0xf] %v379
                %v381 = vld [vmem:[%s151 + $0x350] sm:$0xf]
                %382 = vst [vmem:[%s152 + $0x1c8] sm:$0xf] %v381
                %v383 = vld [vmem:[%s151 + $0x354] sm:$0xf]
                %384 = vst [vmem:[%s152 + $0x1cc] sm:$0xf] %v383
                %v385 = vld [vmem:[%s151 + $0x358] sm:$0xf]
                %386 = vst [vmem:[%s152 + $0x1d0] sm:$0xf] %v385
                %v387 = vld [vmem:[%s151 + $0x35c] sm:$0xf]
                %388 = vst [vmem:[%s152 + $0x1d4] sm:$0xf] %v387
                %v389 = vld [vmem:[%s151 + $0x360] sm:$0xf]
                %390 = vst [vmem:[%s152 + $0x1d8] sm:$0xf] %v389
                %v391 = vld [vmem:[%s151 + $0x364] sm:$0xf]
                %392 = vst [vmem:[%s152 + $0x1dc] sm:$0xf] %v391
                %v393 = vld [vmem:[%s151 + $0x368] sm:$0xf]
                %394 = vst [vmem:[%s152 + $0x1e0] sm:$0xf] %v393
                %v395 = vld [vmem:[%s151 + $0x36c] sm:$0xf]
                %396 = vst [vmem:[%s152 + $0x1e4] sm:$0xf] %v395
                %v397 = vld [vmem:[%s151 + $0x370] sm:$0xf]
                %398 = vst [vmem:[%s152 + $0x1e8] sm:$0xf] %v397
                %v399 = vld [vmem:[%s151 + $0x374] sm:$0xf]
                %400 = vst [vmem:[%s152 + $0x1ec] sm:$0xf] %v399
                %v401 = vld [vmem:[%s151 + $0x378] sm:$0xf]
                %402 = vst [vmem:[%s152 + $0x1f0] sm:$0xf] %v401
                %v403 = vld [vmem:[%s151 + $0x37c] sm:$0xf]
                %404 = vst [vmem:[%s152 + $0x1f4] sm:$0xf] %v403
                %v405 = vld [vmem:[%s151 + $0x380] sm:$0xf]
                %406 = vst [vmem:[%s152 + $0x1f8] sm:$0xf] %v405
                %v407 = vld [vmem:[%s151 + $0x384] sm:$0xf]
                %408 = vst [vmem:[%s152 + $0x1fc] sm:$0xf] %v407
                %v409 = vld [vmem:[%s151 + $0x388] sm:$0xf]
                %410 = vst [vmem:[%s152 + $0x200] sm:$0xf] %v409
                %v411 = vld [vmem:[%s151 + $0x38c] sm:$0xf]
                %412 = vst [vmem:[%s152 + $0x204] sm:$0xf] %v411
                %v413 = vld [vmem:[%s151 + $0x390] sm:$0xf]
                %414 = vst [vmem:[%s152 + $0x208] sm:$0xf] %v413
                %v415 = vld [vmem:[%s151 + $0x394] sm:$0xf]
                %416 = vst [vmem:[%s152 + $0x20c] sm:$0xf] %v415
                %v417 = vld [vmem:[%s151 + $0x398] sm:$0xf]
                %418 = vst [vmem:[%s152 + $0x210] sm:$0xf] %v417
                %v419 = vld [vmem:[%s151 + $0x39c] sm:$0xf]
                %420 = vst [vmem:[%s152 + $0x214] sm:$0xf] %v419
                %v421 = vld [vmem:[%s151 + $0x3a0] sm:$0xf]
                %422 = vst [vmem:[%s152 + $0x218] sm:$0xf] %v421
                %v423 = vld [vmem:[%s151 + $0x3a4] sm:$0xf]
                %424 = vst [vmem:[%s152 + $0x21c] sm:$0xf] %v423
                %v425 = vld [vmem:[%s151 + $0x3a8] sm:$0xf]
                %426 = vst [vmem:[%s152 + $0x220] sm:$0xf] %v425
                %v427 = vld [vmem:[%s151 + $0x3ac] sm:$0xf]
                %428 = vst [vmem:[%s152 + $0x224] sm:$0xf] %v427
                %v429 = vld [vmem:[%s151 + $0x3b0] sm:$0xf]
                %430 = vst [vmem:[%s152 + $0x228] sm:$0xf] %v429
                %v431 = vld [vmem:[%s151 + $0x3b4] sm:$0xf]
                %432 = vst [vmem:[%s152 + $0x22c] sm:$0xf] %v431
                %v433 = vld [vmem:[%s151 + $0x3b8] sm:$0xf]
                %434 = vst [vmem:[%s152 + $0x230] sm:$0xf] %v433
                %v435 = vld [vmem:[%s151 + $0x3bc] sm:$0xf]
                %436 = vst [vmem:[%s152 + $0x234] sm:$0xf] %v435
                %v437 = vld [vmem:[%s151 + $0x3c0] sm:$0xf]
                %438 = vst [vmem:[%s152 + $0x238] sm:$0xf] %v437
                %v439 = vld [vmem:[%s151 + $0x3c4] sm:$0xf]
                %440 = vst [vmem:[%s152 + $0x23c] sm:$0xf] %v439
                %v441 = vld [vmem:[%s151 + $0x3c8] sm:$0xf]
                %442 = vst [vmem:[%s152 + $0x240] sm:$0xf] %v441
                %v443 = vld [vmem:[%s151 + $0x3cc] sm:$0xf]
                %444 = vst [vmem:[%s152 + $0x244] sm:$0xf] %v443
                %v445 = vld [vmem:[%s151 + $0x3d0] sm:$0xf]
                %446 = vst [vmem:[%s152 + $0x248] sm:$0xf] %v445
                %v447 = vld [vmem:[%s151 + $0x498] sm:$0xf]
                %448 = vst [vmem:[%s152 + $0x24c] sm:$0xf] %v447
                %v449 = vld [vmem:[%s151 + $0x49c] sm:$0xf]
                %450 = vst [vmem:[%s152 + $0x250] sm:$0xf] %v449
                %v451 = vld [vmem:[%s151 + $0x4a0] sm:$0xf]
                %452 = vst [vmem:[%s152 + $0x254] sm:$0xf] %v451
                %v453 = vld [vmem:[%s151 + $0x4a4] sm:$0xf]
                %454 = vst [vmem:[%s152 + $0x258] sm:$0xf] %v453
                %v455 = vld [vmem:[%s151 + $0x4a8] sm:$0xf]
                %456 = vst [vmem:[%s152 + $0x25c] sm:$0xf] %v455
                %v457 = vld [vmem:[%s151 + $0x4ac] sm:$0xf]
                %458 = vst [vmem:[%s152 + $0x260] sm:$0xf] %v457
                %v459 = vld [vmem:[%s151 + $0x4b0] sm:$0xf]
                %460 = vst [vmem:[%s152 + $0x264] sm:$0xf] %v459
                %v461 = vld [vmem:[%s151 + $0x4b4] sm:$0xf]
                %462 = vst [vmem:[%s152 + $0x268] sm:$0xf] %v461
                %v463 = vld [vmem:[%s151 + $0x4b8] sm:$0xf]
                %464 = vst [vmem:[%s152 + $0x26c] sm:$0xf] %v463
                %v465 = vld [vmem:[%s151 + $0x4bc] sm:$0xf]
                %466 = vst [vmem:[%s152 + $0x270] sm:$0xf] %v465
                %v467 = vld [vmem:[%s151 + $0x4c0] sm:$0xf]
                %468 = vst [vmem:[%s152 + $0x274] sm:$0xf] %v467
                %v469 = vld [vmem:[%s151 + $0x4c4] sm:$0xf]
                %470 = vst [vmem:[%s152 + $0x278] sm:$0xf] %v469
                %v471 = vld [vmem:[%s151 + $0x4c8] sm:$0xf]
                %472 = vst [vmem:[%s152 + $0x27c] sm:$0xf] %v471
                %v473 = vld [vmem:[%s151 + $0x4cc] sm:$0xf]
                %474 = vst [vmem:[%s152 + $0x280] sm:$0xf] %v473
                %v475 = vld [vmem:[%s151 + $0x4d0] sm:$0xf]
                %476 = vst [vmem:[%s152 + $0x284] sm:$0xf] %v475
                %v477 = vld [vmem:[%s151 + $0x4d4] sm:$0xf]
                %478 = vst [vmem:[%s152 + $0x288] sm:$0xf] %v477
                %v479 = vld [vmem:[%s151 + $0x4d8] sm:$0xf]
                %480 = vst [vmem:[%s152 + $0x28c] sm:$0xf] %v479
                %v481 = vld [vmem:[%s151 + $0x4dc] sm:$0xf]
                %482 = vst [vmem:[%s152 + $0x290] sm:$0xf] %v481
                %v483 = vld [vmem:[%s151 + $0x4e0] sm:$0xf]
                %484 = vst [vmem:[%s152 + $0x294] sm:$0xf] %v483
                %v485 = vld [vmem:[%s151 + $0x4e4] sm:$0xf]
                %486 = vst [vmem:[%s152 + $0x298] sm:$0xf] %v485
                %v487 = vld [vmem:[%s151 + $0x4e8] sm:$0xf]
                %488 = vst [vmem:[%s152 + $0x29c] sm:$0xf] %v487
                %v489 = vld [vmem:[%s151 + $0x4ec] sm:$0xf]
                %490 = vst [vmem:[%s152 + $0x2a0] sm:$0xf] %v489
                %v491 = vld [vmem:[%s151 + $0x4f0] sm:$0xf]
                %492 = vst [vmem:[%s152 + $0x2a4] sm:$0xf] %v491
                %v493 = vld [vmem:[%s151 + $0x4f4] sm:$0xf]
                %494 = vst [vmem:[%s152 + $0x2a8] sm:$0xf] %v493
                %v495 = vld [vmem:[%s151 + $0x4f8] sm:$0xf]
                %496 = vst [vmem:[%s152 + $0x2ac] sm:$0xf] %v495
                %v497 = vld [vmem:[%s151 + $0x4fc] sm:$0xf]
                %498 = vst [vmem:[%s152 + $0x2b0] sm:$0xf] %v497
                %v499 = vld [vmem:[%s151 + $0x500] sm:$0xf]
                %500 = vst [vmem:[%s152 + $0x2b4] sm:$0xf] %v499
                %v501 = vld [vmem:[%s151 + $0x504] sm:$0xf]
                %502 = vst [vmem:[%s152 + $0x2b8] sm:$0xf] %v501
                %v503 = vld [vmem:[%s151 + $0x508] sm:$0xf]
                %504 = vst [vmem:[%s152 + $0x2bc] sm:$0xf] %v503
                %v505 = vld [vmem:[%s151 + $0x50c] sm:$0xf]
                %506 = vst [vmem:[%s152 + $0x2c0] sm:$0xf] %v505
                %v507 = vld [vmem:[%s151 + $0x510] sm:$0xf]
                %508 = vst [vmem:[%s152 + $0x2c4] sm:$0xf] %v507
                %v509 = vld [vmem:[%s151 + $0x514] sm:$0xf]
                %510 = vst [vmem:[%s152 + $0x2c8] sm:$0xf] %v509
                %v511 = vld [vmem:[%s151 + $0x518] sm:$0xf]
                %512 = vst [vmem:[%s152 + $0x2cc] sm:$0xf] %v511
                %v513 = vld [vmem:[%s151 + $0x51c] sm:$0xf]
                %514 = vst [vmem:[%s152 + $0x2d0] sm:$0xf] %v513
                %v515 = vld [vmem:[%s151 + $0x520] sm:$0xf]
                %516 = vst [vmem:[%s152 + $0x2d4] sm:$0xf] %v515
                %v517 = vld [vmem:[%s151 + $0x524] sm:$0xf]
                %518 = vst [vmem:[%s152 + $0x2d8] sm:$0xf] %v517
                %v519 = vld [vmem:[%s151 + $0x528] sm:$0xf]
                %520 = vst [vmem:[%s152 + $0x2dc] sm:$0xf] %v519
                %v521 = vld [vmem:[%s151 + $0x52c] sm:$0xf]
                %522 = vst [vmem:[%s152 + $0x2e0] sm:$0xf] %v521
                %v523 = vld [vmem:[%s151 + $0x530] sm:$0xf]
                %524 = vst [vmem:[%s152 + $0x2e4] sm:$0xf] %v523
                %v525 = vld [vmem:[%s151 + $0x534] sm:$0xf]
                %526 = vst [vmem:[%s152 + $0x2e8] sm:$0xf] %v525
                %v527 = vld [vmem:[%s151 + $0x538] sm:$0xf]
                %528 = vst [vmem:[%s152 + $0x2ec] sm:$0xf] %v527
                %v529 = vld [vmem:[%s151 + $0x53c] sm:$0xf]
                %530 = vst [vmem:[%s152 + $0x2f0] sm:$0xf] %v529
                %v531 = vld [vmem:[%s151 + $0x540] sm:$0xf]
                %532 = vst [vmem:[%s152 + $0x2f4] sm:$0xf] %v531
                %v533 = vld [vmem:[%s151 + $0x544] sm:$0xf]
                %534 = vst [vmem:[%s152 + $0x2f8] sm:$0xf] %v533
                %v535 = vld [vmem:[%s151 + $0x548] sm:$0xf]
                %536 = vst [vmem:[%s152 + $0x2fc] sm:$0xf] %v535
                %v537 = vld [vmem:[%s151 + $0x54c] sm:$0xf]
                %538 = vst [vmem:[%s152 + $0x300] sm:$0xf] %v537
                %v539 = vld [vmem:[%s151 + $0x550] sm:$0xf]
                %540 = vst [vmem:[%s152 + $0x304] sm:$0xf] %v539
                %v541 = vld [vmem:[%s151 + $0x554] sm:$0xf]
                %542 = vst [vmem:[%s152 + $0x308] sm:$0xf] %v541
                %v543 = vld [vmem:[%s151 + $0x558] sm:$0xf]
                %544 = vst [vmem:[%s152 + $0x30c] sm:$0xf] %v543
              $region45: #{student_cnn_cifar10_forward.3} parent=39 // loop_footer
                %s150 = sadd.s32 1, %s146
              $region46: #{student_cnn_cifar10_forward.3} parent=39 // loop_footer_branch
                %145 = sbr.rel target = $region42
              $region47: #{student_cnn_cifar10_forward.3} parent=39 // loop_exit
                _
            $region40: #{student_cnn_cifar10_forward.3} parent=31 // pred_fallthru
              _
          $region32: #{student_cnn_cifar10_forward.3} parent=27 // pred_fallthru
            _
          %956 = vnop
        $region28: #{student_cnn_cifar10_forward.3} parent=23 // pred_fallthru
          _
      $region24: #{student_cnn_cifar10_forward.3} parent=5 // pred_fallthru
        _
      %p957 = scmp.le.s32.totalorder 1, %s9
      %p958 = scmp.lt.s32.totalorder %s9, 3
      %p959 = pnand %p957, %p958
      %p960 = pneg %p959
      // Predicated region
      $region66: #{student_cnn_cifar10_forward.3} parent=5 // pred_check
        _
      $region67: #{student_cnn_cifar10_forward.3} parent=5 // pred_check_branch
        %962 = sbr.rel (%p959) target = $region69
      $region68: #{student_cnn_cifar10_forward.3} parent=5 // pred_region
        %s963 = ssub.s32 %s9, 1
        %s964 = sand.u32 %s22, 1
        %s965 = sand.u32 %s22, 1
        %s966 = smul.addr %s965, 784
        %s967 = scalar_lea.vmem [#allocation2], %s966
        // Predicated region
        $region70: #{student_cnn_cifar10_forward.3} parent=68 // pred_check
          %p968 = pneg %p35
        $region71: #{student_cnn_cifar10_forward.3} parent=68 // pred_check_branch
          %970 = sbr.rel (%p968) target = $region73
        $region72: #{student_cnn_cifar10_forward.3} parent=68 // pred_region
          _
        $region73: #{student_cnn_cifar10_forward.3} parent=68 // pred_fallthru
          _
        %s971 = sand.u32 %s22, 1
        %s972 = sand.u32 %s22, 1
        %s973 = smul.addr %s972, 784
        %s974 = scalar_lea.vmem [#allocation2], %s973
        %p975 = pneg %p35
        %p976 = pneg %p32
        %p977 = pneg %p56
        %p978 = pneg %p53
        %p979 = pneg %p77
        %p980 = pneg %p74
        %p981 = pneg %p103
        %p982 = pneg %p100
        %s983 = smul.u32 49, %s14
        %p984 = scmp.lt.s32.totalorder %s983, 97
        %s985 = scalar_select %p984, %s983, 97
        %s986 = smul.addr %s985, 4
        %s987 = scalar_lea.vmem %s3, %s986
        %s988 = smul.u32 49, %s14
        %s989 = smul.u32 49, %s14
        %p990 = scmp.lt.s32.totalorder %s989, 97
        %s991 = scalar_select %p990, %s989, 97
        %s992 = smul.addr %s991, 4
        %s993 = scalar_lea.vmem %s3, %s992
        %s994 = smul.u32 49, %s14
        %v996 = vld [vmem:[%s1] sm:$0xf]
        %v997 = vld [vmem:[%s1 + $0x4] sm:$0xf]
        %v998 = vld [vmem:[%s1 + $0x8] sm:$0xf]
        %v999 = vld [vmem:[%s1 + $0xc] sm:$0xf]
        %v1000 = vld [vmem:[%s1 + $0x10] sm:$0xf]
        %v1001 = vld [vmem:[%s1 + $0x14] sm:$0xf]
        %v1002 = vld [vmem:[%s1 + $0x18] sm:$0xf]
        %v1003 = vld [vmem:[%s1 + $0x1c] sm:$0xf]
        %v1004 = vld [vmem:[%s1 + $0x20] sm:$0xf]
        %v1005 = vld [vmem:[%s1 + $0x24] sm:$0xf]
        %v1006 = vld [vmem:[%s1 + $0x28] sm:$0xf]
        %v1007 = vld [vmem:[%s1 + $0x2c] sm:$0xf]
        %v1008 = vld [vmem:[%s1 + $0x30] sm:$0xf]
        %v1009 = vld [vmem:[%s1 + $0x34] sm:$0xf]
        %v1010 = vld [vmem:[%s1 + $0x38] sm:$0xf]
        %v1011 = vld [vmem:[%s1 + $0x3c] sm:$0xf]
        %v1012 = vld [vmem:[%s967] sm:$0xf]
        %v1013 = vld [vmem:[%s967 + $0x4] sm:$0xf]
        %v1014 = vld [vmem:[%s967 + $0x8] sm:$0xf]
        %v1015 = vld [vmem:[%s967 + $0xc] sm:$0xf]
        %v1016 = vld [vmem:[%s967 + $0x10] sm:$0xf]
        %v1017 = vld [vmem:[%s967 + $0x14] sm:$0xf]
        %v1018 = vld [vmem:[%s967 + $0x18] sm:$0xf]
        %v1019 = vld [vmem:[%s967 + $0x1c] sm:$0xf]
        %v1020 = vld [vmem:[%s967 + $0x20] sm:$0xf]
        %v1021 = vld [vmem:[%s967 + $0x24] sm:$0xf]
        %v1022 = vld [vmem:[%s967 + $0x28] sm:$0xf]
        %v1023 = vld [vmem:[%s967 + $0x2c] sm:$0xf]
        %v1024 = vld [vmem:[%s967 + $0x30] sm:$0xf]
        %v1025 = vld [vmem:[%s967 + $0x34] sm:$0xf]
        %v1026 = vld [vmem:[%s967 + $0x38] sm:$0xf]
        %v1027 = vld [vmem:[%s967 + $0x3c] sm:$0xf]
        %v1028 = vld [vmem:[%s967 + $0x40] sm:$0xf]
        %v1029 = vld [vmem:[%s967 + $0x44] sm:$0xf]
        %v1030 = vld [vmem:[%s967 + $0x48] sm:$0xf]
        %v1031 = vld [vmem:[%s967 + $0x4c] sm:$0xf]
        %v1032 = vld [vmem:[%s967 + $0x50] sm:$0xf]
        %v1033 = vld [vmem:[%s967 + $0x54] sm:$0xf]
        %v1034 = vld [vmem:[%s967 + $0x58] sm:$0xf]
        %v1035 = vld [vmem:[%s967 + $0x5c] sm:$0xf]
        %v1036 = vld [vmem:[%s967 + $0x60] sm:$0xf]
        %v1037 = vld [vmem:[%s967 + $0x64] sm:$0xf]
        %v1038 = vld [vmem:[%s967 + $0x68] sm:$0xf]
        %v1039 = vld [vmem:[%s967 + $0x6c] sm:$0xf]
        %v1040 = vld [vmem:[%s967 + $0x70] sm:$0xf]
        %v1041 = vld [vmem:[%s967 + $0x74] sm:$0xf]
        %v1042 = vld [vmem:[%s967 + $0x78] sm:$0xf]
        %v1043 = vld [vmem:[%s967 + $0x7c] sm:$0xf]
        %v1044 = vld [vmem:[%s967 + $0x80] sm:$0xf]
        %v1045 = vld [vmem:[%s967 + $0x84] sm:$0xf]
        %v1046 = vld [vmem:[%s967 + $0x88] sm:$0xf]
        %v1047 = vld [vmem:[%s967 + $0x8c] sm:$0xf]
        %v1048 = vld [vmem:[%s967 + $0x90] sm:$0xf]
        %v1049 = vld [vmem:[%s967 + $0x94] sm:$0xf]
        %v1050 = vld [vmem:[%s967 + $0x98] sm:$0xf]
        %v1051 = vld [vmem:[%s967 + $0x9c] sm:$0xf]
        %v1052 = vld [vmem:[%s967 + $0xa0] sm:$0xf]
        %v1053 = vld [vmem:[%s967 + $0xa4] sm:$0xf]
        %v1054 = vld [vmem:[%s967 + $0xa8] sm:$0xf]
        %v1055 = vld [vmem:[%s967 + $0xac] sm:$0xf]
        %v1056 = vld [vmem:[%s967 + $0xb0] sm:$0xf]
        %v1057 = vld [vmem:[%s967 + $0xb4] sm:$0xf]
        %v1058 = vld [vmem:[%s967 + $0xb8] sm:$0xf]
        %v1059 = vld [vmem:[%s967 + $0xbc] sm:$0xf]
        %v1060 = vld [vmem:[%s967 + $0xc0] sm:$0xf]
        %v1110 = vunpack.c.l.b16 %v1012
        %v1111 = vunpack.c.l.b16 %v1013
        %v1112 = vunpack.c.l.b16 %v1014
        %v1113 = vunpack.c.l.b16 %v1015
        %v1114 = vunpack.c.l.b16 %v1016
        %v1115 = vunpack.c.l.b16 %v1017
        %v1116 = vunpack.c.l.b16 %v1018
        %v1117 = vunpack.c.l.b16 %v1019
        %v1118 = vunpack.c.l.b16 %v1020
        %v1119 = vunpack.c.l.b16 %v1021
        %v1120 = vunpack.c.l.b16 %v1022
        %v1121 = vunpack.c.l.b16 %v1023
        %v1122 = vunpack.c.l.b16 %v1024
        %v1123 = vunpack.c.l.b16 %v1025
        %v1124 = vunpack.c.l.b16 %v1026
        %v1125 = vunpack.c.l.b16 %v1027
        %v1126 = vunpack.c.l.b16 %v1028
        %v1127 = vunpack.c.l.b16 %v1029
        %v1128 = vunpack.c.l.b16 %v1030
        %v1129 = vunpack.c.l.b16 %v1031
        %v1130 = vunpack.c.l.b16 %v1032
        %v1131 = vunpack.c.l.b16 %v1033
        %v1132 = vunpack.c.l.b16 %v1034
        %v1133 = vunpack.c.l.b16 %v1035
        %v1134 = vunpack.c.l.b16 %v1036
        %v1135 = vunpack.c.l.b16 %v1037
        %v1136 = vunpack.c.l.b16 %v1038
        %v1137 = vunpack.c.l.b16 %v1039
        %v1138 = vunpack.c.l.b16 %v1040
        %v1139 = vunpack.c.l.b16 %v1041
        %v1140 = vunpack.c.l.b16 %v1042
        %v1141 = vunpack.c.l.b16 %v1043
        %v1142 = vunpack.c.l.b16 %v1044
        %v1143 = vunpack.c.l.b16 %v1045
        %v1144 = vunpack.c.l.b16 %v1046
        %v1145 = vunpack.c.l.b16 %v1047
        %v1146 = vunpack.c.l.b16 %v1048
        %v1147 = vunpack.c.l.b16 %v1049
        %v1148 = vunpack.c.l.b16 %v1050
        %v1149 = vunpack.c.l.b16 %v1051
        %v1150 = vunpack.c.l.b16 %v1052
        %v1151 = vunpack.c.l.b16 %v1053
        %v1152 = vunpack.c.l.b16 %v1054
        %v1153 = vunpack.c.l.b16 %v1055
        %v1154 = vunpack.c.l.b16 %v1056
        %v1155 = vunpack.c.l.b16 %v1057
        %v1156 = vunpack.c.l.b16 %v1058
        %v1157 = vunpack.c.l.b16 %v1059
        %v1158 = vunpack.c.l.b16 %v1060
        %v1159 = vpack.c.b16 %v1111, %v1110
        %v1160 = vpack.c.b16 %v1113, %v1112
        %v1161 = vpack.c.b16 %v1115, %v1114
        %v1162 = vpack.c.b16 %v1117, %v1116
        %v1163 = vpack.c.b16 %v1119, %v1118
        %v1164 = vpack.c.b16 %v1121, %v1120
        %v1165 = vpack.c.b16 %v1123, %v1122
        %v1166 = vpack.c.b16 %v1125, %v1124
        %v1167 = vpack.c.b16 %v1127, %v1126
        %v1168 = vpack.c.b16 %v1129, %v1128
        %v1169 = vpack.c.b16 %v1131, %v1130
        %v1170 = vpack.c.b16 %v1133, %v1132
        %v1171 = vpack.c.b16 %v1135, %v1134
        %v1172 = vpack.c.b16 %v1137, %v1136
        %v1173 = vpack.c.b16 %v1139, %v1138
        %v1174 = vpack.c.b16 %v1141, %v1140
        %v1175 = vpack.c.b16 %v1143, %v1142
        %v1176 = vpack.c.b16 %v1145, %v1144
        %v1177 = vpack.c.b16 %v1147, %v1146
        %v1178 = vpack.c.b16 %v1149, %v1148
        %v1179 = vpack.c.b16 %v1151, %v1150
        %v1180 = vpack.c.b16 %v1153, %v1152
        %v1181 = vpack.c.b16 %v1155, %v1154
        %v1182 = vpack.c.b16 %v1157, %v1156
        %v1183 = vpack.c.b16 %v1158, %v1158
        %v1225 = vunpack.c.l.b16 %v996
        %v1226 = vunpack.c.l.b16 %v997
        %v1227 = vunpack.c.l.b16 %v998
        %v1228 = vunpack.c.l.b16 %v999
        %v1229 = vunpack.c.l.b16 %v1000
        %v1230 = vunpack.c.l.b16 %v1001
        %v1231 = vunpack.c.l.b16 %v1002
        %v1232 = vunpack.c.l.b16 %v1003
        %v1233 = vunpack.c.l.b16 %v1004
        %v1234 = vunpack.c.l.b16 %v1005
        %v1235 = vunpack.c.l.b16 %v1006
        %v1236 = vunpack.c.l.b16 %v1007
        %v1237 = vunpack.c.l.b16 %v1008
        %v1238 = vunpack.c.l.b16 %v1009
        %v1239 = vunpack.c.l.b16 %v1010
        %v1240 = vunpack.c.l.b16 %v1011
        %v1241 = vpack.c.b16 %v1226, %v1225
        %v1242 = vpack.c.b16 %v1228, %v1227
        %v1243 = vpack.c.b16 %v1230, %v1229
        %v1244 = vpack.c.b16 %v1232, %v1231
        %v1245 = vpack.c.b16 %v1234, %v1233
        %v1246 = vpack.c.b16 %v1236, %v1235
        %v1247 = vpack.c.b16 %v1238, %v1237
        %v1248 = vpack.c.b16 %v1240, %v1239
        %1257 = vmatprep.subr.bf16.mxu0 0
        %1258 = vmatpush1.bf16.msra.mxu0 %v1241
        %1259 = vmatprep.subr.bf16.mxu0 0
        %1260 = vmatpush1.bf16.msra.mxu0 %v1242
        %1261 = vmatprep.subr.bf16.mxu0 0
        %1262 = vmatpush1.bf16.msra.mxu0 %v1243
        %1263 = vmatprep.subr.bf16.mxu0 0
        %1264 = vmatpush1.bf16.msra.mxu0 %v1244
        %1265 = vmatprep.subr.bf16.mxu0 0
        %1266 = vmatpush1.bf16.msra.mxu0 %v1245
        %1267 = vmatprep.subr.bf16.mxu0 0
        %1268 = vmatpush1.bf16.msra.mxu0 %v1246
        %1269 = vmatprep.subr.bf16.mxu0 0
        %1270 = vmatpush1.bf16.msra.mxu0 %v1247
        %1271 = vmatprep.subr.bf16.mxu0 0
        %1272 = vmatpush1.bf16.msra.mxu0 %v1248
        %1273 = vmatprep.subr.bf16.mxu0 0
        %1274 = vmatpush1.bf16.msra.mxu0 0
        %1275 = vmatprep.subr.bf16.mxu0 0
        %1276 = vmatpush1.bf16.msra.mxu0 0
        %1277 = vmatprep.subr.bf16.mxu0 0
        %1278 = vmatpush1.bf16.msra.mxu0 0
        %1279 = vmatprep.subr.bf16.mxu0 0
        %1280 = vmatpush1.bf16.msra.mxu0 0
        %1281 = vmatprep.subr.bf16.mxu0 0
        %1282 = vmatpush1.bf16.msra.mxu0 0
        %1283 = vmatprep.subr.bf16.mxu0 0
        %1284 = vmatpush1.bf16.msra.mxu0 0
        %1285 = vmatprep.subr.bf16.mxu0 0
        %1286 = vmatpush1.bf16.msra.mxu0 0
        %1287 = vmatprep.subr.bf16.mxu0 0
        %1288 = vmatpush1.bf16.msra.mxu0 0
        %1289 = vmatprep.mubr.bf16.mxu0 0
        %1290 = vmatmul.mubr.bf16.gmra.mrb[0].mxu0 %v1159
        %v1291 = vpop.f32.mrb[0].mxu0
        %v1292 = vadd.f32 0.0, %v1291
        %v1293 = vpop.f32.mrb[0].mxu0
        %v1294 = vpop.f32.mrb[0].mxu0
        %v1295 = vadd.f32 0.0, %v1294
        %v1296 = vpop.f32.mrb[0].mxu0
        %1297 = vmatprep.mubr.bf16.mxu0 0
        %1298 = vmatmul.mubr.bf16.gmra.mrb[0].mxu0 %v1160
        %v1299 = vpop.f32.mrb[0].mxu0
        %v1300 = vadd.f32 0.0, %v1299
        %v1301 = vpop.f32.mrb[0].mxu0
        %v1302 = vpop.f32.mrb[0].mxu0
        %v1303 = vadd.f32 0.0, %v1302
        %v1304 = vpop.f32.mrb[0].mxu0
        %1305 = vmatprep.mubr.bf16.mxu0 0
        %1306 = vmatmul.mubr.bf16.gmra.mrb[0].mxu0 %v1161
        %v1307 = vpop.f32.mrb[0].mxu0
        %v1308 = vadd.f32 0.0, %v1307
        %v1309 = vpop.f32.mrb[0].mxu0
        %v1310 = vpop.f32.mrb[0].mxu0
        %v1311 = vadd.f32 0.0, %v1310
        %v1312 = vpop.f32.mrb[0].mxu0
        %1313 = vmatprep.mubr.bf16.mxu0 0
        %1314 = vmatmul.mubr.bf16.gmra.mrb[0].mxu0 %v1162
        %v1315 = vpop.f32.mrb[0].mxu0
        %v1316 = vadd.f32 0.0, %v1315
        %v1317 = vpop.f32.mrb[0].mxu0
        %v1318 = vpop.f32.mrb[0].mxu0
        %v1319 = vadd.f32 0.0, %v1318
        %v1320 = vpop.f32.mrb[0].mxu0
        %1321 = vmatprep.mubr.bf16.mxu0 0
        %1322 = vmatmul.mubr.bf16.gmra.mrb[0].mxu0 %v1163
        %v1323 = vpop.f32.mrb[0].mxu0
        %v1324 = vadd.f32 0.0, %v1323
        %v1325 = vpop.f32.mrb[0].mxu0
        %v1326 = vpop.f32.mrb[0].mxu0
        %v1327 = vadd.f32 0.0, %v1326
        %v1328 = vpop.f32.mrb[0].mxu0
        %1329 = vmatprep.mubr.bf16.mxu0 0
        %1330 = vmatmul.mubr.bf16.gmra.mrb[0].mxu0 %v1164
        %v1331 = vpop.f32.mrb[0].mxu0
        %v1332 = vadd.f32 0.0, %v1331
        %v1333 = vpop.f32.mrb[0].mxu0
        %v1334 = vpop.f32.mrb[0].mxu0
        %v1335 = vadd.f32 0.0, %v1334
        %v1336 = vpop.f32.mrb[0].mxu0
        %1337 = vmatprep.mubr.bf16.mxu0 0
        %1338 = vmatmul.mubr.bf16.gmra.mrb[0].mxu0 %v1165
        %v1339 = vpop.f32.mrb[0].mxu0
        %v1340 = vadd.f32 0.0, %v1339
        %v1341 = vpop.f32.mrb[0].mxu0
        %v1342 = vpop.f32.mrb[0].mxu0
        %v1343 = vadd.f32 0.0, %v1342
        %v1344 = vpop.f32.mrb[0].mxu0
        %1345 = vmatprep.mubr.bf16.mxu0 0
        %1346 = vmatmul.mubr.bf16.gmra.mrb[0].mxu0 %v1166
        %v1347 = vpop.f32.mrb[0].mxu0
        %v1348 = vadd.f32 0.0, %v1347
        %v1349 = vpop.f32.mrb[0].mxu0
        %v1350 = vpop.f32.mrb[0].mxu0
        %v1351 = vadd.f32 0.0, %v1350
        %v1352 = vpop.f32.mrb[0].mxu0
        %1353 = vmatprep.mubr.bf16.mxu0 0
        %1354 = vmatmul.mubr.bf16.gmra.mrb[0].mxu0 %v1167
        %v1355 = vpop.f32.mrb[0].mxu0
        %v1356 = vadd.f32 0.0, %v1355
        %v1357 = vpop.f32.mrb[0].mxu0
        %v1358 = vpop.f32.mrb[0].mxu0
        %v1359 = vadd.f32 0.0, %v1358
        %v1360 = vpop.f32.mrb[0].mxu0
        %1361 = vmatprep.mubr.bf16.mxu0 0
        %1362 = vmatmul.mubr.bf16.gmra.mrb[0].mxu0 %v1168
        %v1363 = vpop.f32.mrb[0].mxu0
        %v1364 = vadd.f32 0.0, %v1363
        %v1365 = vpop.f32.mrb[0].mxu0
        %v1366 = vpop.f32.mrb[0].mxu0
        %v1367 = vadd.f32 0.0, %v1366
        %v1368 = vpop.f32.mrb[0].mxu0
        %1369 = vmatprep.mubr.bf16.mxu0 0
        %1370 = vmatmul.mubr.bf16.gmra.mrb[0].mxu0 %v1169
        %v1371 = vpop.f32.mrb[0].mxu0
        %v1372 = vadd.f32 0.0, %v1371
        %v1373 = vpop.f32.mrb[0].mxu0
        %v1374 = vpop.f32.mrb[0].mxu0
        %v1375 = vadd.f32 0.0, %v1374
        %v1376 = vpop.f32.mrb[0].mxu0
        %1377 = vmatprep.mubr.bf16.mxu0 0
        %1378 = vmatmul.mubr.bf16.gmra.mrb[0].mxu0 %v1170
        %v1379 = vpop.f32.mrb[0].mxu0
        %v1380 = vadd.f32 0.0, %v1379
        %v1381 = vpop.f32.mrb[0].mxu0
        %v1382 = vpop.f32.mrb[0].mxu0
        %v1383 = vadd.f32 0.0, %v1382
        %v1384 = vpop.f32.mrb[0].mxu0
        %1385 = vmatprep.mubr.bf16.mxu0 0
        %1386 = vmatmul.mubr.bf16.gmra.mrb[0].mxu0 %v1171
        %v1387 = vpop.f32.mrb[0].mxu0
        %v1388 = vadd.f32 0.0, %v1387
        %v1389 = vpop.f32.mrb[0].mxu0
        %v1390 = vpop.f32.mrb[0].mxu0
        %v1391 = vadd.f32 0.0, %v1390
        %v1392 = vpop.f32.mrb[0].mxu0
        %1393 = vmatprep.mubr.bf16.mxu0 0
        %1394 = vmatmul.mubr.bf16.gmra.mrb[0].mxu0 %v1172
        %v1395 = vpop.f32.mrb[0].mxu0
        %v1396 = vadd.f32 0.0, %v1395
        %v1397 = vpop.f32.mrb[0].mxu0
        %v1398 = vpop.f32.mrb[0].mxu0
        %v1399 = vadd.f32 0.0, %v1398
        %v1400 = vpop.f32.mrb[0].mxu0
        %1401 = vmatprep.mubr.bf16.mxu0 0
        %1402 = vmatmul.mubr.bf16.gmra.mrb[0].mxu0 %v1173
        %v1403 = vpop.f32.mrb[0].mxu0
        %v1404 = vadd.f32 0.0, %v1403
        %v1405 = vpop.f32.mrb[0].mxu0
        %v1406 = vpop.f32.mrb[0].mxu0
        %v1407 = vadd.f32 0.0, %v1406
        %v1408 = vpop.f32.mrb[0].mxu0
        %1409 = vmatprep.mubr.bf16.mxu0 0
        %1410 = vmatmul.mubr.bf16.gmra.mrb[0].mxu0 %v1174
        %v1411 = vpop.f32.mrb[0].mxu0
        %v1412 = vadd.f32 0.0, %v1411
        %v1413 = vpop.f32.mrb[0].mxu0
        %v1414 = vpop.f32.mrb[0].mxu0
        %v1415 = vadd.f32 0.0, %v1414
        %v1416 = vpop.f32.mrb[0].mxu0
        %1417 = vmatprep.mubr.bf16.mxu0 0
        %1418 = vmatmul.mubr.bf16.gmra.mrb[0].mxu0 %v1175
        %v1419 = vpop.f32.mrb[0].mxu0
        %v1420 = vadd.f32 0.0, %v1419
        %v1421 = vpop.f32.mrb[0].mxu0
        %v1422 = vpop.f32.mrb[0].mxu0
        %v1423 = vadd.f32 0.0, %v1422
        %v1424 = vpop.f32.mrb[0].mxu0
        %1425 = vmatprep.mubr.bf16.mxu0 0
        %1426 = vmatmul.mubr.bf16.gmra.mrb[0].mxu0 %v1176
        %v1427 = vpop.f32.mrb[0].mxu0
        %v1428 = vadd.f32 0.0, %v1427
        %v1429 = vpop.f32.mrb[0].mxu0
        %v1430 = vpop.f32.mrb[0].mxu0
        %v1431 = vadd.f32 0.0, %v1430
        %v1432 = vpop.f32.mrb[0].mxu0
        %1433 = vmatprep.mubr.bf16.mxu0 0
        %1434 = vmatmul.mubr.bf16.gmra.mrb[0].mxu0 %v1177
        %v1435 = vpop.f32.mrb[0].mxu0
        %v1436 = vadd.f32 0.0, %v1435
        %v1437 = vpop.f32.mrb[0].mxu0
        %v1438 = vpop.f32.mrb[0].mxu0
        %v1439 = vadd.f32 0.0, %v1438
        %v1440 = vpop.f32.mrb[0].mxu0
        %1441 = vmatprep.mubr.bf16.mxu0 0
        %1442 = vmatmul.mubr.bf16.gmra.mrb[0].mxu0 %v1178
        %v1443 = vpop.f32.mrb[0].mxu0
        %v1444 = vadd.f32 0.0, %v1443
        %v1445 = vpop.f32.mrb[0].mxu0
        %v1446 = vpop.f32.mrb[0].mxu0
        %v1447 = vadd.f32 0.0, %v1446
        %v1448 = vpop.f32.mrb[0].mxu0
        %1449 = vmatprep.mubr.bf16.mxu0 0
        %1450 = vmatmul.mubr.bf16.gmra.mrb[0].mxu0 %v1179
        %v1451 = vpop.f32.mrb[0].mxu0
        %v1452 = vadd.f32 0.0, %v1451
        %v1453 = vpop.f32.mrb[0].mxu0
        %v1454 = vpop.f32.mrb[0].mxu0
        %v1455 = vadd.f32 0.0, %v1454
        %v1456 = vpop.f32.mrb[0].mxu0
        %1457 = vmatprep.mubr.bf16.mxu0 0
        %1458 = vmatmul.mubr.bf16.gmra.mrb[0].mxu0 %v1180
        %v1459 = vpop.f32.mrb[0].mxu0
        %v1460 = vadd.f32 0.0, %v1459
        %v1461 = vpop.f32.mrb[0].mxu0
        %v1462 = vpop.f32.mrb[0].mxu0
        %v1463 = vadd.f32 0.0, %v1462
        %v1464 = vpop.f32.mrb[0].mxu0
        %1465 = vmatprep.mubr.bf16.mxu0 0
        %1466 = vmatmul.mubr.bf16.gmra.mrb[0].mxu0 %v1181
        %v1467 = vpop.f32.mrb[0].mxu0
        %v1468 = vadd.f32 0.0, %v1467
        %v1469 = vpop.f32.mrb[0].mxu0
        %v1470 = vpop.f32.mrb[0].mxu0
        %v1471 = vadd.f32 0.0, %v1470
        %v1472 = vpop.f32.mrb[0].mxu0
        %1473 = vmatprep.mubr.bf16.mxu0 0
        %1474 = vmatmul.mubr.bf16.gmra.mrb[0].mxu0 %v1182
        %v1475 = vpop.f32.mrb[0].mxu0
        %v1476 = vadd.f32 0.0, %v1475
        %v1477 = vpop.f32.mrb[0].mxu0
        %v1478 = vpop.f32.mrb[0].mxu0
        %v1479 = vadd.f32 0.0, %v1478
        %v1480 = vpop.f32.mrb[0].mxu0
        %1481 = vmatprep.mubr.bf16.mxu0 0
        %1482 = vmatmul.mubr.bf16.gmra.mrb[0].mxu0 %v1183
        %v1483 = vpop.f32.mrb[0].mxu0
        %v1484 = vadd.f32 0.0, %v1483
        %v1485 = vpop.f32.mrb[0].mxu0
        %v1486 = vpop.f32.mrb[0].mxu0
        %v1487 = vpop.f32.mrb[0].mxu0
        %1488 = vdwg.mxu0
        %s1489 = scalar_lea.vmem %s967, 196 [#allocation2]
        %v1490 = vld [vmem:[%s1489] sm:$0xf]
        %v1491 = vld [vmem:[%s1489 + $0x4] sm:$0xf]
        %v1492 = vld [vmem:[%s1489 + $0x8] sm:$0xf]
        %v1493 = vld [vmem:[%s1489 + $0xc] sm:$0xf]
        %v1494 = vld [vmem:[%s1489 + $0x10] sm:$0xf]
        %v1495 = vld [vmem:[%s1489 + $0x14] sm:$0xf]
        %v1496 = vld [vmem:[%s1489 + $0x18] sm:$0xf]
        %v1497 = vld [vmem:[%s1489 + $0x1c] sm:$0xf]
        %v1498 = vld [vmem:[%s1489 + $0x20] sm:$0xf]
        %v1499 = vld [vmem:[%s1489 + $0x24] sm:$0xf]
        %v1500 = vld [vmem:[%s1489 + $0x28] sm:$0xf]
        %v1501 = vld [vmem:[%s1489 + $0x2c] sm:$0xf]
        %v1502 = vld [vmem:[%s1489 + $0x30] sm:$0xf]
        %v1503 = vld [vmem:[%s1489 + $0x34] sm:$0xf]
        %v1504 = vld [vmem:[%s1489 + $0x38] sm:$0xf]
        %v1505 = vld [vmem:[%s1489 + $0x3c] sm:$0xf]
        %v1506 = vld [vmem:[%s1489 + $0x40] sm:$0xf]
        %v1507 = vld [vmem:[%s1489 + $0x44] sm:$0xf]
        %v1508 = vld [vmem:[%s1489 + $0x48] sm:$0xf]
        %v1509 = vld [vmem:[%s1489 + $0x4c] sm:$0xf]
        %v1510 = vld [vmem:[%s1489 + $0x50] sm:$0xf]
        %v1511 = vld [vmem:[%s1489 + $0x54] sm:$0xf]
        %v1512 = vld [vmem:[%s1489 + $0x58] sm:$0xf]
        %v1513 = vld [vmem:[%s1489 + $0x5c] sm:$0xf]
        %v1514 = vld [vmem:[%s1489 + $0x60] sm:$0xf]
        %v1515 = vld [vmem:[%s1489 + $0x64] sm:$0xf]
        %v1516 = vld [vmem:[%s1489 + $0x68] sm:$0xf]
        %v1517 = vld [vmem:[%s1489 + $0x6c] sm:$0xf]
        %v1518 = vld [vmem:[%s1489 + $0x70] sm:$0xf]
        %v1519 = vld [vmem:[%s1489 + $0x74] sm:$0xf]
        %v1520 = vld [vmem:[%s1489 + $0x78] sm:$0xf]
        %v1521 = vld [vmem:[%s1489 + $0x7c] sm:$0xf]
        %v1522 = vld [vmem:[%s1489 + $0x80] sm:$0xf]
        %v1523 = vld [vmem:[%s1489 + $0x84] sm:$0xf]
        %v1524 = vld [vmem:[%s1489 + $0x88] sm:$0xf]
        %v1525 = vld [vmem:[%s1489 + $0x8c] sm:$0xf]
        %v1526 = vld [vmem:[%s1489 + $0x90] sm:$0xf]
        %v1527 = vld [vmem:[%s1489 + $0x94] sm:$0xf]
        %v1528 = vld [vmem:[%s1489 + $0x98] sm:$0xf]
        %v1529 = vld [vmem:[%s1489 + $0x9c] sm:$0xf]
        %v1530 = vld [vmem:[%s1489 + $0xa0] sm:$0xf]
        %v1531 = vld [vmem:[%s1489 + $0xa4] sm:$0xf]
        %v1532 = vld [vmem:[%s1489 + $0xa8] sm:$0xf]
        %v1533 = vld [vmem:[%s1489 + $0xac] sm:$0xf]
        %v1534 = vld [vmem:[%s1489 + $0xb0] sm:$0xf]
        %v1535 = vld [vmem:[%s1489 + $0xb4] sm:$0xf]
        %v1536 = vld [vmem:[%s1489 + $0xb8] sm:$0xf]
        %v1537 = vld [vmem:[%s1489 + $0xbc] sm:$0xf]
        %v1538 = vld [vmem:[%s1489 + $0xc0] sm:$0xf]
        %v1588 = vunpack.c.l.b16 %v1490
        %v1589 = vunpack.c.l.b16 %v1491
        %v1590 = vunpack.c.l.b16 %v1492
        %v1591 = vunpack.c.l.b16 %v1493
        %v1592 = vunpack.c.l.b16 %v1494
        %v1593 = vunpack.c.l.b16 %v1495
        %v1594 = vunpack.c.l.b16 %v1496
        %v1595 = vunpack.c.l.b16 %v1497
        %v1596 = vunpack.c.l.b16 %v1498
        %v1597 = vunpack.c.l.b16 %v1499
        %v1598 = vunpack.c.l.b16 %v1500
        %v1599 = vunpack.c.l.b16 %v1501
        %v1600 = vunpack.c.l.b16 %v1502
        %v1601 = vunpack.c.l.b16 %v1503
        %v1602 = vunpack.c.l.b16 %v1504
        %v1603 = vunpack.c.l.b16 %v1505
        %v1604 = vunpack.c.l.b16 %v1506
        %v1605 = vunpack.c.l.b16 %v1507
        %v1606 = vunpack.c.l.b16 %v1508
        %v1607 = vunpack.c.l.b16 %v1509
        %v1608 = vunpack.c.l.b16 %v1510
        %v1609 = vunpack.c.l.b16 %v1511
        %v1610 = vunpack.c.l.b16 %v1512
        %v1611 = vunpack.c.l.b16 %v1513
        %v1612 = vunpack.c.l.b16 %v1514
        %v1613 = vunpack.c.l.b16 %v1515
        %v1614 = vunpack.c.l.b16 %v1516
        %v1615 = vunpack.c.l.b16 %v1517
        %v1616 = vunpack.c.l.b16 %v1518
        %v1617 = vunpack.c.l.b16 %v1519
        %v1618 = vunpack.c.l.b16 %v1520
        %v1619 = vunpack.c.l.b16 %v1521
        %v1620 = vunpack.c.l.b16 %v1522
        %v1621 = vunpack.c.l.b16 %v1523
        %v1622 = vunpack.c.l.b16 %v1524
        %v1623 = vunpack.c.l.b16 %v1525
        %v1624 = vunpack.c.l.b16 %v1526
        %v1625 = vunpack.c.l.b16 %v1527
        %v1626 = vunpack.c.l.b16 %v1528
        %v1627 = vunpack.c.l.b16 %v1529
        %v1628 = vunpack.c.l.b16 %v1530
        %v1629 = vunpack.c.l.b16 %v1531
        %v1630 = vunpack.c.l.b16 %v1532
        %v1631 = vunpack.c.l.b16 %v1533
        %v1632 = vunpack.c.l.b16 %v1534
        %v1633 = vunpack.c.l.b16 %v1535
        %v1634 = vunpack.c.l.b16 %v1536
        %v1635 = vunpack.c.l.b16 %v1537
        %v1636 = vunpack.c.l.b16 %v1538
        %v1637 = vpack.c.b16 %v1589, %v1588
        %v1638 = vpack.c.b16 %v1591, %v1590
        %v1639 = vpack.c.b16 %v1593, %v1592
        %v1640 = vpack.c.b16 %v1595, %v1594
        %v1641 = vpack.c.b16 %v1597, %v1596
        %v1642 = vpack.c.b16 %v1599, %v1598
        %v1643 = vpack.c.b16 %v1601, %v1600
        %v1644 = vpack.c.b16 %v1603, %v1602
        %v1645 = vpack.c.b16 %v1605, %v1604
        %v1646 = vpack.c.b16 %v1607, %v1606
        %v1647 = vpack.c.b16 %v1609, %v1608
        %v1648 = vpack.c.b16 %v1611, %v1610
        %v1649 = vpack.c.b16 %v1613, %v1612
        %v1650 = vpack.c.b16 %v1615, %v1614
        %v1651 = vpack.c.b16 %v1617, %v1616
        %v1652 = vpack.c.b16 %v1619, %v1618
        %v1653 = vpack.c.b16 %v1621, %v1620
        %v1654 = vpack.c.b16 %v1623, %v1622
        %v1655 = vpack.c.b16 %v1625, %v1624
        %v1656 = vpack.c.b16 %v1627, %v1626
        %v1657 = vpack.c.b16 %v1629, %v1628
        %v1658 = vpack.c.b16 %v1631, %v1630
        %v1659 = vpack.c.b16 %v1633, %v1632
        %v1660 = vpack.c.b16 %v1635, %v1634
        %v1661 = vpack.c.b16 %v1636, %v1636
        %1687 = vmatprep.subr.bf16.mxu0 0
        %1688 = vmatpush1.bf16.msra.mxu0 %v1241
        %1689 = vmatprep.subr.bf16.mxu0 0
        %1690 = vmatpush1.bf16.msra.mxu0 %v1242
        %1691 = vmatprep.subr.bf16.mxu0 0
        %1692 = vmatpush1.bf16.msra.mxu0 %v1243
        %1693 = vmatprep.subr.bf16.mxu0 0
        %1694 = vmatpush1.bf16.msra.mxu0 %v1244
        %1695 = vmatprep.subr.bf16.mxu0 0
        %1696 = vmatpush1.bf16.msra.mxu0 %v1245
        %1697 = vmatprep.subr.bf16.mxu0 0
        %1698 = vmatpush1.bf16.msra.mxu0 %v1246
        %1699 = vmatprep.subr.bf16.mxu0 0
        %1700 = vmatpush1.bf16.msra.mxu0 %v1247
        %1701 = vmatprep.subr.bf16.mxu0 0
        %1702 = vmatpush1.bf16.msra.mxu0 %v1248
        %1703 = vmatprep.subr.bf16.mxu0 0
        %1704 = vmatpush1.bf16.msra.mxu0 0
        %1705 = vmatprep.subr.bf16.mxu0 0
        %1706 = vmatpush1.bf16.msra.mxu0 0
        %1707 = vmatprep.subr.bf16.mxu0 0
        %1708 = vmatpush1.bf16.msra.mxu0 0
        %1709 = vmatprep.subr.bf16.mxu0 0
        %1710 = vmatpush1.bf16.msra.mxu0 0
        %1711 = vmatprep.subr.bf16.mxu0 0
        %1712 = vmatpush1.bf16.msra.mxu0 0
        %1713 = vmatprep.subr.bf16.mxu0 0
        %1714 = vmatpush1.bf16.msra.mxu0 0
        %1715 = vmatprep.subr.bf16.mxu0 0
        %1716 = vmatpush1.bf16.msra.mxu0 0
        %1717 = vmatprep.subr.bf16.mxu0 0
        %1718 = vmatpush1.bf16.msra.mxu0 0
        %1719 = vmatprep.mubr.bf16.mxu0 0
        %1720 = vmatmul.mubr.bf16.gmra.mrb[0].mxu0 %v1637
        %v1721 = vpop.f32.mrb[0].mxu0
        %v1722 = vadd.f32 0.0, %v1721
        %v1723 = vpop.f32.mrb[0].mxu0
        %v1724 = vpop.f32.mrb[0].mxu0
        %v1725 = vadd.f32 0.0, %v1724
        %v1726 = vpop.f32.mrb[0].mxu0
        %1727 = vmatprep.mubr.bf16.mxu0 0
        %1728 = vmatmul.mubr.bf16.gmra.mrb[0].mxu0 %v1638
        %v1729 = vpop.f32.mrb[0].mxu0
        %v1730 = vadd.f32 0.0, %v1729
        %v1731 = vpop.f32.mrb[0].mxu0
        %v1732 = vpop.f32.mrb[0].mxu0
        %v1733 = vadd.f32 0.0, %v1732
        %v1734 = vpop.f32.mrb[0].mxu0
        %1735 = vmatprep.mubr.bf16.mxu0 0
        %1736 = vmatmul.mubr.bf16.gmra.mrb[0].mxu0 %v1639
        %v1737 = vpop.f32.mrb[0].mxu0
        %v1738 = vadd.f32 0.0, %v1737
        %v1739 = vpop.f32.mrb[0].mxu0
        %v1740 = vpop.f32.mrb[0].mxu0
        %v1741 = vadd.f32 0.0, %v1740
        %v1742 = vpop.f32.mrb[0].mxu0
        %1743 = vmatprep.mubr.bf16.mxu0 0
        %1744 = vmatmul.mubr.bf16.gmra.mrb[0].mxu0 %v1640
        %v1745 = vpop.f32.mrb[0].mxu0
        %v1746 = vadd.f32 0.0, %v1745
        %v1747 = vpop.f32.mrb[0].mxu0
        %v1748 = vpop.f32.mrb[0].mxu0
        %v1749 = vadd.f32 0.0, %v1748
        %v1750 = vpop.f32.mrb[0].mxu0
        %1751 = vmatprep.mubr.bf16.mxu0 0
        %1752 = vmatmul.mubr.bf16.gmra.mrb[0].mxu0 %v1641
        %v1753 = vpop.f32.mrb[0].mxu0
        %v1754 = vadd.f32 0.0, %v1753
        %v1755 = vpop.f32.mrb[0].mxu0
        %v1756 = vpop.f32.mrb[0].mxu0
        %v1757 = vadd.f32 0.0, %v1756
        %v1758 = vpop.f32.mrb[0].mxu0
        %1759 = vmatprep.mubr.bf16.mxu0 0
        %1760 = vmatmul.mubr.bf16.gmra.mrb[0].mxu0 %v1642
        %v1761 = vpop.f32.mrb[0].mxu0
        %v1762 = vadd.f32 0.0, %v1761
        %v1763 = vpop.f32.mrb[0].mxu0
        %v1764 = vpop.f32.mrb[0].mxu0
        %v1765 = vadd.f32 0.0, %v1764
        %v1766 = vpop.f32.mrb[0].mxu0
        %1767 = vmatprep.mubr.bf16.mxu0 0
        %1768 = vmatmul.mubr.bf16.gmra.mrb[0].mxu0 %v1643
        %v1769 = vpop.f32.mrb[0].mxu0
        %v1770 = vadd.f32 0.0, %v1769
        %v1771 = vpop.f32.mrb[0].mxu0
        %v1772 = vpop.f32.mrb[0].mxu0
        %v1773 = vadd.f32 0.0, %v1772
        %v1774 = vpop.f32.mrb[0].mxu0
        %1775 = vmatprep.mubr.bf16.mxu0 0
        %1776 = vmatmul.mubr.bf16.gmra.mrb[0].mxu0 %v1644
        %v1777 = vpop.f32.mrb[0].mxu0
        %v1778 = vadd.f32 0.0, %v1777
        %v1779 = vpop.f32.mrb[0].mxu0
        %v1780 = vpop.f32.mrb[0].mxu0
        %v1781 = vadd.f32 0.0, %v1780
        %v1782 = vpop.f32.mrb[0].mxu0
        %1783 = vmatprep.mubr.bf16.mxu0 0
        %1784 = vmatmul.mubr.bf16.gmra.mrb[0].mxu0 %v1645
        %v1785 = vpop.f32.mrb[0].mxu0
        %v1786 = vadd.f32 0.0, %v1785
        %v1787 = vpop.f32.mrb[0].mxu0
        %v1788 = vpop.f32.mrb[0].mxu0
        %v1789 = vadd.f32 0.0, %v1788
        %v1790 = vpop.f32.mrb[0].mxu0
        %1791 = vmatprep.mubr.bf16.mxu0 0
        %1792 = vmatmul.mubr.bf16.gmra.mrb[0].mxu0 %v1646
        %v1793 = vpop.f32.mrb[0].mxu0
        %v1794 = vadd.f32 0.0, %v1793
        %v1795 = vpop.f32.mrb[0].mxu0
        %v1796 = vpop.f32.mrb[0].mxu0
        %v1797 = vadd.f32 0.0, %v1796
        %v1798 = vpop.f32.mrb[0].mxu0
        %1799 = vmatprep.mubr.bf16.mxu0 0
        %1800 = vmatmul.mubr.bf16.gmra.mrb[0].mxu0 %v1647
        %v1801 = vpop.f32.mrb[0].mxu0
        %v1802 = vadd.f32 0.0, %v1801
        %v1803 = vpop.f32.mrb[0].mxu0
        %v1804 = vpop.f32.mrb[0].mxu0
        %v1805 = vadd.f32 0.0, %v1804
        %v1806 = vpop.f32.mrb[0].mxu0
        %1807 = vmatprep.mubr.bf16.mxu0 0
        %1808 = vmatmul.mubr.bf16.gmra.mrb[0].mxu0 %v1648
        %v1809 = vpop.f32.mrb[0].mxu0
        %v1810 = vadd.f32 0.0, %v1809
        %v1811 = vpop.f32.mrb[0].mxu0
        %v1812 = vpop.f32.mrb[0].mxu0
        %v1813 = vadd.f32 0.0, %v1812
        %v1814 = vpop.f32.mrb[0].mxu0
        %1815 = vmatprep.mubr.bf16.mxu0 0
        %1816 = vmatmul.mubr.bf16.gmra.mrb[0].mxu0 %v1649
        %v1817 = vpop.f32.mrb[0].mxu0
        %v1818 = vadd.f32 0.0, %v1817
        %v1819 = vpop.f32.mrb[0].mxu0
        %v1820 = vpop.f32.mrb[0].mxu0
        %v1821 = vadd.f32 0.0, %v1820
        %v1822 = vpop.f32.mrb[0].mxu0
        %1823 = vmatprep.mubr.bf16.mxu0 0
        %1824 = vmatmul.mubr.bf16.gmra.mrb[0].mxu0 %v1650
        %v1825 = vpop.f32.mrb[0].mxu0
        %v1826 = vadd.f32 0.0, %v1825
        %v1827 = vpop.f32.mrb[0].mxu0
        %v1828 = vpop.f32.mrb[0].mxu0
        %v1829 = vadd.f32 0.0, %v1828
        %v1830 = vpop.f32.mrb[0].mxu0
        %1831 = vmatprep.mubr.bf16.mxu0 0
        %1832 = vmatmul.mubr.bf16.gmra.mrb[0].mxu0 %v1651
        %v1833 = vpop.f32.mrb[0].mxu0
        %v1834 = vadd.f32 0.0, %v1833
        %v1835 = vpop.f32.mrb[0].mxu0
        %v1836 = vpop.f32.mrb[0].mxu0
        %v1837 = vadd.f32 0.0, %v1836
        %v1838 = vpop.f32.mrb[0].mxu0
        %1839 = vmatprep.mubr.bf16.mxu0 0
        %1840 = vmatmul.mubr.bf16.gmra.mrb[0].mxu0 %v1652
        %v1841 = vpop.f32.mrb[0].mxu0
        %v1842 = vadd.f32 0.0, %v1841
        %v1843 = vpop.f32.mrb[0].mxu0
        %v1844 = vpop.f32.mrb[0].mxu0
        %v1845 = vadd.f32 0.0, %v1844
        %v1846 = vpop.f32.mrb[0].mxu0
        %1847 = vmatprep.mubr.bf16.mxu0 0
        %1848 = vmatmul.mubr.bf16.gmra.mrb[0].mxu0 %v1653
        %v1849 = vpop.f32.mrb[0].mxu0
        %v1850 = vadd.f32 0.0, %v1849
        %v1851 = vpop.f32.mrb[0].mxu0
        %v1852 = vpop.f32.mrb[0].mxu0
        %v1853 = vadd.f32 0.0, %v1852
        %v1854 = vpop.f32.mrb[0].mxu0
        %1855 = vmatprep.mubr.bf16.mxu0 0
        %1856 = vmatmul.mubr.bf16.gmra.mrb[0].mxu0 %v1654
        %v1857 = vpop.f32.mrb[0].mxu0
        %v1858 = vadd.f32 0.0, %v1857
        %v1859 = vpop.f32.mrb[0].mxu0
        %v1860 = vpop.f32.mrb[0].mxu0
        %v1861 = vadd.f32 0.0, %v1860
        %v1862 = vpop.f32.mrb[0].mxu0
        %1863 = vmatprep.mubr.bf16.mxu0 0
        %1864 = vmatmul.mubr.bf16.gmra.mrb[0].mxu0 %v1655
        %v1865 = vpop.f32.mrb[0].mxu0
        %v1866 = vadd.f32 0.0, %v1865
        %v1867 = vpop.f32.mrb[0].mxu0
        %v1868 = vpop.f32.mrb[0].mxu0
        %v1869 = vadd.f32 0.0, %v1868
        %v1870 = vpop.f32.mrb[0].mxu0
        %1871 = vmatprep.mubr.bf16.mxu0 0
        %1872 = vmatmul.mubr.bf16.gmra.mrb[0].mxu0 %v1656
        %v1873 = vpop.f32.mrb[0].mxu0
        %v1874 = vadd.f32 0.0, %v1873
        %v1875 = vpop.f32.mrb[0].mxu0
        %v1876 = vpop.f32.mrb[0].mxu0
        %v1877 = vadd.f32 0.0, %v1876
        %v1878 = vpop.f32.mrb[0].mxu0
        %1879 = vmatprep.mubr.bf16.mxu0 0
        %1880 = vmatmul.mubr.bf16.gmra.mrb[0].mxu0 %v1657
        %v1881 = vpop.f32.mrb[0].mxu0
        %v1882 = vadd.f32 0.0, %v1881
        %v1883 = vpop.f32.mrb[0].mxu0
        %v1884 = vpop.f32.mrb[0].mxu0
        %v1885 = vadd.f32 0.0, %v1884
        %v1886 = vpop.f32.mrb[0].mxu0
        %1887 = vmatprep.mubr.bf16.mxu0 0
        %1888 = vmatmul.mubr.bf16.gmra.mrb[0].mxu0 %v1658
        %v1889 = vpop.f32.mrb[0].mxu0
        %v1890 = vadd.f32 0.0, %v1889
        %v1891 = vpop.f32.mrb[0].mxu0
        %v1892 = vpop.f32.mrb[0].mxu0
        %v1893 = vadd.f32 0.0, %v1892
        %v1894 = vpop.f32.mrb[0].mxu0
        %1895 = vmatprep.mubr.bf16.mxu0 0
        %1896 = vmatmul.mubr.bf16.gmra.mrb[0].mxu0 %v1659
        %v1897 = vpop.f32.mrb[0].mxu0
        %v1898 = vadd.f32 0.0, %v1897
        %v1899 = vpop.f32.mrb[0].mxu0
        %v1900 = vpop.f32.mrb[0].mxu0
        %v1901 = vadd.f32 0.0, %v1900
        %v1902 = vpop.f32.mrb[0].mxu0
        %1903 = vmatprep.mubr.bf16.mxu0 0
        %1904 = vmatmul.mubr.bf16.gmra.mrb[0].mxu0 %v1660
        %v1905 = vpop.f32.mrb[0].mxu0
        %v1906 = vadd.f32 0.0, %v1905
        %v1907 = vpop.f32.mrb[0].mxu0
        %v1908 = vpop.f32.mrb[0].mxu0
        %v1909 = vadd.f32 0.0, %v1908
        %v1910 = vpop.f32.mrb[0].mxu0
        %1911 = vmatprep.mubr.bf16.mxu0 0
        %1912 = vmatmul.mubr.bf16.gmra.mrb[0].mxu0 %v1661
        %v1913 = vpop.f32.mrb[0].mxu0
        %v1914 = vadd.f32 0.0, %v1913
        %v1915 = vpop.f32.mrb[0].mxu0
        %v1916 = vpop.f32.mrb[0].mxu0
        %v1917 = vpop.f32.mrb[0].mxu0
        %1918 = vdwg.mxu0
        %s1919 = scalar_lea.vmem %s967, 392 [#allocation2]
        %v1920 = vld [vmem:[%s1919] sm:$0xf]
        %v1921 = vld [vmem:[%s1919 + $0x4] sm:$0xf]
        %v1922 = vld [vmem:[%s1919 + $0x8] sm:$0xf]
        %v1923 = vld [vmem:[%s1919 + $0xc] sm:$0xf]
        %v1924 = vld [vmem:[%s1919 + $0x10] sm:$0xf]
        %v1925 = vld [vmem:[%s1919 + $0x14] sm:$0xf]
        %v1926 = vld [vmem:[%s1919 + $0x18] sm:$0xf]
        %v1927 = vld [vmem:[%s1919 + $0x1c] sm:$0xf]
        %v1928 = vld [vmem:[%s1919 + $0x20] sm:$0xf]
        %v1929 = vld [vmem:[%s1919 + $0x24] sm:$0xf]
        %v1930 = vld [vmem:[%s1919 + $0x28] sm:$0xf]
        %v1931 = vld [vmem:[%s1919 + $0x2c] sm:$0xf]
        %v1932 = vld [vmem:[%s1919 + $0x30] sm:$0xf]
        %v1933 = vld [vmem:[%s1919 + $0x34] sm:$0xf]
        %v1934 = vld [vmem:[%s1919 + $0x38] sm:$0xf]
        %v1935 = vld [vmem:[%s1919 + $0x3c] sm:$0xf]
        %v1936 = vld [vmem:[%s1919 + $0x40] sm:$0xf]
        %v1937 = vld [vmem:[%s1919 + $0x44] sm:$0xf]
        %v1938 = vld [vmem:[%s1919 + $0x48] sm:$0xf]
        %v1939 = vld [vmem:[%s1919 + $0x4c] sm:$0xf]
        %v1940 = vld [vmem:[%s1919 + $0x50] sm:$0xf]
        %v1941 = vld [vmem:[%s1919 + $0x54] sm:$0xf]
        %v1942 = vld [vmem:[%s1919 + $0x58] sm:$0xf]
        %v1943 = vld [vmem:[%s1919 + $0x5c] sm:$0xf]
        %v1944 = vld [vmem:[%s1919 + $0x60] sm:$0xf]
        %v1945 = vld [vmem:[%s1919 + $0x64] sm:$0xf]
        %v1946 = vld [vmem:[%s1919 + $0x68] sm:$0xf]
        %v1947 = vld [vmem:[%s1919 + $0x6c] sm:$0xf]
        %v1948 = vld [vmem:[%s1919 + $0x70] sm:$0xf]
        %v1949 = vld [vmem:[%s1919 + $0x74] sm:$0xf]
        %v1950 = vld [vmem:[%s1919 + $0x78] sm:$0xf]
        %v1951 = vld [vmem:[%s1919 + $0x7c] sm:$0xf]
        %v1952 = vld [vmem:[%s1919 + $0x80] sm:$0xf]
        %v1953 = vld [vmem:[%s1919 + $0x84] sm:$0xf]
        %v1954 = vld [vmem:[%s1919 + $0x88] sm:$0xf]
        %v1955 = vld [vmem:[%s1919 + $0x8c] sm:$0xf]
        %v1956 = vld [vmem:[%s1919 + $0x90] sm:$0xf]
        %v1957 = vld [vmem:[%s1919 + $0x94] sm:$0xf]
        %v1958 = vld [vmem:[%s1919 + $0x98] sm:$0xf]
        %v1959 = vld [vmem:[%s1919 + $0x9c] sm:$0xf]
        %v1960 = vld [vmem:[%s1919 + $0xa0] sm:$0xf]
        %v1961 = vld [vmem:[%s1919 + $0xa4] sm:$0xf]
        %v1962 = vld [vmem:[%s1919 + $0xa8] sm:$0xf]
        %v1963 = vld [vmem:[%s1919 + $0xac] sm:$0xf]
        %v1964 = vld [vmem:[%s1919 + $0xb0] sm:$0xf]
        %v1965 = vld [vmem:[%s1919 + $0xb4] sm:$0xf]
        %v1966 = vld [vmem:[%s1919 + $0xb8] sm:$0xf]
        %v1967 = vld [vmem:[%s1919 + $0xbc] sm:$0xf]
        %v1968 = vld [vmem:[%s1919 + $0xc0] sm:$0xf]
        %v2018 = vunpack.c.l.b16 %v1920
        %v2019 = vunpack.c.l.b16 %v1921
        %v2020 = vunpack.c.l.b16 %v1922
        %v2021 = vunpack.c.l.b16 %v1923
        %v2022 = vunpack.c.l.b16 %v1924
        %v2023 = vunpack.c.l.b16 %v1925
        %v2024 = vunpack.c.l.b16 %v1926
        %v2025 = vunpack.c.l.b16 %v1927
        %v2026 = vunpack.c.l.b16 %v1928
        %v2027 = vunpack.c.l.b16 %v1929
        %v2028 = vunpack.c.l.b16 %v1930
        %v2029 = vunpack.c.l.b16 %v1931
        %v2030 = vunpack.c.l.b16 %v1932
        %v2031 = vunpack.c.l.b16 %v1933
        %v2032 = vunpack.c.l.b16 %v1934
        %v2033 = vunpack.c.l.b16 %v1935
        %v2034 = vunpack.c.l.b16 %v1936
        %v2035 = vunpack.c.l.b16 %v1937
        %v2036 = vunpack.c.l.b16 %v1938
        %v2037 = vunpack.c.l.b16 %v1939
        %v2038 = vunpack.c.l.b16 %v1940
        %v2039 = vunpack.c.l.b16 %v1941
        %v2040 = vunpack.c.l.b16 %v1942
        %v2041 = vunpack.c.l.b16 %v1943
        %v2042 = vunpack.c.l.b16 %v1944
        %v2043 = vunpack.c.l.b16 %v1945
        %v2044 = vunpack.c.l.b16 %v1946
        %v2045 = vunpack.c.l.b16 %v1947
        %v2046 = vunpack.c.l.b16 %v1948
        %v2047 = vunpack.c.l.b16 %v1949
        %v2048 = vunpack.c.l.b16 %v1950
        %v2049 = vunpack.c.l.b16 %v1951
        %v2050 = vunpack.c.l.b16 %v1952
        %v2051 = vunpack.c.l.b16 %v1953
        %v2052 = vunpack.c.l.b16 %v1954
        %v2053 = vunpack.c.l.b16 %v1955
        %v2054 = vunpack.c.l.b16 %v1956
        %v2055 = vunpack.c.l.b16 %v1957
        %v2056 = vunpack.c.l.b16 %v1958
        %v2057 = vunpack.c.l.b16 %v1959
        %v2058 = vunpack.c.l.b16 %v1960
        %v2059 = vunpack.c.l.b16 %v1961
        %v2060 = vunpack.c.l.b16 %v1962
        %v2061 = vunpack.c.l.b16 %v1963
        %v2062 = vunpack.c.l.b16 %v1964
        %v2063 = vunpack.c.l.b16 %v1965
        %v2064 = vunpack.c.l.b16 %v1966
        %v2065 = vunpack.c.l.b16 %v1967
        %v2066 = vunpack.c.l.b16 %v1968
        %v2067 = vpack.c.b16 %v2019, %v2018
        %v2068 = vpack.c.b16 %v2021, %v2020
        %v2069 = vpack.c.b16 %v2023, %v2022
        %v2070 = vpack.c.b16 %v2025, %v2024
        %v2071 = vpack.c.b16 %v2027, %v2026
        %v2072 = vpack.c.b16 %v2029, %v2028
        %v2073 = vpack.c.b16 %v2031, %v2030
        %v2074 = vpack.c.b16 %v2033, %v2032
        %v2075 = vpack.c.b16 %v2035, %v2034
        %v2076 = vpack.c.b16 %v2037, %v2036
        %v2077 = vpack.c.b16 %v2039, %v2038
        %v2078 = vpack.c.b16 %v2041, %v2040
        %v2079 = vpack.c.b16 %v2043, %v2042
        %v2080 = vpack.c.b16 %v2045, %v2044
        %v2081 = vpack.c.b16 %v2047, %v2046
        %v2082 = vpack.c.b16 %v2049, %v2048
        %v2083 = vpack.c.b16 %v2051, %v2050
        %v2084 = vpack.c.b16 %v2053, %v2052
        %v2085 = vpack.c.b16 %v2055, %v2054
        %v2086 = vpack.c.b16 %v2057, %v2056
        %v2087 = vpack.c.b16 %v2059, %v2058
        %v2088 = vpack.c.b16 %v2061, %v2060
        %v2089 = vpack.c.b16 %v2063, %v2062
        %v2090 = vpack.c.b16 %v2065, %v2064
        %v2091 = vpack.c.b16 %v2066, %v2066
        %2117 = vmatprep.subr.bf16.mxu0 0
        %2118 = vmatpush1.bf16.msra.mxu0 %v1241
        %2119 = vmatprep.subr.bf16.mxu0 0
        %2120 = vmatpush1.bf16.msra.mxu0 %v1242
        %2121 = vmatprep.subr.bf16.mxu0 0
        %2122 = vmatpush1.bf16.msra.mxu0 %v1243
        %2123 = vmatprep.subr.bf16.mxu0 0
        %2124 = vmatpush1.bf16.msra.mxu0 %v1244
        %2125 = vmatprep.subr.bf16.mxu0 0
        %2126 = vmatpush1.bf16.msra.mxu0 %v1245
        %2127 = vmatprep.subr.bf16.mxu0 0
        %2128 = vmatpush1.bf16.msra.mxu0 %v1246
        %2129 = vmatprep.subr.bf16.mxu0 0
        %2130 = vmatpush1.bf16.msra.mxu0 %v1247
        %2131 = vmatprep.subr.bf16.mxu0 0
        %2132 = vmatpush1.bf16.msra.mxu0 %v1248
        %2133 = vmatprep.subr.bf16.mxu0 0
        %2134 = vmatpush1.bf16.msra.mxu0 0
        %2135 = vmatprep.subr.bf16.mxu0 0
        %2136 = vmatpush1.bf16.msra.mxu0 0
        %2137 = vmatprep.subr.bf16.mxu0 0
        %2138 = vmatpush1.bf16.msra.mxu0 0
        %2139 = vmatprep.subr.bf16.mxu0 0
        %2140 = vmatpush1.bf16.msra.mxu0 0
        %2141 = vmatprep.subr.bf16.mxu0 0
        %2142 = vmatpush1.bf16.msra.mxu0 0
        %2143 = vmatprep.subr.bf16.mxu0 0
        %2144 = vmatpush1.bf16.msra.mxu0 0
        %2145 = vmatprep.subr.bf16.mxu0 0
        %2146 = vmatpush1.bf16.msra.mxu0 0
        %2147 = vmatprep.subr.bf16.mxu0 0
        %2148 = vmatpush1.bf16.msra.mxu0 0
        %2149 = vmatprep.mubr.bf16.mxu0 0
        %2150 = vmatmul.mubr.bf16.gmra.mrb[0].mxu0 %v2067
        %v2151 = vpop.f32.mrb[0].mxu0
        %v2152 = vadd.f32 0.0, %v2151
        %v2153 = vpop.f32.mrb[0].mxu0
        %v2154 = vpop.f32.mrb[0].mxu0
        %v2155 = vadd.f32 0.0, %v2154
        %v2156 = vpop.f32.mrb[0].mxu0
        %2157 = vmatprep.mubr.bf16.mxu0 0
        %2158 = vmatmul.mubr.bf16.gmra.mrb[0].mxu0 %v2068
        %v2159 = vpop.f32.mrb[0].mxu0
        %v2160 = vadd.f32 0.0, %v2159
        %v2161 = vpop.f32.mrb[0].mxu0
        %v2162 = vpop.f32.mrb[0].mxu0
        %v2163 = vadd.f32 0.0, %v2162
        %v2164 = vpop.f32.mrb[0].mxu0
        %2165 = vmatprep.mubr.bf16.mxu0 0
        %2166 = vmatmul.mubr.bf16.gmra.mrb[0].mxu0 %v2069
        %v2167 = vpop.f32.mrb[0].mxu0
        %v2168 = vadd.f32 0.0, %v2167
        %v2169 = vpop.f32.mrb[0].mxu0
        %v2170 = vpop.f32.mrb[0].mxu0
        %v2171 = vadd.f32 0.0, %v2170
        %v2172 = vpop.f32.mrb[0].mxu0
        %2173 = vmatprep.mubr.bf16.mxu0 0
        %2174 = vmatmul.mubr.bf16.gmra.mrb[0].mxu0 %v2070
        %v2175 = vpop.f32.mrb[0].mxu0
        %v2176 = vadd.f32 0.0, %v2175
        %v2177 = vpop.f32.mrb[0].mxu0
        %v2178 = vpop.f32.mrb[0].mxu0
        %v2179 = vadd.f32 0.0, %v2178
        %v2180 = vpop.f32.mrb[0].mxu0
        %2181 = vmatprep.mubr.bf16.mxu0 0
        %2182 = vmatmul.mubr.bf16.gmra.mrb[0].mxu0 %v2071
        %v2183 = vpop.f32.mrb[0].mxu0
        %v2184 = vadd.f32 0.0, %v2183
        %v2185 = vpop.f32.mrb[0].mxu0
        %v2186 = vpop.f32.mrb[0].mxu0
        %v2187 = vadd.f32 0.0, %v2186
        %v2188 = vpop.f32.mrb[0].mxu0
        %2189 = vmatprep.mubr.bf16.mxu0 0
        %2190 = vmatmul.mubr.bf16.gmra.mrb[0].mxu0 %v2072
        %v2191 = vpop.f32.mrb[0].mxu0
        %v2192 = vadd.f32 0.0, %v2191
        %v2193 = vpop.f32.mrb[0].mxu0
        %v2194 = vpop.f32.mrb[0].mxu0
        %v2195 = vadd.f32 0.0, %v2194
        %v2196 = vpop.f32.mrb[0].mxu0
        %2197 = vmatprep.mubr.bf16.mxu0 0
        %2198 = vmatmul.mubr.bf16.gmra.mrb[0].mxu0 %v2073
        %v2199 = vpop.f32.mrb[0].mxu0
        %v2200 = vadd.f32 0.0, %v2199
        %v2201 = vpop.f32.mrb[0].mxu0
        %v2202 = vpop.f32.mrb[0].mxu0
        %v2203 = vadd.f32 0.0, %v2202
        %v2204 = vpop.f32.mrb[0].mxu0
        %2205 = vmatprep.mubr.bf16.mxu0 0
        %2206 = vmatmul.mubr.bf16.gmra.mrb[0].mxu0 %v2074
        %v2207 = vpop.f32.mrb[0].mxu0
        %v2208 = vadd.f32 0.0, %v2207
        %v2209 = vpop.f32.mrb[0].mxu0
        %v2210 = vpop.f32.mrb[0].mxu0
        %v2211 = vadd.f32 0.0, %v2210
        %v2212 = vpop.f32.mrb[0].mxu0
        %2213 = vmatprep.mubr.bf16.mxu0 0
        %2214 = vmatmul.mubr.bf16.gmra.mrb[0].mxu0 %v2075
        %v2215 = vpop.f32.mrb[0].mxu0
        %v2216 = vadd.f32 0.0, %v2215
        %v2217 = vpop.f32.mrb[0].mxu0
        %v2218 = vpop.f32.mrb[0].mxu0
        %v2219 = vadd.f32 0.0, %v2218
        %v2220 = vpop.f32.mrb[0].mxu0
        %2221 = vmatprep.mubr.bf16.mxu0 0
        %2222 = vmatmul.mubr.bf16.gmra.mrb[0].mxu0 %v2076
        %v2223 = vpop.f32.mrb[0].mxu0
        %v2224 = vadd.f32 0.0, %v2223
        %v2225 = vpop.f32.mrb[0].mxu0
        %v2226 = vpop.f32.mrb[0].mxu0
        %v2227 = vadd.f32 0.0, %v2226
        %v2228 = vpop.f32.mrb[0].mxu0
        %2229 = vmatprep.mubr.bf16.mxu0 0
        %2230 = vmatmul.mubr.bf16.gmra.mrb[0].mxu0 %v2077
        %v2231 = vpop.f32.mrb[0].mxu0
        %v2232 = vadd.f32 0.0, %v2231
        %v2233 = vpop.f32.mrb[0].mxu0
        %v2234 = vpop.f32.mrb[0].mxu0
        %v2235 = vadd.f32 0.0, %v2234
        %v2236 = vpop.f32.mrb[0].mxu0
        %2237 = vmatprep.mubr.bf16.mxu0 0
        %2238 = vmatmul.mubr.bf16.gmra.mrb[0].mxu0 %v2078
        %v2239 = vpop.f32.mrb[0].mxu0
        %v2240 = vadd.f32 0.0, %v2239
        %v2241 = vpop.f32.mrb[0].mxu0
        %v2242 = vpop.f32.mrb[0].mxu0
        %v2243 = vadd.f32 0.0, %v2242
        %v2244 = vpop.f32.mrb[0].mxu0
        %2245 = vmatprep.mubr.bf16.mxu0 0
        %2246 = vmatmul.mubr.bf16.gmra.mrb[0].mxu0 %v2079
        %v2247 = vpop.f32.mrb[0].mxu0
        %v2248 = vadd.f32 0.0, %v2247
        %v2249 = vpop.f32.mrb[0].mxu0
        %v2250 = vpop.f32.mrb[0].mxu0
        %v2251 = vadd.f32 0.0, %v2250
        %v2252 = vpop.f32.mrb[0].mxu0
        %2253 = vmatprep.mubr.bf16.mxu0 0
        %2254 = vmatmul.mubr.bf16.gmra.mrb[0].mxu0 %v2080
        %v2255 = vpop.f32.mrb[0].mxu0
        %v2256 = vadd.f32 0.0, %v2255
        %v2257 = vpop.f32.mrb[0].mxu0
        %v2258 = vpop.f32.mrb[0].mxu0
        %v2259 = vadd.f32 0.0, %v2258
        %v2260 = vpop.f32.mrb[0].mxu0
        %2261 = vmatprep.mubr.bf16.mxu0 0
        %2262 = vmatmul.mubr.bf16.gmra.mrb[0].mxu0 %v2081
        %v2263 = vpop.f32.mrb[0].mxu0
        %v2264 = vadd.f32 0.0, %v2263
        %v2265 = vpop.f32.mrb[0].mxu0
        %v2266 = vpop.f32.mrb[0].mxu0
        %v2267 = vadd.f32 0.0, %v2266
        %v2268 = vpop.f32.mrb[0].mxu0
        %2269 = vmatprep.mubr.bf16.mxu0 0
        %2270 = vmatmul.mubr.bf16.gmra.mrb[0].mxu0 %v2082
        %v2271 = vpop.f32.mrb[0].mxu0
        %v2272 = vadd.f32 0.0, %v2271
        %v2273 = vpop.f32.mrb[0].mxu0
        %v2274 = vpop.f32.mrb[0].mxu0
        %v2275 = vadd.f32 0.0, %v2274
        %v2276 = vpop.f32.mrb[0].mxu0
        %2277 = vmatprep.mubr.bf16.mxu0 0
        %2278 = vmatmul.mubr.bf16.gmra.mrb[0].mxu0 %v2083
        %v2279 = vpop.f32.mrb[0].mxu0
        %v2280 = vadd.f32 0.0, %v2279
        %v2281 = vpop.f32.mrb[0].mxu0
        %v2282 = vpop.f32.mrb[0].mxu0
        %v2283 = vadd.f32 0.0, %v2282
        %v2284 = vpop.f32.mrb[0].mxu0
        %2285 = vmatprep.mubr.bf16.mxu0 0
        %2286 = vmatmul.mubr.bf16.gmra.mrb[0].mxu0 %v2084
        %v2287 = vpop.f32.mrb[0].mxu0
        %v2288 = vadd.f32 0.0, %v2287
        %v2289 = vpop.f32.mrb[0].mxu0
        %v2290 = vpop.f32.mrb[0].mxu0
        %v2291 = vadd.f32 0.0, %v2290
        %v2292 = vpop.f32.mrb[0].mxu0
        %2293 = vmatprep.mubr.bf16.mxu0 0
        %2294 = vmatmul.mubr.bf16.gmra.mrb[0].mxu0 %v2085
        %v2295 = vpop.f32.mrb[0].mxu0
        %v2296 = vadd.f32 0.0, %v2295
        %v2297 = vpop.f32.mrb[0].mxu0
        %v2298 = vpop.f32.mrb[0].mxu0
        %v2299 = vadd.f32 0.0, %v2298
        %v2300 = vpop.f32.mrb[0].mxu0
        %2301 = vmatprep.mubr.bf16.mxu0 0
        %2302 = vmatmul.mubr.bf16.gmra.mrb[0].mxu0 %v2086
        %v2303 = vpop.f32.mrb[0].mxu0
        %v2304 = vadd.f32 0.0, %v2303
        %v2305 = vpop.f32.mrb[0].mxu0
        %v2306 = vpop.f32.mrb[0].mxu0
        %v2307 = vadd.f32 0.0, %v2306
        %v2308 = vpop.f32.mrb[0].mxu0
        %2309 = vmatprep.mubr.bf16.mxu0 0
        %2310 = vmatmul.mubr.bf16.gmra.mrb[0].mxu0 %v2087
        %v2311 = vpop.f32.mrb[0].mxu0
        %v2312 = vadd.f32 0.0, %v2311
        %v2313 = vpop.f32.mrb[0].mxu0
        %v2314 = vpop.f32.mrb[0].mxu0
        %v2315 = vadd.f32 0.0, %v2314
        %v2316 = vpop.f32.mrb[0].mxu0
        %2317 = vmatprep.mubr.bf16.mxu0 0
        %2318 = vmatmul.mubr.bf16.gmra.mrb[0].mxu0 %v2088
        %v2319 = vpop.f32.mrb[0].mxu0
        %v2320 = vadd.f32 0.0, %v2319
        %v2321 = vpop.f32.mrb[0].mxu0
        %v2322 = vpop.f32.mrb[0].mxu0
        %v2323 = vadd.f32 0.0, %v2322
        %v2324 = vpop.f32.mrb[0].mxu0
        %2325 = vmatprep.mubr.bf16.mxu0 0
        %2326 = vmatmul.mubr.bf16.gmra.mrb[0].mxu0 %v2089
        %v2327 = vpop.f32.mrb[0].mxu0
        %v2328 = vadd.f32 0.0, %v2327
        %v2329 = vpop.f32.mrb[0].mxu0
        %v2330 = vpop.f32.mrb[0].mxu0
        %v2331 = vadd.f32 0.0, %v2330
        %v2332 = vpop.f32.mrb[0].mxu0
        %2333 = vmatprep.mubr.bf16.mxu0 0
        %2334 = vmatmul.mubr.bf16.gmra.mrb[0].mxu0 %v2090
        %v2335 = vpop.f32.mrb[0].mxu0
        %v2336 = vadd.f32 0.0, %v2335
        %v2337 = vpop.f32.mrb[0].mxu0
        %v2338 = vpop.f32.mrb[0].mxu0
        %v2339 = vadd.f32 0.0, %v2338
        %v2340 = vpop.f32.mrb[0].mxu0
        %2341 = vmatprep.mubr.bf16.mxu0 0
        %2342 = vmatmul.mubr.bf16.gmra.mrb[0].mxu0 %v2091
        %v2343 = vpop.f32.mrb[0].mxu0
        %v2344 = vadd.f32 0.0, %v2343
        %v2345 = vpop.f32.mrb[0].mxu0
        %v2346 = vpop.f32.mrb[0].mxu0
        %v2347 = vpop.f32.mrb[0].mxu0
        %2348 = vdwg.mxu0
        %s2349 = scalar_lea.vmem %s967, 588 [#allocation2]
        %v2350 = vld [vmem:[%s2349] sm:$0xf]
        %v2351 = vld [vmem:[%s2349 + $0x4] sm:$0xf]
        %v2352 = vld [vmem:[%s2349 + $0x8] sm:$0xf]
        %v2353 = vld [vmem:[%s2349 + $0xc] sm:$0xf]
        %v2354 = vld [vmem:[%s2349 + $0x10] sm:$0xf]
        %v2355 = vld [vmem:[%s2349 + $0x14] sm:$0xf]
        %v2356 = vld [vmem:[%s2349 + $0x18] sm:$0xf]
        %v2357 = vld [vmem:[%s2349 + $0x1c] sm:$0xf]
        %v2358 = vld [vmem:[%s2349 + $0x20] sm:$0xf]
        %v2359 = vld [vmem:[%s2349 + $0x24] sm:$0xf]
        %v2360 = vld [vmem:[%s2349 + $0x28] sm:$0xf]
        %v2361 = vld [vmem:[%s2349 + $0x2c] sm:$0xf]
        %v2362 = vld [vmem:[%s2349 + $0x30] sm:$0xf]
        %v2363 = vld [vmem:[%s2349 + $0x34] sm:$0xf]
        %v2364 = vld [vmem:[%s2349 + $0x38] sm:$0xf]
        %v2365 = vld [vmem:[%s2349 + $0x3c] sm:$0xf]
        %v2366 = vld [vmem:[%s2349 + $0x40] sm:$0xf]
        %v2367 = vld [vmem:[%s2349 + $0x44] sm:$0xf]
        %v2368 = vld [vmem:[%s2349 + $0x48] sm:$0xf]
        %v2369 = vld [vmem:[%s2349 + $0x4c] sm:$0xf]
        %v2370 = vld [vmem:[%s2349 + $0x50] sm:$0xf]
        %v2371 = vld [vmem:[%s2349 + $0x54] sm:$0xf]
        %v2372 = vld [vmem:[%s2349 + $0x58] sm:$0xf]
        %v2373 = vld [vmem:[%s2349 + $0x5c] sm:$0xf]
        %v2374 = vld [vmem:[%s2349 + $0x60] sm:$0xf]
        %v2375 = vld [vmem:[%s2349 + $0x64] sm:$0xf]
        %v2376 = vld [vmem:[%s2349 + $0x68] sm:$0xf]
        %v2377 = vld [vmem:[%s2349 + $0x6c] sm:$0xf]
        %v2378 = vld [vmem:[%s2349 + $0x70] sm:$0xf]
        %v2379 = vld [vmem:[%s2349 + $0x74] sm:$0xf]
        %v2380 = vld [vmem:[%s2349 + $0x78] sm:$0xf]
        %v2381 = vld [vmem:[%s2349 + $0x7c] sm:$0xf]
        %v2382 = vld [vmem:[%s2349 + $0x80] sm:$0xf]
        %v2383 = vld [vmem:[%s2349 + $0x84] sm:$0xf]
        %v2384 = vld [vmem:[%s2349 + $0x88] sm:$0xf]
        %v2385 = vld [vmem:[%s2349 + $0x8c] sm:$0xf]
        %v2386 = vld [vmem:[%s2349 + $0x90] sm:$0xf]
        %v2387 = vld [vmem:[%s2349 + $0x94] sm:$0xf]
        %v2388 = vld [vmem:[%s2349 + $0x98] sm:$0xf]
        %v2389 = vld [vmem:[%s2349 + $0x9c] sm:$0xf]
        %v2390 = vld [vmem:[%s2349 + $0xa0] sm:$0xf]
        %v2391 = vld [vmem:[%s2349 + $0xa4] sm:$0xf]
        %v2392 = vld [vmem:[%s2349 + $0xa8] sm:$0xf]
        %v2393 = vld [vmem:[%s2349 + $0xac] sm:$0xf]
        %v2394 = vld [vmem:[%s2349 + $0xb0] sm:$0xf]
        %v2395 = vld [vmem:[%s2349 + $0xb4] sm:$0xf]
        %v2396 = vld [vmem:[%s2349 + $0xb8] sm:$0xf]
        %v2397 = vld [vmem:[%s2349 + $0xbc] sm:$0xf]
        %v2398 = vld [vmem:[%s2349 + $0xc0] sm:$0xf]
        %v2448 = vunpack.c.l.b16 %v2350
        %v2449 = vunpack.c.l.b16 %v2351
        %v2450 = vunpack.c.l.b16 %v2352
        %v2451 = vunpack.c.l.b16 %v2353
        %v2452 = vunpack.c.l.b16 %v2354
        %v2453 = vunpack.c.l.b16 %v2355
        %v2454 = vunpack.c.l.b16 %v2356
        %v2455 = vunpack.c.l.b16 %v2357
        %v2456 = vunpack.c.l.b16 %v2358
        %v2457 = vunpack.c.l.b16 %v2359
        %v2458 = vunpack.c.l.b16 %v2360
        %v2459 = vunpack.c.l.b16 %v2361
        %v2460 = vunpack.c.l.b16 %v2362
        %v2461 = vunpack.c.l.b16 %v2363
        %v2462 = vunpack.c.l.b16 %v2364
        %v2463 = vunpack.c.l.b16 %v2365
        %v2464 = vunpack.c.l.b16 %v2366
        %v2465 = vunpack.c.l.b16 %v2367
        %v2466 = vunpack.c.l.b16 %v2368
        %v2467 = vunpack.c.l.b16 %v2369
        %v2468 = vunpack.c.l.b16 %v2370
        %v2469 = vunpack.c.l.b16 %v2371
        %v2470 = vunpack.c.l.b16 %v2372
        %v2471 = vunpack.c.l.b16 %v2373
        %v2472 = vunpack.c.l.b16 %v2374
        %v2473 = vunpack.c.l.b16 %v2375
        %v2474 = vunpack.c.l.b16 %v2376
        %v2475 = vunpack.c.l.b16 %v2377
        %v2476 = vunpack.c.l.b16 %v2378
        %v2477 = vunpack.c.l.b16 %v2379
        %v2478 = vunpack.c.l.b16 %v2380
        %v2479 = vunpack.c.l.b16 %v2381
        %v2480 = vunpack.c.l.b16 %v2382
        %v2481 = vunpack.c.l.b16 %v2383
        %v2482 = vunpack.c.l.b16 %v2384
        %v2483 = vunpack.c.l.b16 %v2385
        %v2484 = vunpack.c.l.b16 %v2386
        %v2485 = vunpack.c.l.b16 %v2387
        %v2486 = vunpack.c.l.b16 %v2388
        %v2487 = vunpack.c.l.b16 %v2389
        %v2488 = vunpack.c.l.b16 %v2390
        %v2489 = vunpack.c.l.b16 %v2391
        %v2490 = vunpack.c.l.b16 %v2392
        %v2491 = vunpack.c.l.b16 %v2393
        %v2492 = vunpack.c.l.b16 %v2394
        %v2493 = vunpack.c.l.b16 %v2395
        %v2494 = vunpack.c.l.b16 %v2396
        %v2495 = vunpack.c.l.b16 %v2397
        %v2496 = vunpack.c.l.b16 %v2398
        %v2497 = vpack.c.b16 %v2449, %v2448
        %v2498 = vpack.c.b16 %v2451, %v2450
        %v2499 = vpack.c.b16 %v2453, %v2452
        %v2500 = vpack.c.b16 %v2455, %v2454
        %v2501 = vpack.c.b16 %v2457, %v2456
        %v2502 = vpack.c.b16 %v2459, %v2458
        %v2503 = vpack.c.b16 %v2461, %v2460
        %v2504 = vpack.c.b16 %v2463, %v2462
        %v2505 = vpack.c.b16 %v2465, %v2464
        %v2506 = vpack.c.b16 %v2467, %v2466
        %v2507 = vpack.c.b16 %v2469, %v2468
        %v2508 = vpack.c.b16 %v2471, %v2470
        %v2509 = vpack.c.b16 %v2473, %v2472
        %v2510 = vpack.c.b16 %v2475, %v2474
        %v2511 = vpack.c.b16 %v2477, %v2476
        %v2512 = vpack.c.b16 %v2479, %v2478
        %v2513 = vpack.c.b16 %v2481, %v2480
        %v2514 = vpack.c.b16 %v2483, %v2482
        %v2515 = vpack.c.b16 %v2485, %v2484
        %v2516 = vpack.c.b16 %v2487, %v2486
        %v2517 = vpack.c.b16 %v2489, %v2488
        %v2518 = vpack.c.b16 %v2491, %v2490
        %v2519 = vpack.c.b16 %v2493, %v2492
        %v2520 = vpack.c.b16 %v2495, %v2494
        %v2521 = vpack.c.b16 %v2496, %v2496
        %2547 = vmatprep.subr.bf16.mxu0 0
        %2548 = vmatpush1.bf16.msra.mxu0 %v1241
        %2549 = vmatprep.subr.bf16.mxu0 0
        %2550 = vmatpush1.bf16.msra.mxu0 %v1242
        %2551 = vmatprep.subr.bf16.mxu0 0
        %2552 = vmatpush1.bf16.msra.mxu0 %v1243
        %2553 = vmatprep.subr.bf16.mxu0 0
        %2554 = vmatpush1.bf16.msra.mxu0 %v1244
        %2555 = vmatprep.subr.bf16.mxu0 0
        %2556 = vmatpush1.bf16.msra.mxu0 %v1245
        %2557 = vmatprep.subr.bf16.mxu0 0
        %2558 = vmatpush1.bf16.msra.mxu0 %v1246
        %2559 = vmatprep.subr.bf16.mxu0 0
        %2560 = vmatpush1.bf16.msra.mxu0 %v1247
        %2561 = vmatprep.subr.bf16.mxu0 0
        %2562 = vmatpush1.bf16.msra.mxu0 %v1248
        %2563 = vmatprep.subr.bf16.mxu0 0
        %2564 = vmatpush1.bf16.msra.mxu0 0
        %2565 = vmatprep.subr.bf16.mxu0 0
        %2566 = vmatpush1.bf16.msra.mxu0 0
        %2567 = vmatprep.subr.bf16.mxu0 0
        %2568 = vmatpush1.bf16.msra.mxu0 0
        %2569 = vmatprep.subr.bf16.mxu0 0
        %2570 = vmatpush1.bf16.msra.mxu0 0
        %2571 = vmatprep.subr.bf16.mxu0 0
        %2572 = vmatpush1.bf16.msra.mxu0 0
        %2573 = vmatprep.subr.bf16.mxu0 0
        %2574 = vmatpush1.bf16.msra.mxu0 0
        %2575 = vmatprep.subr.bf16.mxu0 0
        %2576 = vmatpush1.bf16.msra.mxu0 0
        %2577 = vmatprep.subr.bf16.mxu0 0
        %2578 = vmatpush1.bf16.msra.mxu0 0
        %2579 = vmatprep.mubr.bf16.mxu0 0
        %2580 = vmatmul.mubr.bf16.gmra.mrb[0].mxu0 %v2497
        %v2581 = vpop.f32.mrb[0].mxu0
        %v2582 = vadd.f32 0.0, %v2581
        %v2583 = vpop.f32.mrb[0].mxu0
        %v2584 = vpop.f32.mrb[0].mxu0
        %v2585 = vadd.f32 0.0, %v2584
        %v2586 = vpop.f32.mrb[0].mxu0
        %2587 = vmatprep.mubr.bf16.mxu0 0
        %2588 = vmatmul.mubr.bf16.gmra.mrb[0].mxu0 %v2498
        %v2589 = vpop.f32.mrb[0].mxu0
        %v2590 = vadd.f32 0.0, %v2589
        %v2591 = vpop.f32.mrb[0].mxu0
        %v2592 = vpop.f32.mrb[0].mxu0
        %v2593 = vadd.f32 0.0, %v2592
        %v2594 = vpop.f32.mrb[0].mxu0
        %2595 = vmatprep.mubr.bf16.mxu0 0
        %2596 = vmatmul.mubr.bf16.gmra.mrb[0].mxu0 %v2499
        %v2597 = vpop.f32.mrb[0].mxu0
        %v2598 = vadd.f32 0.0, %v2597
        %v2599 = vpop.f32.mrb[0].mxu0
        %v2600 = vpop.f32.mrb[0].mxu0
        %v2601 = vadd.f32 0.0, %v2600
        %v2602 = vpop.f32.mrb[0].mxu0
        %2603 = vmatprep.mubr.bf16.mxu0 0
        %2604 = vmatmul.mubr.bf16.gmra.mrb[0].mxu0 %v2500
        %v2605 = vpop.f32.mrb[0].mxu0
        %v2606 = vadd.f32 0.0, %v2605
        %v2607 = vpop.f32.mrb[0].mxu0
        %v2608 = vpop.f32.mrb[0].mxu0
        %v2609 = vadd.f32 0.0, %v2608
        %v2610 = vpop.f32.mrb[0].mxu0
        %2611 = vmatprep.mubr.bf16.mxu0 0
        %2612 = vmatmul.mubr.bf16.gmra.mrb[0].mxu0 %v2501
        %v2613 = vpop.f32.mrb[0].mxu0
        %v2614 = vadd.f32 0.0, %v2613
        %v2615 = vpop.f32.mrb[0].mxu0
        %v2616 = vpop.f32.mrb[0].mxu0
        %v2617 = vadd.f32 0.0, %v2616
        %v2618 = vpop.f32.mrb[0].mxu0
        %2619 = vmatprep.mubr.bf16.mxu0 0
        %2620 = vmatmul.mubr.bf16.gmra.mrb[0].mxu0 %v2502
        %v2621 = vpop.f32.mrb[0].mxu0
        %v2622 = vadd.f32 0.0, %v2621
        %v2623 = vpop.f32.mrb[0].mxu0
        %v2624 = vpop.f32.mrb[0].mxu0
        %v2625 = vadd.f32 0.0, %v2624
        %v2626 = vpop.f32.mrb[0].mxu0
        %2627 = vmatprep.mubr.bf16.mxu0 0
        %2628 = vmatmul.mubr.bf16.gmra.mrb[0].mxu0 %v2503
        %v2629 = vpop.f32.mrb[0].mxu0
        %v2630 = vadd.f32 0.0, %v2629
        %v2631 = vpop.f32.mrb[0].mxu0
        %v2632 = vpop.f32.mrb[0].mxu0
        %v2633 = vadd.f32 0.0, %v2632
        %v2634 = vpop.f32.mrb[0].mxu0
        %2635 = vmatprep.mubr.bf16.mxu0 0
        %2636 = vmatmul.mubr.bf16.gmra.mrb[0].mxu0 %v2504
        %v2637 = vpop.f32.mrb[0].mxu0
        %v2638 = vadd.f32 0.0, %v2637
        %v2639 = vpop.f32.mrb[0].mxu0
        %v2640 = vpop.f32.mrb[0].mxu0
        %v2641 = vadd.f32 0.0, %v2640
        %v2642 = vpop.f32.mrb[0].mxu0
        %2643 = vmatprep.mubr.bf16.mxu0 0
        %2644 = vmatmul.mubr.bf16.gmra.mrb[0].mxu0 %v2505
        %v2645 = vpop.f32.mrb[0].mxu0
        %v2646 = vadd.f32 0.0, %v2645
        %v2647 = vpop.f32.mrb[0].mxu0
        %v2648 = vpop.f32.mrb[0].mxu0
        %v2649 = vadd.f32 0.0, %v2648
        %v2650 = vpop.f32.mrb[0].mxu0
        %2651 = vmatprep.mubr.bf16.mxu0 0
        %2652 = vmatmul.mubr.bf16.gmra.mrb[0].mxu0 %v2506
        %v2653 = vpop.f32.mrb[0].mxu0
        %v2654 = vadd.f32 0.0, %v2653
        %v2655 = vpop.f32.mrb[0].mxu0
        %v2656 = vpop.f32.mrb[0].mxu0
        %v2657 = vadd.f32 0.0, %v2656
        %v2658 = vpop.f32.mrb[0].mxu0
        %2659 = vmatprep.mubr.bf16.mxu0 0
        %2660 = vmatmul.mubr.bf16.gmra.mrb[0].mxu0 %v2507
        %v2661 = vpop.f32.mrb[0].mxu0
        %v2662 = vadd.f32 0.0, %v2661
        %v2663 = vpop.f32.mrb[0].mxu0
        %v2664 = vpop.f32.mrb[0].mxu0
        %v2665 = vadd.f32 0.0, %v2664
        %v2666 = vpop.f32.mrb[0].mxu0
        %2667 = vmatprep.mubr.bf16.mxu0 0
        %2668 = vmatmul.mubr.bf16.gmra.mrb[0].mxu0 %v2508
        %v2669 = vpop.f32.mrb[0].mxu0
        %v2670 = vadd.f32 0.0, %v2669
        %v2671 = vpop.f32.mrb[0].mxu0
        %v2672 = vpop.f32.mrb[0].mxu0
        %v2673 = vadd.f32 0.0, %v2672
        %v2674 = vpop.f32.mrb[0].mxu0
        %2675 = vmatprep.mubr.bf16.mxu0 0
        %2676 = vmatmul.mubr.bf16.gmra.mrb[0].mxu0 %v2509
        %v2677 = vpop.f32.mrb[0].mxu0
        %v2678 = vadd.f32 0.0, %v2677
        %v2679 = vpop.f32.mrb[0].mxu0
        %v2680 = vpop.f32.mrb[0].mxu0
        %v2681 = vadd.f32 0.0, %v2680
        %v2682 = vpop.f32.mrb[0].mxu0
        %2683 = vmatprep.mubr.bf16.mxu0 0
        %2684 = vmatmul.mubr.bf16.gmra.mrb[0].mxu0 %v2510
        %v2685 = vpop.f32.mrb[0].mxu0
        %v2686 = vadd.f32 0.0, %v2685
        %v2687 = vpop.f32.mrb[0].mxu0
        %v2688 = vpop.f32.mrb[0].mxu0
        %v2689 = vadd.f32 0.0, %v2688
        %v2690 = vpop.f32.mrb[0].mxu0
        %2691 = vmatprep.mubr.bf16.mxu0 0
        %2692 = vmatmul.mubr.bf16.gmra.mrb[0].mxu0 %v2511
        %v2693 = vpop.f32.mrb[0].mxu0
        %v2694 = vadd.f32 0.0, %v2693
        %v2695 = vpop.f32.mrb[0].mxu0
        %v2696 = vpop.f32.mrb[0].mxu0
        %v2697 = vadd.f32 0.0, %v2696
        %v2698 = vpop.f32.mrb[0].mxu0
        %2699 = vmatprep.mubr.bf16.mxu0 0
        %2700 = vmatmul.mubr.bf16.gmra.mrb[0].mxu0 %v2512
        %v2701 = vpop.f32.mrb[0].mxu0
        %v2702 = vadd.f32 0.0, %v2701
        %v2703 = vpop.f32.mrb[0].mxu0
        %v2704 = vpop.f32.mrb[0].mxu0
        %v2705 = vadd.f32 0.0, %v2704
        %v2706 = vpop.f32.mrb[0].mxu0
        %2707 = vmatprep.mubr.bf16.mxu0 0
        %2708 = vmatmul.mubr.bf16.gmra.mrb[0].mxu0 %v2513
        %v2709 = vpop.f32.mrb[0].mxu0
        %v2710 = vadd.f32 0.0, %v2709
        %v2711 = vpop.f32.mrb[0].mxu0
        %v2712 = vpop.f32.mrb[0].mxu0
        %v2713 = vadd.f32 0.0, %v2712
        %v2714 = vpop.f32.mrb[0].mxu0
        %2715 = vmatprep.mubr.bf16.mxu0 0
        %2716 = vmatmul.mubr.bf16.gmra.mrb[0].mxu0 %v2514
        %v2717 = vpop.f32.mrb[0].mxu0
        %v2718 = vadd.f32 0.0, %v2717
        %v2719 = vpop.f32.mrb[0].mxu0
        %v2720 = vpop.f32.mrb[0].mxu0
        %v2721 = vadd.f32 0.0, %v2720
        %v2722 = vpop.f32.mrb[0].mxu0
        %2723 = vmatprep.mubr.bf16.mxu0 0
        %2724 = vmatmul.mubr.bf16.gmra.mrb[0].mxu0 %v2515
        %v2725 = vpop.f32.mrb[0].mxu0
        %v2726 = vadd.f32 0.0, %v2725
        %v2727 = vpop.f32.mrb[0].mxu0
        %v2728 = vpop.f32.mrb[0].mxu0
        %v2729 = vadd.f32 0.0, %v2728
        %v2730 = vpop.f32.mrb[0].mxu0
        %2731 = vmatprep.mubr.bf16.mxu0 0
        %2732 = vmatmul.mubr.bf16.gmra.mrb[0].mxu0 %v2516
        %v2733 = vpop.f32.mrb[0].mxu0
        %v2734 = vadd.f32 0.0, %v2733
        %v2735 = vpop.f32.mrb[0].mxu0
        %v2736 = vpop.f32.mrb[0].mxu0
        %v2737 = vadd.f32 0.0, %v2736
        %v2738 = vpop.f32.mrb[0].mxu0
        %2739 = vmatprep.mubr.bf16.mxu0 0
        %2740 = vmatmul.mubr.bf16.gmra.mrb[0].mxu0 %v2517
        %v2741 = vpop.f32.mrb[0].mxu0
        %v2742 = vadd.f32 0.0, %v2741
        %v2743 = vpop.f32.mrb[0].mxu0
        %v2744 = vpop.f32.mrb[0].mxu0
        %v2745 = vadd.f32 0.0, %v2744
        %v2746 = vpop.f32.mrb[0].mxu0
        %2747 = vmatprep.mubr.bf16.mxu0 0
        %2748 = vmatmul.mubr.bf16.gmra.mrb[0].mxu0 %v2518
        %v2749 = vpop.f32.mrb[0].mxu0
        %v2750 = vadd.f32 0.0, %v2749
        %v2751 = vpop.f32.mrb[0].mxu0
        %v2752 = vpop.f32.mrb[0].mxu0
        %v2753 = vadd.f32 0.0, %v2752
        %v2754 = vpop.f32.mrb[0].mxu0
        %2755 = vmatprep.mubr.bf16.mxu0 0
        %2756 = vmatmul.mubr.bf16.gmra.mrb[0].mxu0 %v2519
        %v2757 = vpop.f32.mrb[0].mxu0
        %v2758 = vadd.f32 0.0, %v2757
        %v2759 = vpop.f32.mrb[0].mxu0
        %v2760 = vpop.f32.mrb[0].mxu0
        %v2761 = vadd.f32 0.0, %v2760
        %v2762 = vpop.f32.mrb[0].mxu0
        %2763 = vmatprep.mubr.bf16.mxu0 0
        %2764 = vmatmul.mubr.bf16.gmra.mrb[0].mxu0 %v2520
        %v2765 = vpop.f32.mrb[0].mxu0
        %v2766 = vadd.f32 0.0, %v2765
        %v2767 = vpop.f32.mrb[0].mxu0
        %v2768 = vpop.f32.mrb[0].mxu0
        %v2769 = vadd.f32 0.0, %v2768
        %v2770 = vpop.f32.mrb[0].mxu0
        %2771 = vmatprep.mubr.bf16.mxu0 0
        %2772 = vmatmul.mubr.bf16.gmra.mrb[0].mxu0 %v2521
        %v2773 = vpop.f32.mrb[0].mxu0
        %v2774 = vadd.f32 0.0, %v2773
        %v2775 = vpop.f32.mrb[0].mxu0
        %v2776 = vpop.f32.mrb[0].mxu0
        %v2777 = vpop.f32.mrb[0].mxu0
        %2778 = vdwg.mxu0
        %v2779 = vmax.f32 %v1292, %v1722
        %v2780 = vmax.f32 %v1295, %v1725
        %v2781 = vmax.f32 %v1300, %v1730
        %v2782 = vmax.f32 %v1303, %v1733
        %v2783 = vmax.f32 %v1308, %v1738
        %v2784 = vmax.f32 %v1311, %v1741
        %v2785 = vmax.f32 %v1316, %v1746
        %v2786 = vmax.f32 %v1319, %v1749
        %v2787 = vmax.f32 %v1324, %v1754
        %v2788 = vmax.f32 %v1327, %v1757
        %v2789 = vmax.f32 %v1332, %v1762
        %v2790 = vmax.f32 %v1335, %v1765
        %v2791 = vmax.f32 %v1340, %v1770
        %v2792 = vmax.f32 %v1343, %v1773
        %v2793 = vmax.f32 %v1348, %v1778
        %v2794 = vmax.f32 %v1351, %v1781
        %v2795 = vmax.f32 %v1356, %v1786
        %v2796 = vmax.f32 %v1359, %v1789
        %v2797 = vmax.f32 %v1364, %v1794
        %v2798 = vmax.f32 %v1367, %v1797
        %v2799 = vmax.f32 %v1372, %v1802
        %v2800 = vmax.f32 %v1375, %v1805
        %v2801 = vmax.f32 %v1380, %v1810
        %v2802 = vmax.f32 %v1383, %v1813
        %v2803 = vmax.f32 %v1388, %v1818
        %v2804 = vmax.f32 %v1391, %v1821
        %v2805 = vmax.f32 %v1396, %v1826
        %v2806 = vmax.f32 %v1399, %v1829
        %v2807 = vmax.f32 %v1404, %v1834
        %v2808 = vmax.f32 %v1407, %v1837
        %v2809 = vmax.f32 %v1412, %v1842
        %v2810 = vmax.f32 %v1415, %v1845
        %v2811 = vmax.f32 %v1420, %v1850
        %v2812 = vmax.f32 %v1423, %v1853
        %v2813 = vmax.f32 %v1428, %v1858
        %v2814 = vmax.f32 %v1431, %v1861
        %v2815 = vmax.f32 %v1436, %v1866
        %v2816 = vmax.f32 %v1439, %v1869
        %v2817 = vmax.f32 %v1444, %v1874
        %v2818 = vmax.f32 %v1447, %v1877
        %v2819 = vmax.f32 %v1452, %v1882
        %v2820 = vmax.f32 %v1455, %v1885
        %v2821 = vmax.f32 %v1460, %v1890
        %v2822 = vmax.f32 %v1463, %v1893
        %v2823 = vmax.f32 %v1468, %v1898
        %v2824 = vmax.f32 %v1471, %v1901
        %v2825 = vmax.f32 %v1476, %v1906
        %v2826 = vmax.f32 %v1479, %v1909
        %v2827 = vmax.f32 %v1484, %v1914
        %v2828 = vmax.f32 %v2152, %v2582
        %v2829 = vmax.f32 %v2155, %v2585
        %v2830 = vmax.f32 %v2160, %v2590
        %v2831 = vmax.f32 %v2163, %v2593
        %v2832 = vmax.f32 %v2168, %v2598
        %v2833 = vmax.f32 %v2171, %v2601
        %v2834 = vmax.f32 %v2176, %v2606
        %v2835 = vmax.f32 %v2179, %v2609
        %v2836 = vmax.f32 %v2184, %v2614
        %v2837 = vmax.f32 %v2187, %v2617
        %v2838 = vmax.f32 %v2192, %v2622
        %v2839 = vmax.f32 %v2195, %v2625
        %v2840 = vmax.f32 %v2200, %v2630
        %v2841 = vmax.f32 %v2203, %v2633
        %v2842 = vmax.f32 %v2208, %v2638
        %v2843 = vmax.f32 %v2211, %v2641
        %v2844 = vmax.f32 %v2216, %v2646
        %v2845 = vmax.f32 %v2219, %v2649
        %v2846 = vmax.f32 %v2224, %v2654
        %v2847 = vmax.f32 %v2227, %v2657
        %v2848 = vmax.f32 %v2232, %v2662
        %v2849 = vmax.f32 %v2235, %v2665
        %v2850 = vmax.f32 %v2240, %v2670
        %v2851 = vmax.f32 %v2243, %v2673
        %v2852 = vmax.f32 %v2248, %v2678
        %v2853 = vmax.f32 %v2251, %v2681
        %v2854 = vmax.f32 %v2256, %v2686
        %v2855 = vmax.f32 %v2259, %v2689
        %v2856 = vmax.f32 %v2264, %v2694
        %v2857 = vmax.f32 %v2267, %v2697
        %v2858 = vmax.f32 %v2272, %v2702
        %v2859 = vmax.f32 %v2275, %v2705
        %v2860 = vmax.f32 %v2280, %v2710
        %v2861 = vmax.f32 %v2283, %v2713
        %v2862 = vmax.f32 %v2288, %v2718
        %v2863 = vmax.f32 %v2291, %v2721
        %v2864 = vmax.f32 %v2296, %v2726
        %v2865 = vmax.f32 %v2299, %v2729
        %v2866 = vmax.f32 %v2304, %v2734
        %v2867 = vmax.f32 %v2307, %v2737
        %v2868 = vmax.f32 %v2312, %v2742
        %v2869 = vmax.f32 %v2315, %v2745
        %v2870 = vmax.f32 %v2320, %v2750
        %v2871 = vmax.f32 %v2323, %v2753
        %v2872 = vmax.f32 %v2328, %v2758
        %v2873 = vmax.f32 %v2331, %v2761
        %v2874 = vmax.f32 %v2336, %v2766
        %v2875 = vmax.f32 %v2339, %v2769
        %v2876 = vmax.f32 %v2344, %v2774
        %v2877 = vmax.f32 %v2779, %v2828
        %v2878 = vmax.f32 %v2780, %v2829
        %v2879 = vmax.f32 %v2781, %v2830
        %v2880 = vmax.f32 %v2782, %v2831
        %v2881 = vmax.f32 %v2783, %v2832
        %v2882 = vmax.f32 %v2784, %v2833
        %v2883 = vmax.f32 %v2785, %v2834
        %v2884 = vmax.f32 %v2786, %v2835
        %v2885 = vmax.f32 %v2787, %v2836
        %v2886 = vmax.f32 %v2788, %v2837
        %v2887 = vmax.f32 %v2789, %v2838
        %v2888 = vmax.f32 %v2790, %v2839
        %v2889 = vmax.f32 %v2791, %v2840
        %v2890 = vmax.f32 %v2792, %v2841
        %v2891 = vmax.f32 %v2793, %v2842
        %v2892 = vmax.f32 %v2794, %v2843
        %v2893 = vmax.f32 %v2795, %v2844
        %v2894 = vmax.f32 %v2796, %v2845
        %v2895 = vmax.f32 %v2797, %v2846
        %v2896 = vmax.f32 %v2798, %v2847
        %v2897 = vmax.f32 %v2799, %v2848
        %v2898 = vmax.f32 %v2800, %v2849
        %v2899 = vmax.f32 %v2801, %v2850
        %v2900 = vmax.f32 %v2802, %v2851
        %v2901 = vmax.f32 %v2803, %v2852
        %v2902 = vmax.f32 %v2804, %v2853
        %v2903 = vmax.f32 %v2805, %v2854
        %v2904 = vmax.f32 %v2806, %v2855
        %v2905 = vmax.f32 %v2807, %v2856
        %v2906 = vmax.f32 %v2808, %v2857
        %v2907 = vmax.f32 %v2809, %v2858
        %v2908 = vmax.f32 %v2810, %v2859
        %v2909 = vmax.f32 %v2811, %v2860
        %v2910 = vmax.f32 %v2812, %v2861
        %v2911 = vmax.f32 %v2813, %v2862
        %v2912 = vmax.f32 %v2814, %v2863
        %v2913 = vmax.f32 %v2815, %v2864
        %v2914 = vmax.f32 %v2816, %v2865
        %v2915 = vmax.f32 %v2817, %v2866
        %v2916 = vmax.f32 %v2818, %v2867
        %v2917 = vmax.f32 %v2819, %v2868
        %v2918 = vmax.f32 %v2820, %v2869
        %v2919 = vmax.f32 %v2821, %v2870
        %v2920 = vmax.f32 %v2822, %v2871
        %v2921 = vmax.f32 %v2823, %v2872
        %v2922 = vmax.f32 %v2824, %v2873
        %v2923 = vmax.f32 %v2825, %v2874
        %v2924 = vmax.f32 %v2826, %v2875
        %v2925 = vmax.f32 %v2827, %v2876
        %v2926 = vld [vmem:[%s2] sm:$0x1]
        %v2928 = vlaneseq
        %v2929 = vshrl.u32 %v2928, 7
        %v2930 = vsub.s32 0, %v2929
        %v2931 = vrot.slane %v2926, %v2930
        %v2933 = vadd.f32 %v2877, %v2931
        %v2934 = vadd.f32 %v2878, %v2931
        %v2935 = vadd.f32 %v2879, %v2931
        %v2936 = vadd.f32 %v2880, %v2931
        %v2937 = vadd.f32 %v2881, %v2931
        %v2938 = vadd.f32 %v2882, %v2931
        %v2939 = vadd.f32 %v2883, %v2931
        %v2940 = vadd.f32 %v2884, %v2931
        %v2941 = vadd.f32 %v2885, %v2931
        %v2942 = vadd.f32 %v2886, %v2931
        %v2943 = vadd.f32 %v2887, %v2931
        %v2944 = vadd.f32 %v2888, %v2931
        %v2945 = vadd.f32 %v2889, %v2931
        %v2946 = vadd.f32 %v2890, %v2931
        %v2947 = vadd.f32 %v2891, %v2931
        %v2948 = vadd.f32 %v2892, %v2931
        %v2949 = vadd.f32 %v2893, %v2931
        %v2950 = vadd.f32 %v2894, %v2931
        %v2951 = vadd.f32 %v2895, %v2931
        %v2952 = vadd.f32 %v2896, %v2931
        %v2953 = vadd.f32 %v2897, %v2931
        %v2954 = vadd.f32 %v2898, %v2931
        %v2955 = vadd.f32 %v2899, %v2931
        %v2956 = vadd.f32 %v2900, %v2931
        %v2957 = vadd.f32 %v2901, %v2931
        %v2958 = vadd.f32 %v2902, %v2931
        %v2959 = vadd.f32 %v2903, %v2931
        %v2960 = vadd.f32 %v2904, %v2931
        %v2961 = vadd.f32 %v2905, %v2931
        %v2962 = vadd.f32 %v2906, %v2931
        %v2963 = vadd.f32 %v2907, %v2931
        %v2964 = vadd.f32 %v2908, %v2931
        %v2965 = vadd.f32 %v2909, %v2931
        %v2966 = vadd.f32 %v2910, %v2931
        %v2967 = vadd.f32 %v2911, %v2931
        %v2968 = vadd.f32 %v2912, %v2931
        %v2969 = vadd.f32 %v2913, %v2931
        %v2970 = vadd.f32 %v2914, %v2931
        %v2971 = vadd.f32 %v2915, %v2931
        %v2972 = vadd.f32 %v2916, %v2931
        %v2973 = vadd.f32 %v2917, %v2931
        %v2974 = vadd.f32 %v2918, %v2931
        %v2975 = vadd.f32 %v2919, %v2931
        %v2976 = vadd.f32 %v2920, %v2931
        %v2977 = vadd.f32 %v2921, %v2931
        %v2978 = vadd.f32 %v2922, %v2931
        %v2979 = vadd.f32 %v2923, %v2931
        %v2980 = vadd.f32 %v2924, %v2931
        %v2981 = vadd.f32 %v2925, %v2931
        %v2982 = vmax.f32 %v2933, 0.0
        %v2983 = vmax.f32 %v2934, 0.0
        %v2984 = vmax.f32 %v2935, 0.0
        %v2985 = vmax.f32 %v2936, 0.0
        %v2986 = vmax.f32 %v2937, 0.0
        %v2987 = vmax.f32 %v2938, 0.0
        %v2988 = vmax.f32 %v2939, 0.0
        %v2989 = vmax.f32 %v2940, 0.0
        %v2990 = vmax.f32 %v2941, 0.0
        %v2991 = vmax.f32 %v2942, 0.0
        %v2992 = vmax.f32 %v2943, 0.0
        %v2993 = vmax.f32 %v2944, 0.0
        %v2994 = vmax.f32 %v2945, 0.0
        %v2995 = vmax.f32 %v2946, 0.0
        %v2996 = vmax.f32 %v2947, 0.0
        %v2997 = vmax.f32 %v2948, 0.0
        %v2998 = vmax.f32 %v2949, 0.0
        %v2999 = vmax.f32 %v2950, 0.0
        %v3000 = vmax.f32 %v2951, 0.0
        %v3001 = vmax.f32 %v2952, 0.0
        %v3002 = vmax.f32 %v2953, 0.0
        %v3003 = vmax.f32 %v2954, 0.0
        %v3004 = vmax.f32 %v2955, 0.0
        %v3005 = vmax.f32 %v2956, 0.0
        %v3006 = vmax.f32 %v2957, 0.0
        %v3007 = vmax.f32 %v2958, 0.0
        %v3008 = vmax.f32 %v2959, 0.0
        %v3009 = vmax.f32 %v2960, 0.0
        %v3010 = vmax.f32 %v2961, 0.0
        %v3011 = vmax.f32 %v2962, 0.0
        %v3012 = vmax.f32 %v2963, 0.0
        %v3013 = vmax.f32 %v2964, 0.0
        %v3014 = vmax.f32 %v2965, 0.0
        %v3015 = vmax.f32 %v2966, 0.0
        %v3016 = vmax.f32 %v2967, 0.0
        %v3017 = vmax.f32 %v2968, 0.0
        %v3018 = vmax.f32 %v2969, 0.0
        %v3019 = vmax.f32 %v2970, 0.0
        %v3020 = vmax.f32 %v2971, 0.0
        %v3021 = vmax.f32 %v2972, 0.0
        %v3022 = vmax.f32 %v2973, 0.0
        %v3023 = vmax.f32 %v2974, 0.0
        %v3024 = vmax.f32 %v2975, 0.0
        %v3025 = vmax.f32 %v2976, 0.0
        %v3026 = vmax.f32 %v2977, 0.0
        %v3027 = vmax.f32 %v2978, 0.0
        %v3028 = vmax.f32 %v2979, 0.0
        %v3029 = vmax.f32 %v2980, 0.0
        %v3030 = vmax.f32 %v2981, 0.0
        %v3031 = vpack.c.bf16 %v2983, %v2982
        %v3032 = vpack.c.bf16 %v2985, %v2984
        %v3033 = vpack.c.bf16 %v2987, %v2986
        %v3034 = vpack.c.bf16 %v2989, %v2988
        %v3035 = vpack.c.bf16 %v2991, %v2990
        %v3036 = vpack.c.bf16 %v2993, %v2992
        %v3037 = vpack.c.bf16 %v2995, %v2994
        %v3038 = vpack.c.bf16 %v2997, %v2996
        %v3039 = vpack.c.bf16 %v2999, %v2998
        %v3040 = vpack.c.bf16 %v3001, %v3000
        %v3041 = vpack.c.bf16 %v3003, %v3002
        %v3042 = vpack.c.bf16 %v3005, %v3004
        %v3043 = vpack.c.bf16 %v3007, %v3006
        %v3044 = vpack.c.bf16 %v3009, %v3008
        %v3045 = vpack.c.bf16 %v3011, %v3010
        %v3046 = vpack.c.bf16 %v3013, %v3012
        %v3047 = vpack.c.bf16 %v3015, %v3014
        %v3048 = vpack.c.bf16 %v3017, %v3016
        %v3049 = vpack.c.bf16 %v3019, %v3018
        %v3050 = vpack.c.bf16 %v3021, %v3020
        %v3051 = vpack.c.bf16 %v3023, %v3022
        %v3052 = vpack.c.bf16 %v3025, %v3024
        %v3053 = vpack.c.bf16 %v3027, %v3026
        %v3054 = vpack.c.bf16 %v3029, %v3028
        %v3055 = vpack.c.bf16 %v3030, %v3030
        %v3081 = vunpack.c.l.b16 %v3031
        %v3082 = vunpack.c.h.b16 %v3031
        %v3083 = vunpack.c.l.b16 %v3032
        %v3084 = vunpack.c.h.b16 %v3032
        %v3085 = vunpack.c.l.b16 %v3033
        %v3086 = vunpack.c.h.b16 %v3033
        %v3087 = vunpack.c.l.b16 %v3034
        %v3088 = vunpack.c.h.b16 %v3034
        %v3089 = vunpack.c.l.b16 %v3035
        %v3090 = vunpack.c.h.b16 %v3035
        %v3091 = vunpack.c.l.b16 %v3036
        %v3092 = vunpack.c.h.b16 %v3036
        %v3093 = vunpack.c.l.b16 %v3037
        %v3094 = vunpack.c.h.b16 %v3037
        %v3095 = vunpack.c.l.b16 %v3038
        %v3096 = vunpack.c.h.b16 %v3038
        %v3097 = vunpack.c.l.b16 %v3039
        %v3098 = vunpack.c.h.b16 %v3039
        %v3099 = vunpack.c.l.b16 %v3040
        %v3100 = vunpack.c.h.b16 %v3040
        %v3101 = vunpack.c.l.b16 %v3041
        %v3102 = vunpack.c.h.b16 %v3041
        %v3103 = vunpack.c.l.b16 %v3042
        %v3104 = vunpack.c.h.b16 %v3042
        %v3105 = vunpack.c.l.b16 %v3043
        %v3106 = vunpack.c.h.b16 %v3043
        %v3107 = vunpack.c.l.b16 %v3044
        %v3108 = vunpack.c.h.b16 %v3044
        %v3109 = vunpack.c.l.b16 %v3045
        %v3110 = vunpack.c.h.b16 %v3045
        %v3111 = vunpack.c.l.b16 %v3046
        %v3112 = vunpack.c.h.b16 %v3046
        %v3113 = vunpack.c.l.b16 %v3047
        %v3114 = vunpack.c.h.b16 %v3047
        %v3115 = vunpack.c.l.b16 %v3048
        %v3116 = vunpack.c.h.b16 %v3048
        %v3117 = vunpack.c.l.b16 %v3049
        %v3118 = vunpack.c.h.b16 %v3049
        %v3119 = vunpack.c.l.b16 %v3050
        %v3120 = vunpack.c.h.b16 %v3050
        %v3121 = vunpack.c.l.b16 %v3051
        %v3122 = vunpack.c.h.b16 %v3051
        %v3123 = vunpack.c.l.b16 %v3052
        %v3124 = vunpack.c.h.b16 %v3052
        %v3125 = vunpack.c.l.b16 %v3053
        %v3126 = vunpack.c.h.b16 %v3053
        %v3127 = vunpack.c.l.b16 %v3054
        %v3128 = vunpack.c.h.b16 %v3054
        %v3129 = vunpack.c.l.b16 %v3055
        %v3130 = vpack.c.b16 %v3081, %v3081
        %v3131 = vpack.c.b16 %v3082, %v3082
        %v3132 = vpack.c.b16 %v3083, %v3083
        %v3133 = vpack.c.b16 %v3084, %v3084
        %v3134 = vpack.c.b16 %v3085, %v3085
        %v3135 = vpack.c.b16 %v3086, %v3086
        %v3136 = vpack.c.b16 %v3087, %v3087
        %v3137 = vpack.c.b16 %v3088, %v3088
        %v3138 = vpack.c.b16 %v3089, %v3089
        %v3139 = vpack.c.b16 %v3090, %v3090
        %v3140 = vpack.c.b16 %v3091, %v3091
        %v3141 = vpack.c.b16 %v3092, %v3092
        %v3142 = vpack.c.b16 %v3093, %v3093
        %v3143 = vpack.c.b16 %v3094, %v3094
        %v3144 = vpack.c.b16 %v3095, %v3095
        %v3145 = vpack.c.b16 %v3096, %v3096
        %v3146 = vpack.c.b16 %v3097, %v3097
        %v3147 = vpack.c.b16 %v3098, %v3098
        %v3148 = vpack.c.b16 %v3099, %v3099
        %v3149 = vpack.c.b16 %v3100, %v3100
        %v3150 = vpack.c.b16 %v3101, %v3101
        %v3151 = vpack.c.b16 %v3102, %v3102
        %v3152 = vpack.c.b16 %v3103, %v3103
        %v3153 = vpack.c.b16 %v3104, %v3104
        %v3154 = vpack.c.b16 %v3105, %v3105
        %v3155 = vpack.c.b16 %v3106, %v3106
        %v3156 = vpack.c.b16 %v3107, %v3107
        %v3157 = vpack.c.b16 %v3108, %v3108
        %v3158 = vpack.c.b16 %v3109, %v3109
        %v3159 = vpack.c.b16 %v3110, %v3110
        %v3160 = vpack.c.b16 %v3111, %v3111
        %v3161 = vpack.c.b16 %v3112, %v3112
        %v3162 = vpack.c.b16 %v3113, %v3113
        %v3163 = vpack.c.b16 %v3114, %v3114
        %v3164 = vpack.c.b16 %v3115, %v3115
        %v3165 = vpack.c.b16 %v3116, %v3116
        %v3166 = vpack.c.b16 %v3117, %v3117
        %v3167 = vpack.c.b16 %v3118, %v3118
        %v3168 = vpack.c.b16 %v3119, %v3119
        %v3169 = vpack.c.b16 %v3120, %v3120
        %v3170 = vpack.c.b16 %v3121, %v3121
        %v3171 = vpack.c.b16 %v3122, %v3122
        %v3172 = vpack.c.b16 %v3123, %v3123
        %v3173 = vpack.c.b16 %v3124, %v3124
        %v3174 = vpack.c.b16 %v3125, %v3125
        %v3175 = vpack.c.b16 %v3126, %v3126
        %v3176 = vpack.c.b16 %v3127, %v3127
        %v3177 = vpack.c.b16 %v3128, %v3128
        %v3178 = vpack.c.b16 %v3129, %v3129
        %3228 = vst [vmem:[%s993] sm:$0xf] %v3130
        %3229 = vst [vmem:[%s993 + $0x4] sm:$0xf] %v3131
        %3230 = vst [vmem:[%s993 + $0x8] sm:$0xf] %v3132
        %3231 = vst [vmem:[%s993 + $0xc] sm:$0xf] %v3133
        %3232 = vst [vmem:[%s993 + $0x10] sm:$0xf] %v3134
        %3233 = vst [vmem:[%s993 + $0x14] sm:$0xf] %v3135
        %3234 = vst [vmem:[%s993 + $0x18] sm:$0xf] %v3136
        %3235 = vst [vmem:[%s993 + $0x1c] sm:$0xf] %v3137
        %3236 = vst [vmem:[%s993 + $0x20] sm:$0xf] %v3138
        %3237 = vst [vmem:[%s993 + $0x24] sm:$0xf] %v3139
        %3238 = vst [vmem:[%s993 + $0x28] sm:$0xf] %v3140
        %3239 = vst [vmem:[%s993 + $0x2c] sm:$0xf] %v3141
        %3240 = vst [vmem:[%s993 + $0x30] sm:$0xf] %v3142
        %3241 = vst [vmem:[%s993 + $0x34] sm:$0xf] %v3143
        %3242 = vst [vmem:[%s993 + $0x38] sm:$0xf] %v3144
        %3243 = vst [vmem:[%s993 + $0x3c] sm:$0xf] %v3145
        %3244 = vst [vmem:[%s993 + $0x40] sm:$0xf] %v3146
        %3245 = vst [vmem:[%s993 + $0x44] sm:$0xf] %v3147
        %3246 = vst [vmem:[%s993 + $0x48] sm:$0xf] %v3148
        %3247 = vst [vmem:[%s993 + $0x4c] sm:$0xf] %v3149
        %3248 = vst [vmem:[%s993 + $0x50] sm:$0xf] %v3150
        %3249 = vst [vmem:[%s993 + $0x54] sm:$0xf] %v3151
        %3250 = vst [vmem:[%s993 + $0x58] sm:$0xf] %v3152
        %3251 = vst [vmem:[%s993 + $0x5c] sm:$0xf] %v3153
        %3252 = vst [vmem:[%s993 + $0x60] sm:$0xf] %v3154
        %3253 = vst [vmem:[%s993 + $0x64] sm:$0xf] %v3155
        %3254 = vst [vmem:[%s993 + $0x68] sm:$0xf] %v3156
        %3255 = vst [vmem:[%s993 + $0x6c] sm:$0xf] %v3157
        %3256 = vst [vmem:[%s993 + $0x70] sm:$0xf] %v3158
        %3257 = vst [vmem:[%s993 + $0x74] sm:$0xf] %v3159
        %3258 = vst [vmem:[%s993 + $0x78] sm:$0xf] %v3160
        %3259 = vst [vmem:[%s993 + $0x7c] sm:$0xf] %v3161
        %3260 = vst [vmem:[%s993 + $0x80] sm:$0xf] %v3162
        %3261 = vst [vmem:[%s993 + $0x84] sm:$0xf] %v3163
        %3262 = vst [vmem:[%s993 + $0x88] sm:$0xf] %v3164
        %3263 = vst [vmem:[%s993 + $0x8c] sm:$0xf] %v3165
        %3264 = vst [vmem:[%s993 + $0x90] sm:$0xf] %v3166
        %3265 = vst [vmem:[%s993 + $0x94] sm:$0xf] %v3167
        %3266 = vst [vmem:[%s993 + $0x98] sm:$0xf] %v3168
        %3267 = vst [vmem:[%s993 + $0x9c] sm:$0xf] %v3169
        %3268 = vst [vmem:[%s993 + $0xa0] sm:$0xf] %v3170
        %3269 = vst [vmem:[%s993 + $0xa4] sm:$0xf] %v3171
        %3270 = vst [vmem:[%s993 + $0xa8] sm:$0xf] %v3172
        %3271 = vst [vmem:[%s993 + $0xac] sm:$0xf] %v3173
        %3272 = vst [vmem:[%s993 + $0xb0] sm:$0xf] %v3174
        %3273 = vst [vmem:[%s993 + $0xb4] sm:$0xf] %v3175
        %3274 = vst [vmem:[%s993 + $0xb8] sm:$0xf] %v3176
        %3275 = vst [vmem:[%s993 + $0xbc] sm:$0xf] %v3177
        %3276 = vst [vmem:[%s993 + $0xc0] sm:$0xf] %v3178
        %s3277 = smul.u32 49, %s14
        %p3278 = scmp.lt.s32.totalorder %s3277, 97
        %s3279 = scalar_select %p3278, %s3277, 97
        %s3280 = smul.addr %s3279, 4
        %s3281 = scalar_lea.vmem %s3, %s3280
        // Predicated region
        $region74: #{student_cnn_cifar10_forward.3} parent=68 // pred_check
          %p3282 = pneg %p100
        $region75: #{student_cnn_cifar10_forward.3} parent=68 // pred_check_branch
          %3284 = sbr.rel (%p3282) target = $region77
        $region76: #{student_cnn_cifar10_forward.3} parent=68 // pred_region
          %s3285 = smul.u32 49, %s14
        $region77: #{student_cnn_cifar10_forward.3} parent=68 // pred_fallthru
          _
      $region69: #{student_cnn_cifar10_forward.3} parent=5 // pred_fallthru
        _
      %p3286 = scmp.le.s32.totalorder 2, %s9
      // Predicated region
      $region78: #{student_cnn_cifar10_forward.3} parent=5 // pred_check
        %p3287 = pneg %p3286
      $region79: #{student_cnn_cifar10_forward.3} parent=5 // pred_check_branch
        %3289 = sbr.rel (%p3287) target = $region81
      $region80: #{student_cnn_cifar10_forward.3} parent=5 // pred_region
        %s3290 = ssub.s32 %s9, 2
        // Predicated region
        $region82: #{student_cnn_cifar10_forward.3} parent=80 // pred_check
          %p3291 = pneg %p106
        $region83: #{student_cnn_cifar10_forward.3} parent=80 // pred_check_branch
          %3293 = sbr.rel (%p3291) target = $region85
        $region84: #{student_cnn_cifar10_forward.3} parent=80 // pred_region
          %s3294 = smul.u32 49, %s15
          %p3295 = scmp.lt.s32.totalorder %s3294, 97
          %s3296 = scalar_select %p3295, %s3294, 97
          %s3297 = smul.addr %s3296, 4
          %s3298 = scalar_lea.vmem %s3, %s3297
        $region85: #{student_cnn_cifar10_forward.3} parent=80 // pred_fallthru
          _
      $region81: #{student_cnn_cifar10_forward.3} parent=5 // pred_fallthru
        _
    $region6: #{student_cnn_cifar10_forward.3} parent=1 // loop_footer
      %s13 = sadd.s32 1, %s9
    $region7: #{student_cnn_cifar10_forward.3} parent=1 // loop_footer_branch
      %8 = sbr.rel target = $region3
    $region8: #{student_cnn_cifar10_forward.3} parent=1 // loop_exit
      _

// kernel: student_cnn_cifar10_forward.4
$region0: #{student_cnn_cifar10_forward.4}
  #allocation0 [shape = 'u32[]', space=smem, size = 0x4, offset = 0x4, fixed_abs, tag = 'smem constant byte address 0x4 - core index']
  #allocation1 [shape = 'u32[144,128]{1,0:T(1,128)}', space=vmem, size = 0x12000, scoped, tag = 'internal scratch']
  %s0 = inlined_call_operand.vmem [shape: bf16[4,112,512], index: 0, kind: input, shape index: {}]
  %s1 = inlined_call_operand.vmem [shape: bf16[512,128], index: 1, kind: input, shape index: {}]
  %s2 = inlined_call_operand.vmem [shape: f32[1,128], index: 2, kind: input, shape index: {}]
  %s3 = inlined_call_operand.vmem [shape: bf16[112,128], index: 3, kind: output, shape index: {}]
  %s4 = sld [smem:[#allocation0]]
  $region68: #{student_cnn_cifar10_forward.4} parent=0
    _
  %s6 = ssub.s32 1, %s4
  %s7 = scalar_select 0, %s6, %s4
  $region1: #{student_cnn_cifar10_forward.4} parent=0
    #allocation2 [shape = 'u8[458752]{0}', space=vmem, size = 0x70000, scoped, tag = 'input window, operand 0']
    loop: start=0, step=1, limit=4
    $region2: #{student_cnn_cifar10_forward.4} parent=1 // loop_pre_header
      _
    $region3: #{student_cnn_cifar10_forward.4} parent=1 // loop_header
      %s9 = sphi 0, %s13
      %p10 = scmp.ge.s32.totalorder %s9, 4
      %s19 = sphi 0, %s21
      %s22 = sphi 0, %s19
      %s23 = sphi 0, %s22
      %s39 = sphi 0, %s23
      %s43 = sphi 0, %s43
      %s45 = sphi 0, %s43
      %s46 = sphi 0, %s45
      %s60 = sphi 0, %s46
      %s64 = sphi 0, %s64
      %s66 = sphi 0, %s64
      %s67 = sphi 0, %s66
      %s81 = sphi 0, %s67
      %s87 = sphi 0, %s89
      %s90 = sphi 0, %s87
      %s91 = sphi 0, %s90
      %s107 = sphi 0, %s91
    $region4: #{student_cnn_cifar10_forward.4} parent=1 // loop_header_branch
      %12 = sbr.rel (%p10) target = $region8
    $region5: #{student_cnn_cifar10_forward.4} parent=1 // loop_body
      %s14 = ssub.s32 %s9, 1
      %s15 = ssub.s32 %s9, 2
      %s16 = sadd.s32 %s9, 1
      %s17 = ssub.s32 %s9, %s16
      %p18 = scmp.eq.s32.totalorder %s17, 0
      %s20 = sadd.s32 %s19, 1
      %s21 = scalar_select %p18, %s19, %s20
      %p24 = pneg %p18
      %p25 = scmp.eq.s32.totalorder %s9, 1
      %p26 = por %p24, %p25
      %p27 = scmp.ne.s32.totalorder %s19, %s22
      %p28 = scmp.eq.s32.totalorder %s9, 0
      %p29 = por %p27, %p28
      %p30 = scmp.ne.s32.totalorder %s19, %s22
      %p31 = scmp.eq.s32.totalorder %s14, 1
      %p32 = por %p30, %p31
      %p33 = scmp.ne.s32.totalorder %s22, %s23
      %p34 = scmp.eq.s32.totalorder %s14, 0
      %p35 = por %p33, %p34
      %p36 = scmp.ne.s32.totalorder %s22, %s23
      %p37 = scmp.eq.s32.totalorder %s15, 1
      %p38 = por %p36, %p37
      %p40 = scmp.ne.s32.totalorder %s23, %s39
      %p41 = scmp.eq.s32.totalorder %s15, 0
      %p42 = por %p40, %p41
      %s44 = sadd.s32 %s43, 1
      %p47 = scmp.eq.s32.totalorder %s9, 1
      %p48 = scmp.ne.s32.totalorder %s43, %s45
      %p49 = scmp.eq.s32.totalorder %s9, 0
      %p50 = por %p48, %p49
      %p51 = scmp.ne.s32.totalorder %s43, %s45
      %p52 = scmp.eq.s32.totalorder %s14, 1
      %p53 = por %p51, %p52
      %p54 = scmp.ne.s32.totalorder %s45, %s46
      %p55 = scmp.eq.s32.totalorder %s14, 0
      %p56 = por %p54, %p55
      %p57 = scmp.ne.s32.totalorder %s45, %s46
      %p58 = scmp.eq.s32.totalorder %s15, 1
      %p59 = por %p57, %p58
      %p61 = scmp.ne.s32.totalorder %s46, %s60
      %p62 = scmp.eq.s32.totalorder %s15, 0
      %p63 = por %p61, %p62
      %s65 = sadd.s32 %s64, 1
      %p68 = scmp.eq.s32.totalorder %s9, 1
      %p69 = scmp.ne.s32.totalorder %s64, %s66
      %p70 = scmp.eq.s32.totalorder %s9, 0
      %p71 = por %p69, %p70
      %p72 = scmp.ne.s32.totalorder %s64, %s66
      %p73 = scmp.eq.s32.totalorder %s14, 1
      %p74 = por %p72, %p73
      %p75 = scmp.ne.s32.totalorder %s66, %s67
      %p76 = scmp.eq.s32.totalorder %s14, 0
      %p77 = por %p75, %p76
      %p78 = scmp.ne.s32.totalorder %s66, %s67
      %p79 = scmp.eq.s32.totalorder %s15, 1
      %p80 = por %p78, %p79
      %p82 = scmp.ne.s32.totalorder %s67, %s81
      %p83 = scmp.eq.s32.totalorder %s15, 0
      %p84 = por %p82, %p83
      %s85 = ssub.s32 %s9, %s16
      %p86 = scmp.eq.s32.totalorder %s85, 0
      %s88 = sadd.s32 %s87, 1
      %s89 = scalar_select %p86, %s87, %s88
      %p92 = pneg %p86
      %p93 = scmp.eq.s32.totalorder %s9, 1
      %p94 = por %p92, %p93
      %p95 = scmp.ne.s32.totalorder %s87, %s90
      %p96 = scmp.eq.s32.totalorder %s9, 0
      %p97 = por %p95, %p96
      %p98 = scmp.ne.s32.totalorder %s87, %s90
      %p99 = scmp.eq.s32.totalorder %s14, 1
      %p100 = por %p98, %p99
      %p101 = scmp.ne.s32.totalorder %s90, %s91
      %p102 = scmp.eq.s32.totalorder %s14, 0
      %p103 = por %p101, %p102
      %p104 = scmp.ne.s32.totalorder %s90, %s91
      %p105 = scmp.eq.s32.totalorder %s15, 1
      %p106 = por %p104, %p105
      %p108 = scmp.ne.s32.totalorder %s91, %s107
      %p109 = scmp.eq.s32.totalorder %s15, 0
      %p110 = por %p108, %p109
      %p111 = scmp.le.s32.totalorder 1, %s9
      %p112 = scmp.lt.s32.totalorder %s9, 3
      %p113 = pnand %p111, %p112
      %p114 = pneg %p113
      // Predicated region
      $region9: #{student_cnn_cifar10_forward.4} parent=5 // pred_check
        _
      $region10: #{student_cnn_cifar10_forward.4} parent=5 // pred_check_branch
        %116 = sbr.rel (%p113) target = $region12
      $region11: #{student_cnn_cifar10_forward.4} parent=5 // pred_region
        %s117 = ssub.s32 %s9, 1
        // Predicated region
        $region13: #{student_cnn_cifar10_forward.4} parent=11 // pred_check
          %p118 = pneg %p56
        $region14: #{student_cnn_cifar10_forward.4} parent=11 // pred_check_branch
          %120 = sbr.rel (%p118) target = $region16
        $region15: #{student_cnn_cifar10_forward.4} parent=11 // pred_region
          _
        $region16: #{student_cnn_cifar10_forward.4} parent=11 // pred_fallthru
          _
        // Predicated region
        $region17: #{student_cnn_cifar10_forward.4} parent=11 // pred_check
          %p121 = pneg %p77
        $region18: #{student_cnn_cifar10_forward.4} parent=11 // pred_check_branch
          %123 = sbr.rel (%p121) target = $region20
        $region19: #{student_cnn_cifar10_forward.4} parent=11 // pred_region
          _
        $region20: #{student_cnn_cifar10_forward.4} parent=11 // pred_fallthru
          _
      $region12: #{student_cnn_cifar10_forward.4} parent=5 // pred_fallthru
        _
      %p124 = scmp.lt.s32.totalorder %s9, 2
      // Predicated region
      $region21: #{student_cnn_cifar10_forward.4} parent=5 // pred_check
        %p125 = pneg %p124
      $region22: #{student_cnn_cifar10_forward.4} parent=5 // pred_check_branch
        %127 = sbr.rel (%p125) target = $region24
      $region23: #{student_cnn_cifar10_forward.4} parent=5 // pred_region
        // Predicated region
        $region25: #{student_cnn_cifar10_forward.4} parent=23 // pred_check
          %p128 = pneg %p29
        $region26: #{student_cnn_cifar10_forward.4} parent=23 // pred_check_branch
          %130 = sbr.rel (%p128) target = $region28
        $region27: #{student_cnn_cifar10_forward.4} parent=23 // pred_region
          %s131 = sand.u32 %s19, 1
          %s132 = sand.u32 %s19, 1
          %s133 = smul.addr %s132, 448
          %s134 = scalar_lea.vmem [#allocation2], %s133
          %s135 = smul.u32 7, %s9
          %s136 = smul.addr %s135, 4
          %s137 = smul.addr %s136, 4
          %s138 = scalar_lea.vmem %s0, %s137
          // Predicated region
          $region29: #{student_cnn_cifar10_forward.4} parent=27 // pred_check
            _
          $region30: #{student_cnn_cifar10_forward.4} parent=27 // pred_check_branch
            %140 = sbr.rel (0) target = $region32
          $region31: #{student_cnn_cifar10_forward.4} parent=27 // pred_region
            // Predicated region
            $region33: #{student_cnn_cifar10_forward.4} parent=31 // pred_check
              _
            $region34: #{student_cnn_cifar10_forward.4} parent=31 // pred_check_branch
              %142 = sbr.rel (0) target = $region36
            $region35: #{student_cnn_cifar10_forward.4} parent=31 // pred_region
              loop: start=0, step=1, limit=1
              $region37: #{student_cnn_cifar10_forward.4} parent=35 // loop_pre_header
                _
              $region38: #{student_cnn_cifar10_forward.4} parent=35 // loop_header
                %s144 = sphi 0, %s148
                %p145 = scmp.ge.s32.totalorder %s144, 1
                %s149 = sphi %s138, %s138
                %s150 = sphi %s134, %s134
              $region39: #{student_cnn_cifar10_forward.4} parent=35 // loop_header_branch
                %147 = sbr.rel (%p145) target = $region43
              $region40: #{student_cnn_cifar10_forward.4} parent=35 // loop_body
                %v151 = vld [vmem:[%s149] sm:$0xff]
                %152 = vst [vmem:[%s150] sm:$0xff] %v151
                %v153 = vld [vmem:[%s149 + $0x8] sm:$0xff]
                %154 = vst [vmem:[%s150 + $0x8] sm:$0xff] %v153
                %v155 = vld [vmem:[%s149 + $0x10] sm:$0xff]
                %156 = vst [vmem:[%s150 + $0x10] sm:$0xff] %v155
                %v157 = vld [vmem:[%s149 + $0x18] sm:$0xff]
                %158 = vst [vmem:[%s150 + $0x18] sm:$0xff] %v157
                %v159 = vld [vmem:[%s149 + $0x20] sm:$0xff]
                %160 = vst [vmem:[%s150 + $0x20] sm:$0xff] %v159
                %v161 = vld [vmem:[%s149 + $0x28] sm:$0xff]
                %162 = vst [vmem:[%s150 + $0x28] sm:$0xff] %v161
                %v163 = vld [vmem:[%s149 + $0x30] sm:$0xff]
                %164 = vst [vmem:[%s150 + $0x30] sm:$0xff] %v163
                %v165 = vld [vmem:[%s149 + $0x38] sm:$0xff]
                %166 = vst [vmem:[%s150 + $0x38] sm:$0xff] %v165
                %v167 = vld [vmem:[%s149 + $0x40] sm:$0xff]
                %168 = vst [vmem:[%s150 + $0x40] sm:$0xff] %v167
                %v169 = vld [vmem:[%s149 + $0x48] sm:$0xff]
                %170 = vst [vmem:[%s150 + $0x48] sm:$0xff] %v169
                %v171 = vld [vmem:[%s149 + $0x50] sm:$0xff]
                %172 = vst [vmem:[%s150 + $0x50] sm:$0xff] %v171
                %v173 = vld [vmem:[%s149 + $0x58] sm:$0xff]
                %174 = vst [vmem:[%s150 + $0x58] sm:$0xff] %v173
                %v175 = vld [vmem:[%s149 + $0x60] sm:$0xff]
                %176 = vst [vmem:[%s150 + $0x60] sm:$0xff] %v175
                %v177 = vld [vmem:[%s149 + $0x68] sm:$0xff]
                %178 = vst [vmem:[%s150 + $0x68] sm:$0xff] %v177
                %v179 = vld [vmem:[%s149 + $0xe0] sm:$0xff]
                %180 = vst [vmem:[%s150 + $0x70] sm:$0xff] %v179
                %v181 = vld [vmem:[%s149 + $0xe8] sm:$0xff]
                %182 = vst [vmem:[%s150 + $0x78] sm:$0xff] %v181
                %v183 = vld [vmem:[%s149 + $0xf0] sm:$0xff]
                %184 = vst [vmem:[%s150 + $0x80] sm:$0xff] %v183
                %v185 = vld [vmem:[%s149 + $0xf8] sm:$0xff]
                %186 = vst [vmem:[%s150 + $0x88] sm:$0xff] %v185
                %v187 = vld [vmem:[%s149 + $0x100] sm:$0xff]
                %188 = vst [vmem:[%s150 + $0x90] sm:$0xff] %v187
                %v189 = vld [vmem:[%s149 + $0x108] sm:$0xff]
                %190 = vst [vmem:[%s150 + $0x98] sm:$0xff] %v189
                %v191 = vld [vmem:[%s149 + $0x110] sm:$0xff]
                %192 = vst [vmem:[%s150 + $0xa0] sm:$0xff] %v191
                %v193 = vld [vmem:[%s149 + $0x118] sm:$0xff]
                %194 = vst [vmem:[%s150 + $0xa8] sm:$0xff] %v193
                %v195 = vld [vmem:[%s149 + $0x120] sm:$0xff]
                %196 = vst [vmem:[%s150 + $0xb0] sm:$0xff] %v195
                %v197 = vld [vmem:[%s149 + $0x128] sm:$0xff]
                %198 = vst [vmem:[%s150 + $0xb8] sm:$0xff] %v197
                %v199 = vld [vmem:[%s149 + $0x130] sm:$0xff]
                %200 = vst [vmem:[%s150 + $0xc0] sm:$0xff] %v199
                %v201 = vld [vmem:[%s149 + $0x138] sm:$0xff]
                %202 = vst [vmem:[%s150 + $0xc8] sm:$0xff] %v201
                %v203 = vld [vmem:[%s149 + $0x140] sm:$0xff]
                %204 = vst [vmem:[%s150 + $0xd0] sm:$0xff] %v203
                %v205 = vld [vmem:[%s149 + $0x148] sm:$0xff]
                %206 = vst [vmem:[%s150 + $0xd8] sm:$0xff] %v205
                %v207 = vld [vmem:[%s149 + $0x1c0] sm:$0xff]
                %208 = vst [vmem:[%s150 + $0xe0] sm:$0xff] %v207
                %v209 = vld [vmem:[%s149 + $0x1c8] sm:$0xff]
                %210 = vst [vmem:[%s150 + $0xe8] sm:$0xff] %v209
                %v211 = vld [vmem:[%s149 + $0x1d0] sm:$0xff]
                %212 = vst [vmem:[%s150 + $0xf0] sm:$0xff] %v211
                %v213 = vld [vmem:[%s149 + $0x1d8] sm:$0xff]
                %214 = vst [vmem:[%s150 + $0xf8] sm:$0xff] %v213
                %v215 = vld [vmem:[%s149 + $0x1e0] sm:$0xff]
                %216 = vst [vmem:[%s150 + $0x100] sm:$0xff] %v215
                %v217 = vld [vmem:[%s149 + $0x1e8] sm:$0xff]
                %218 = vst [vmem:[%s150 + $0x108] sm:$0xff] %v217
                %v219 = vld [vmem:[%s149 + $0x1f0] sm:$0xff]
                %220 = vst [vmem:[%s150 + $0x110] sm:$0xff] %v219
                %v221 = vld [vmem:[%s149 + $0x1f8] sm:$0xff]
                %222 = vst [vmem:[%s150 + $0x118] sm:$0xff] %v221
                %v223 = vld [vmem:[%s149 + $0x200] sm:$0xff]
                %224 = vst [vmem:[%s150 + $0x120] sm:$0xff] %v223
                %v225 = vld [vmem:[%s149 + $0x208] sm:$0xff]
                %226 = vst [vmem:[%s150 + $0x128] sm:$0xff] %v225
                %v227 = vld [vmem:[%s149 + $0x210] sm:$0xff]
                %228 = vst [vmem:[%s150 + $0x130] sm:$0xff] %v227
                %v229 = vld [vmem:[%s149 + $0x218] sm:$0xff]
                %230 = vst [vmem:[%s150 + $0x138] sm:$0xff] %v229
                %v231 = vld [vmem:[%s149 + $0x220] sm:$0xff]
                %232 = vst [vmem:[%s150 + $0x140] sm:$0xff] %v231
                %v233 = vld [vmem:[%s149 + $0x228] sm:$0xff]
                %234 = vst [vmem:[%s150 + $0x148] sm:$0xff] %v233
                %v235 = vld [vmem:[%s149 + $0x2a0] sm:$0xff]
                %236 = vst [vmem:[%s150 + $0x150] sm:$0xff] %v235
                %v237 = vld [vmem:[%s149 + $0x2a8] sm:$0xff]
                %238 = vst [vmem:[%s150 + $0x158] sm:$0xff] %v237
                %v239 = vld [vmem:[%s149 + $0x2b0] sm:$0xff]
                %240 = vst [vmem:[%s150 + $0x160] sm:$0xff] %v239
                %v241 = vld [vmem:[%s149 + $0x2b8] sm:$0xff]
                %242 = vst [vmem:[%s150 + $0x168] sm:$0xff] %v241
                %v243 = vld [vmem:[%s149 + $0x2c0] sm:$0xff]
                %244 = vst [vmem:[%s150 + $0x170] sm:$0xff] %v243
                %v245 = vld [vmem:[%s149 + $0x2c8] sm:$0xff]
                %246 = vst [vmem:[%s150 + $0x178] sm:$0xff] %v245
                %v247 = vld [vmem:[%s149 + $0x2d0] sm:$0xff]
                %248 = vst [vmem:[%s150 + $0x180] sm:$0xff] %v247
                %v249 = vld [vmem:[%s149 + $0x2d8] sm:$0xff]
                %250 = vst [vmem:[%s150 + $0x188] sm:$0xff] %v249
                %v251 = vld [vmem:[%s149 + $0x2e0] sm:$0xff]
                %252 = vst [vmem:[%s150 + $0x190] sm:$0xff] %v251
                %v253 = vld [vmem:[%s149 + $0x2e8] sm:$0xff]
                %254 = vst [vmem:[%s150 + $0x198] sm:$0xff] %v253
                %v255 = vld [vmem:[%s149 + $0x2f0] sm:$0xff]
                %256 = vst [vmem:[%s150 + $0x1a0] sm:$0xff] %v255
                %v257 = vld [vmem:[%s149 + $0x2f8] sm:$0xff]
                %258 = vst [vmem:[%s150 + $0x1a8] sm:$0xff] %v257
                %v259 = vld [vmem:[%s149 + $0x300] sm:$0xff]
                %260 = vst [vmem:[%s150 + $0x1b0] sm:$0xff] %v259
                %v261 = vld [vmem:[%s149 + $0x308] sm:$0xff]
                %262 = vst [vmem:[%s150 + $0x1b8] sm:$0xff] %v261
              $region41: #{student_cnn_cifar10_forward.4} parent=35 // loop_footer
                %s148 = sadd.s32 1, %s144
              $region42: #{student_cnn_cifar10_forward.4} parent=35 // loop_footer_branch
                %143 = sbr.rel target = $region38
              $region43: #{student_cnn_cifar10_forward.4} parent=35 // loop_exit
                _
            $region36: #{student_cnn_cifar10_forward.4} parent=31 // pred_fallthru
              _
            // Predicated region
            $region44: #{student_cnn_cifar10_forward.4} parent=31 // pred_check
              _
            $region45: #{student_cnn_cifar10_forward.4} parent=31 // pred_check_branch
              %264 = sbr.rel target = $region47
            $region46: #{student_cnn_cifar10_forward.4} parent=31 // pred_region
              _
            $region47: #{student_cnn_cifar10_forward.4} parent=31 // pred_fallthru
              _
          $region32: #{student_cnn_cifar10_forward.4} parent=27 // pred_fallthru
            _
          %265 = vnop
        $region28: #{student_cnn_cifar10_forward.4} parent=23 // pred_fallthru
          _
      $region24: #{student_cnn_cifar10_forward.4} parent=5 // pred_fallthru
        _
      %p266 = scmp.le.s32.totalorder 1, %s9
      %p267 = scmp.lt.s32.totalorder %s9, 3
      %p268 = pnand %p266, %p267
      %p269 = pneg %p268
      // Predicated region
      $region48: #{student_cnn_cifar10_forward.4} parent=5 // pred_check
        _
      $region49: #{student_cnn_cifar10_forward.4} parent=5 // pred_check_branch
        %271 = sbr.rel (%p268) target = $region51
      $region50: #{student_cnn_cifar10_forward.4} parent=5 // pred_region
        %s272 = ssub.s32 %s9, 1
        %s273 = sand.u32 %s22, 1
        %s274 = sand.u32 %s22, 1
        %s275 = smul.addr %s274, 448
        %s276 = scalar_lea.vmem [#allocation2], %s275
        // Predicated region
        $region52: #{student_cnn_cifar10_forward.4} parent=50 // pred_check
          %p277 = pneg %p35
        $region53: #{student_cnn_cifar10_forward.4} parent=50 // pred_check_branch
          %279 = sbr.rel (%p277) target = $region55
        $region54: #{student_cnn_cifar10_forward.4} parent=50 // pred_region
          _
        $region55: #{student_cnn_cifar10_forward.4} parent=50 // pred_fallthru
          _
        %s280 = sand.u32 %s22, 1
        %s281 = sand.u32 %s22, 1
        %s282 = smul.addr %s281, 448
        %s283 = scalar_lea.vmem [#allocation2], %s282
        %p284 = pneg %p35
        %p285 = pneg %p32
        %p286 = pneg %p56
        %p287 = pneg %p53
        %p288 = pneg %p77
        %p289 = pneg %p74
        %p290 = pneg %p103
        %p291 = pneg %p100
        %s292 = smul.u32 7, %s14
        %p293 = scmp.lt.s32.totalorder %s292, 13
        %s294 = scalar_select %p293, %s292, 13
        %s295 = smul.addr %s294, 4
        %s296 = scalar_lea.vmem %s3, %s295
        %s297 = smul.u32 7, %s14
        %s298 = smul.u32 7, %s14
        %p299 = scmp.lt.s32.totalorder %s298, 13
        %s300 = scalar_select %p299, %s298, 13
        %s301 = smul.addr %s300, 4
        %s302 = scalar_lea.vmem %s3, %s301
        %s303 = smul.u32 7, %s14
        %v305 = vld [vmem:[%s1] sm:$0xf]
        %v306 = vld [vmem:[%s1 + $0x4] sm:$0xf]
        %v307 = vld [vmem:[%s1 + $0x8] sm:$0xf]
        %v308 = vld [vmem:[%s1 + $0xc] sm:$0xf]
        %v309 = vld [vmem:[%s1 + $0x10] sm:$0xf]
        %v310 = vld [vmem:[%s1 + $0x14] sm:$0xf]
        %v311 = vld [vmem:[%s1 + $0x18] sm:$0xf]
        %v312 = vld [vmem:[%s1 + $0x1c] sm:$0xf]
        %v313 = vld [vmem:[%s1 + $0x20] sm:$0xf]
        %v314 = vld [vmem:[%s1 + $0x24] sm:$0xf]
        %v315 = vld [vmem:[%s1 + $0x28] sm:$0xf]
        %v316 = vld [vmem:[%s1 + $0x2c] sm:$0xf]
        %v317 = vld [vmem:[%s1 + $0x30] sm:$0xf]
        %v318 = vld [vmem:[%s1 + $0x34] sm:$0xf]
        %v319 = vld [vmem:[%s1 + $0x38] sm:$0xf]
        %v320 = vld [vmem:[%s1 + $0x3c] sm:$0xf]
        %v321 = vld [vmem:[%s1 + $0x40] sm:$0xf]
        %v322 = vld [vmem:[%s1 + $0x44] sm:$0xf]
        %v323 = vld [vmem:[%s1 + $0x48] sm:$0xf]
        %v324 = vld [vmem:[%s1 + $0x4c] sm:$0xf]
        %v325 = vld [vmem:[%s1 + $0x50] sm:$0xf]
        %v326 = vld [vmem:[%s1 + $0x54] sm:$0xf]
        %v327 = vld [vmem:[%s1 + $0x58] sm:$0xf]
        %v328 = vld [vmem:[%s1 + $0x5c] sm:$0xf]
        %v329 = vld [vmem:[%s1 + $0x60] sm:$0xf]
        %v330 = vld [vmem:[%s1 + $0x64] sm:$0xf]
        %v331 = vld [vmem:[%s1 + $0x68] sm:$0xf]
        %v332 = vld [vmem:[%s1 + $0x6c] sm:$0xf]
        %v333 = vld [vmem:[%s1 + $0x70] sm:$0xf]
        %v334 = vld [vmem:[%s1 + $0x74] sm:$0xf]
        %v335 = vld [vmem:[%s1 + $0x78] sm:$0xf]
        %v336 = vld [vmem:[%s1 + $0x7c] sm:$0xf]
        %v337 = vld [vmem:[%s1 + $0x80] sm:$0xf]
        %v338 = vld [vmem:[%s1 + $0x84] sm:$0xf]
        %v339 = vld [vmem:[%s1 + $0x88] sm:$0xf]
        %v340 = vld [vmem:[%s1 + $0x8c] sm:$0xf]
        %v341 = vld [vmem:[%s1 + $0x90] sm:$0xf]
        %v342 = vld [vmem:[%s1 + $0x94] sm:$0xf]
        %v343 = vld [vmem:[%s1 + $0x98] sm:$0xf]
        %v344 = vld [vmem:[%s1 + $0x9c] sm:$0xf]
        %v345 = vld [vmem:[%s1 + $0xa0] sm:$0xf]
        %v346 = vld [vmem:[%s1 + $0xa4] sm:$0xf]
        %v347 = vld [vmem:[%s1 + $0xa8] sm:$0xf]
        %v348 = vld [vmem:[%s1 + $0xac] sm:$0xf]
        %v349 = vld [vmem:[%s1 + $0xb0] sm:$0xf]
        %v350 = vld [vmem:[%s1 + $0xb4] sm:$0xf]
        %v351 = vld [vmem:[%s1 + $0xb8] sm:$0xf]
        %v352 = vld [vmem:[%s1 + $0xbc] sm:$0xf]
        %v353 = vld [vmem:[%s1 + $0xc0] sm:$0xf]
        %v354 = vld [vmem:[%s1 + $0xc4] sm:$0xf]
        %v355 = vld [vmem:[%s1 + $0xc8] sm:$0xf]
        %v356 = vld [vmem:[%s1 + $0xcc] sm:$0xf]
        %v357 = vld [vmem:[%s1 + $0xd0] sm:$0xf]
        %v358 = vld [vmem:[%s1 + $0xd4] sm:$0xf]
        %v359 = vld [vmem:[%s1 + $0xd8] sm:$0xf]
        %v360 = vld [vmem:[%s1 + $0xdc] sm:$0xf]
        %v361 = vld [vmem:[%s1 + $0xe0] sm:$0xf]
        %v362 = vld [vmem:[%s1 + $0xe4] sm:$0xf]
        %v363 = vld [vmem:[%s1 + $0xe8] sm:$0xf]
        %v364 = vld [vmem:[%s1 + $0xec] sm:$0xf]
        %v365 = vld [vmem:[%s1 + $0xf0] sm:$0xf]
        %v366 = vld [vmem:[%s1 + $0xf4] sm:$0xf]
        %v367 = vld [vmem:[%s1 + $0xf8] sm:$0xf]
        %v368 = vld [vmem:[%s1 + $0xfc] sm:$0xf]
        %v369 = vld [vmem:[%s276] sm:$0xff]
        %v370 = vld [vmem:[%s276 + $0x8] sm:$0xff]
        %v371 = vld [vmem:[%s276 + $0x10] sm:$0xff]
        %v372 = vld [vmem:[%s276 + $0x18] sm:$0xff]
        %v373 = vld [vmem:[%s276 + $0x20] sm:$0xff]
        %v374 = vld [vmem:[%s276 + $0x28] sm:$0xff]
        %v375 = vld [vmem:[%s276 + $0x30] sm:$0xff]
        %v376 = vld [vmem:[%s276 + $0x38] sm:$0xff]
        %v377 = vld [vmem:[%s276 + $0x40] sm:$0xff]
        %v378 = vld [vmem:[%s276 + $0x48] sm:$0xff]
        %v379 = vld [vmem:[%s276 + $0x50] sm:$0xff]
        %v380 = vld [vmem:[%s276 + $0x58] sm:$0xff]
        %v381 = vld [vmem:[%s276 + $0x60] sm:$0xff]
        %v382 = vld [vmem:[%s276 + $0x68] sm:$0xff]
        %v397 = vunpack.c.l.b16 %v369
        %v398 = vunpack.c.h.b16 %v369
        %v399 = vunpack.c.l.b16 %v370
        %v400 = vunpack.c.h.b16 %v370
        %v401 = vunpack.c.l.b16 %v371
        %v402 = vunpack.c.h.b16 %v371
        %v403 = vunpack.c.l.b16 %v372
        %v404 = vunpack.c.h.b16 %v372
        %v405 = vunpack.c.l.b16 %v373
        %v406 = vunpack.c.h.b16 %v373
        %v407 = vunpack.c.l.b16 %v374
        %v408 = vunpack.c.h.b16 %v374
        %v409 = vunpack.c.l.b16 %v375
        %v410 = vunpack.c.h.b16 %v375
        %v411 = vunpack.c.l.b16 %v376
        %v412 = vunpack.c.h.b16 %v376
        %v413 = vunpack.c.l.b16 %v377
        %v414 = vunpack.c.h.b16 %v377
        %v415 = vunpack.c.l.b16 %v378
        %v416 = vunpack.c.h.b16 %v378
        %v417 = vunpack.c.l.b16 %v379
        %v418 = vunpack.c.h.b16 %v379
        %v419 = vunpack.c.l.b16 %v380
        %v420 = vunpack.c.h.b16 %v380
        %v421 = vunpack.c.l.b16 %v381
        %v422 = vunpack.c.h.b16 %v381
        %v423 = vunpack.c.l.b16 %v382
        %v424 = vunpack.c.h.b16 %v382
        %v425 = vpack.c.b16 %v401, %v397
        %v426 = vpack.c.b16 %v402, %v398
        %v427 = vpack.c.b16 %v403, %v399
        %v428 = vpack.c.b16 %v404, %v400
        %v429 = vpack.c.b16 %v409, %v405
        %v430 = vpack.c.b16 %v410, %v406
        %v431 = vpack.c.b16 %v411, %v407
        %v432 = vpack.c.b16 %v412, %v408
        %v433 = vpack.c.b16 %v417, %v413
        %v434 = vpack.c.b16 %v418, %v414
        %v435 = vpack.c.b16 %v419, %v415
        %v436 = vpack.c.b16 %v420, %v416
        %v437 = vpack.c.b16 %v421, %v421
        %v438 = vpack.c.b16 %v422, %v422
        %v439 = vpack.c.b16 %v423, %v423
        %v440 = vpack.c.b16 %v424, %v424
        %v521 = vunpack.c.l.b16 %v305
        %v522 = vunpack.c.l.b16 %v306
        %v523 = vunpack.c.l.b16 %v307
        %v524 = vunpack.c.l.b16 %v308
        %v525 = vunpack.c.l.b16 %v309
        %v526 = vunpack.c.l.b16 %v310
        %v527 = vunpack.c.l.b16 %v311
        %v528 = vunpack.c.l.b16 %v312
        %v529 = vunpack.c.l.b16 %v313
        %v530 = vunpack.c.l.b16 %v314
        %v531 = vunpack.c.l.b16 %v315
        %v532 = vunpack.c.l.b16 %v316
        %v533 = vunpack.c.l.b16 %v317
        %v534 = vunpack.c.l.b16 %v318
        %v535 = vunpack.c.l.b16 %v319
        %v536 = vunpack.c.l.b16 %v320
        %v537 = vunpack.c.l.b16 %v321
        %v538 = vunpack.c.l.b16 %v322
        %v539 = vunpack.c.l.b16 %v323
        %v540 = vunpack.c.l.b16 %v324
        %v541 = vunpack.c.l.b16 %v325
        %v542 = vunpack.c.l.b16 %v326
        %v543 = vunpack.c.l.b16 %v327
        %v544 = vunpack.c.l.b16 %v328
        %v545 = vunpack.c.l.b16 %v329
        %v546 = vunpack.c.l.b16 %v330
        %v547 = vunpack.c.l.b16 %v331
        %v548 = vunpack.c.l.b16 %v332
        %v549 = vunpack.c.l.b16 %v333
        %v550 = vunpack.c.l.b16 %v334
        %v551 = vunpack.c.l.b16 %v335
        %v552 = vunpack.c.l.b16 %v336
        %v553 = vunpack.c.l.b16 %v337
        %v554 = vunpack.c.l.b16 %v338
        %v555 = vunpack.c.l.b16 %v339
        %v556 = vunpack.c.l.b16 %v340
        %v557 = vunpack.c.l.b16 %v341
        %v558 = vunpack.c.l.b16 %v342
        %v559 = vunpack.c.l.b16 %v343
        %v560 = vunpack.c.l.b16 %v344
        %v561 = vunpack.c.l.b16 %v345
        %v562 = vunpack.c.l.b16 %v346
        %v563 = vunpack.c.l.b16 %v347
        %v564 = vunpack.c.l.b16 %v348
        %v565 = vunpack.c.l.b16 %v349
        %v566 = vunpack.c.l.b16 %v350
        %v567 = vunpack.c.l.b16 %v351
        %v568 = vunpack.c.l.b16 %v352
        %v569 = vunpack.c.l.b16 %v353
        %v570 = vunpack.c.l.b16 %v354
        %v571 = vunpack.c.l.b16 %v355
        %v572 = vunpack.c.l.b16 %v356
        %v573 = vunpack.c.l.b16 %v357
        %v574 = vunpack.c.l.b16 %v358
        %v575 = vunpack.c.l.b16 %v359
        %v576 = vunpack.c.l.b16 %v360
        %v577 = vunpack.c.l.b16 %v361
        %v578 = vunpack.c.l.b16 %v362
        %v579 = vunpack.c.l.b16 %v363
        %v580 = vunpack.c.l.b16 %v364
        %v581 = vunpack.c.l.b16 %v365
        %v582 = vunpack.c.l.b16 %v366
        %v583 = vunpack.c.l.b16 %v367
        %v584 = vunpack.c.l.b16 %v368
        %v585 = vpack.c.b16 %v522, %v521
        %v586 = vpack.c.b16 %v524, %v523
        %v587 = vpack.c.b16 %v526, %v525
        %v588 = vpack.c.b16 %v528, %v527
        %v589 = vpack.c.b16 %v530, %v529
        %v590 = vpack.c.b16 %v532, %v531
        %v591 = vpack.c.b16 %v534, %v533
        %v592 = vpack.c.b16 %v536, %v535
        %v593 = vpack.c.b16 %v538, %v537
        %v594 = vpack.c.b16 %v540, %v539
        %v595 = vpack.c.b16 %v542, %v541
        %v596 = vpack.c.b16 %v544, %v543
        %v597 = vpack.c.b16 %v546, %v545
        %v598 = vpack.c.b16 %v548, %v547
        %v599 = vpack.c.b16 %v550, %v549
        %v600 = vpack.c.b16 %v552, %v551
        %v601 = vpack.c.b16 %v554, %v553
        %v602 = vpack.c.b16 %v556, %v555
        %v603 = vpack.c.b16 %v558, %v557
        %v604 = vpack.c.b16 %v560, %v559
        %v605 = vpack.c.b16 %v562, %v561
        %v606 = vpack.c.b16 %v564, %v563
        %v607 = vpack.c.b16 %v566, %v565
        %v608 = vpack.c.b16 %v568, %v567
        %v609 = vpack.c.b16 %v570, %v569
        %v610 = vpack.c.b16 %v572, %v571
        %v611 = vpack.c.b16 %v574, %v573
        %v612 = vpack.c.b16 %v576, %v575
        %v613 = vpack.c.b16 %v578, %v577
        %v614 = vpack.c.b16 %v580, %v579
        %v615 = vpack.c.b16 %v582, %v581
        %v616 = vpack.c.b16 %v584, %v583
        %649 = vmatprep.subr.bf16.mxu0 0
        %650 = vmatpush1.bf16.msra.mxu0 %v585
        %651 = vmatprep.subr.bf16.mxu0 0
        %652 = vmatpush1.bf16.msra.mxu0 %v586
        %653 = vmatprep.subr.bf16.mxu0 0
        %654 = vmatpush1.bf16.msra.mxu0 %v587
        %655 = vmatprep.subr.bf16.mxu0 0
        %656 = vmatpush1.bf16.msra.mxu0 %v588
        %657 = vmatprep.subr.bf16.mxu0 0
        %658 = vmatpush1.bf16.msra.mxu0 %v589
        %659 = vmatprep.subr.bf16.mxu0 0
        %660 = vmatpush1.bf16.msra.mxu0 %v590
        %661 = vmatprep.subr.bf16.mxu0 0
        %662 = vmatpush1.bf16.msra.mxu0 %v591
        %663 = vmatprep.subr.bf16.mxu0 0
        %664 = vmatpush1.bf16.msra.mxu0 %v592
        %665 = vmatprep.subr.bf16.mxu0 0
        %666 = vmatpush1.bf16.msra.mxu0 %v593
        %667 = vmatprep.subr.bf16.mxu0 0
        %668 = vmatpush1.bf16.msra.mxu0 %v594
        %669 = vmatprep.subr.bf16.mxu0 0
        %670 = vmatpush1.bf16.msra.mxu0 %v595
        %671 = vmatprep.subr.bf16.mxu0 0
        %672 = vmatpush1.bf16.msra.mxu0 %v596
        %673 = vmatprep.subr.bf16.mxu0 0
        %674 = vmatpush1.bf16.msra.mxu0 %v597
        %675 = vmatprep.subr.bf16.mxu0 0
        %676 = vmatpush1.bf16.msra.mxu0 %v598
        %677 = vmatprep.subr.bf16.mxu0 0
        %678 = vmatpush1.bf16.msra.mxu0 %v599
        %679 = vmatprep.subr.bf16.mxu0 0
        %680 = vmatpush1.bf16.msra.mxu0 %v600
        %681 = vmatprep.mubr.bf16.mxu0 %v426
        %682 = vmatmul.mubr.bf16.gmra.mrb[0].mxu0 %v425
        %v683 = vpop.f32.mrb[0].mxu0
        %v684 = vadd.f32 0.0, %v683
        %v685 = vpop.f32.mrb[0].mxu0
        %v686 = vpop.f32.mrb[0].mxu0
        %v687 = vadd.f32 0.0, %v686
        %v688 = vpop.f32.mrb[0].mxu0
        %689 = vmatprep.mubr.bf16.mxu0 %v430
        %690 = vmatmul.mubr.bf16.gmra.mrb[0].mxu0 %v429
        %v691 = vpop.f32.mrb[0].mxu0
        %v692 = vadd.f32 0.0, %v691
        %v693 = vpop.f32.mrb[0].mxu0
        %v694 = vpop.f32.mrb[0].mxu0
        %v695 = vadd.f32 0.0, %v694
        %v696 = vpop.f32.mrb[0].mxu0
        %697 = vmatprep.mubr.bf16.mxu0 %v434
        %698 = vmatmul.mubr.bf16.gmra.mrb[0].mxu0 %v433
        %v699 = vpop.f32.mrb[0].mxu0
        %v700 = vadd.f32 0.0, %v699
        %v701 = vpop.f32.mrb[0].mxu0
        %v702 = vpop.f32.mrb[0].mxu0
        %v703 = vadd.f32 0.0, %v702
        %v704 = vpop.f32.mrb[0].mxu0
        %705 = vmatprep.mubr.bf16.mxu0 %v438
        %706 = vmatmul.mubr.bf16.gmra.mrb[0].mxu0 %v437
        %v707 = vpop.f32.mrb[0].mxu0
        %v708 = vadd.f32 0.0, %v707
        %v709 = vpop.f32.mrb[0].mxu0
        %v710 = vpop.f32.mrb[0].mxu0
        %v711 = vpop.f32.mrb[0].mxu0
        %712 = vdwg.mxu0
        %713 = vmatprep.subr.bf16.mxu0 0
        %714 = vmatpush1.bf16.msra.mxu0 %v601
        %715 = vmatprep.subr.bf16.mxu0 0
        %716 = vmatpush1.bf16.msra.mxu0 %v602
        %717 = vmatprep.subr.bf16.mxu0 0
        %718 = vmatpush1.bf16.msra.mxu0 %v603
        %719 = vmatprep.subr.bf16.mxu0 0
        %720 = vmatpush1.bf16.msra.mxu0 %v604
        %721 = vmatprep.subr.bf16.mxu0 0
        %722 = vmatpush1.bf16.msra.mxu0 %v605
        %723 = vmatprep.subr.bf16.mxu0 0
        %724 = vmatpush1.bf16.msra.mxu0 %v606
        %725 = vmatprep.subr.bf16.mxu0 0
        %726 = vmatpush1.bf16.msra.mxu0 %v607
        %727 = vmatprep.subr.bf16.mxu0 0
        %728 = vmatpush1.bf16.msra.mxu0 %v608
        %729 = vmatprep.subr.bf16.mxu0 0
        %730 = vmatpush1.bf16.msra.mxu0 %v609
        %731 = vmatprep.subr.bf16.mxu0 0
        %732 = vmatpush1.bf16.msra.mxu0 %v610
        %733 = vmatprep.subr.bf16.mxu0 0
        %734 = vmatpush1.bf16.msra.mxu0 %v611
        %735 = vmatprep.subr.bf16.mxu0 0
        %736 = vmatpush1.bf16.msra.mxu0 %v612
        %737 = vmatprep.subr.bf16.mxu0 0
        %738 = vmatpush1.bf16.msra.mxu0 %v613
        %739 = vmatprep.subr.bf16.mxu0 0
        %740 = vmatpush1.bf16.msra.mxu0 %v614
        %741 = vmatprep.subr.bf16.mxu0 0
        %742 = vmatpush1.bf16.msra.mxu0 %v615
        %743 = vmatprep.subr.bf16.mxu0 0
        %744 = vmatpush1.bf16.msra.mxu0 %v616
        %745 = vmatprep.mubr.bf16.mxu0 %v428
        %746 = vmatmul.mubr.bf16.gmra.mrb[0].mxu0 %v427
        %v747 = vpop.f32.mrb[0].mxu0
        %v748 = vadd.f32 %v684, %v747
        %v749 = vpop.f32.mrb[0].mxu0
        %v750 = vpop.f32.mrb[0].mxu0
        %v751 = vadd.f32 %v687, %v750
        %v752 = vpop.f32.mrb[0].mxu0
        %753 = vmatprep.mubr.bf16.mxu0 %v432
        %754 = vmatmul.mubr.bf16.gmra.mrb[0].mxu0 %v431
        %v755 = vpop.f32.mrb[0].mxu0
        %v756 = vadd.f32 %v692, %v755
        %v757 = vpop.f32.mrb[0].mxu0
        %v758 = vpop.f32.mrb[0].mxu0
        %v759 = vadd.f32 %v695, %v758
        %v760 = vpop.f32.mrb[0].mxu0
        %761 = vmatprep.mubr.bf16.mxu0 %v436
        %762 = vmatmul.mubr.bf16.gmra.mrb[0].mxu0 %v435
        %v763 = vpop.f32.mrb[0].mxu0
        %v764 = vadd.f32 %v700, %v763
        %v765 = vpop.f32.mrb[0].mxu0
        %v766 = vpop.f32.mrb[0].mxu0
        %v767 = vadd.f32 %v703, %v766
        %v768 = vpop.f32.mrb[0].mxu0
        %769 = vmatprep.mubr.bf16.mxu0 %v440
        %770 = vmatmul.mubr.bf16.gmra.mrb[0].mxu0 %v439
        %v771 = vpop.f32.mrb[0].mxu0
        %v772 = vadd.f32 %v708, %v771
        %v773 = vpop.f32.mrb[0].mxu0
        %v774 = vpop.f32.mrb[0].mxu0
        %v775 = vpop.f32.mrb[0].mxu0
        %776 = vdwg.mxu0
        %s777 = scalar_lea.vmem %s276, 112 [#allocation2]
        %v778 = vld [vmem:[%s777] sm:$0xff]
        %v779 = vld [vmem:[%s777 + $0x8] sm:$0xff]
        %v780 = vld [vmem:[%s777 + $0x10] sm:$0xff]
        %v781 = vld [vmem:[%s777 + $0x18] sm:$0xff]
        %v782 = vld [vmem:[%s777 + $0x20] sm:$0xff]
        %v783 = vld [vmem:[%s777 + $0x28] sm:$0xff]
        %v784 = vld [vmem:[%s777 + $0x30] sm:$0xff]
        %v785 = vld [vmem:[%s777 + $0x38] sm:$0xff]
        %v786 = vld [vmem:[%s777 + $0x40] sm:$0xff]
        %v787 = vld [vmem:[%s777 + $0x48] sm:$0xff]
        %v788 = vld [vmem:[%s777 + $0x50] sm:$0xff]
        %v789 = vld [vmem:[%s777 + $0x58] sm:$0xff]
        %v790 = vld [vmem:[%s777 + $0x60] sm:$0xff]
        %v791 = vld [vmem:[%s777 + $0x68] sm:$0xff]
        %v806 = vunpack.c.l.b16 %v778
        %v807 = vunpack.c.h.b16 %v778
        %v808 = vunpack.c.l.b16 %v779
        %v809 = vunpack.c.h.b16 %v779
        %v810 = vunpack.c.l.b16 %v780
        %v811 = vunpack.c.h.b16 %v780
        %v812 = vunpack.c.l.b16 %v781
        %v813 = vunpack.c.h.b16 %v781
        %v814 = vunpack.c.l.b16 %v782
        %v815 = vunpack.c.h.b16 %v782
        %v816 = vunpack.c.l.b16 %v783
        %v817 = vunpack.c.h.b16 %v783
        %v818 = vunpack.c.l.b16 %v784
        %v819 = vunpack.c.h.b16 %v784
        %v820 = vunpack.c.l.b16 %v785
        %v821 = vunpack.c.h.b16 %v785
        %v822 = vunpack.c.l.b16 %v786
        %v823 = vunpack.c.h.b16 %v786
        %v824 = vunpack.c.l.b16 %v787
        %v825 = vunpack.c.h.b16 %v787
        %v826 = vunpack.c.l.b16 %v788
        %v827 = vunpack.c.h.b16 %v788
        %v828 = vunpack.c.l.b16 %v789
        %v829 = vunpack.c.h.b16 %v789
        %v830 = vunpack.c.l.b16 %v790
        %v831 = vunpack.c.h.b16 %v790
        %v832 = vunpack.c.l.b16 %v791
        %v833 = vunpack.c.h.b16 %v791
        %v834 = vpack.c.b16 %v810, %v806
        %v835 = vpack.c.b16 %v811, %v807
        %v836 = vpack.c.b16 %v812, %v808
        %v837 = vpack.c.b16 %v813, %v809
        %v838 = vpack.c.b16 %v818, %v814
        %v839 = vpack.c.b16 %v819, %v815
        %v840 = vpack.c.b16 %v820, %v816
        %v841 = vpack.c.b16 %v821, %v817
        %v842 = vpack.c.b16 %v826, %v822
        %v843 = vpack.c.b16 %v827, %v823
        %v844 = vpack.c.b16 %v828, %v824
        %v845 = vpack.c.b16 %v829, %v825
        %v846 = vpack.c.b16 %v830, %v830
        %v847 = vpack.c.b16 %v831, %v831
        %v848 = vpack.c.b16 %v832, %v832
        %v849 = vpack.c.b16 %v833, %v833
        %866 = vmatprep.subr.bf16.mxu0 0
        %867 = vmatpush1.bf16.msra.mxu0 %v585
        %868 = vmatprep.subr.bf16.mxu0 0
        %869 = vmatpush1.bf16.msra.mxu0 %v586
        %870 = vmatprep.subr.bf16.mxu0 0
        %871 = vmatpush1.bf16.msra.mxu0 %v587
        %872 = vmatprep.subr.bf16.mxu0 0
        %873 = vmatpush1.bf16.msra.mxu0 %v588
        %874 = vmatprep.subr.bf16.mxu0 0
        %875 = vmatpush1.bf16.msra.mxu0 %v589
        %876 = vmatprep.subr.bf16.mxu0 0
        %877 = vmatpush1.bf16.msra.mxu0 %v590
        %878 = vmatprep.subr.bf16.mxu0 0
        %879 = vmatpush1.bf16.msra.mxu0 %v591
        %880 = vmatprep.subr.bf16.mxu0 0
        %881 = vmatpush1.bf16.msra.mxu0 %v592
        %882 = vmatprep.subr.bf16.mxu0 0
        %883 = vmatpush1.bf16.msra.mxu0 %v593
        %884 = vmatprep.subr.bf16.mxu0 0
        %885 = vmatpush1.bf16.msra.mxu0 %v594
        %886 = vmatprep.subr.bf16.mxu0 0
        %887 = vmatpush1.bf16.msra.mxu0 %v595
        %888 = vmatprep.subr.bf16.mxu0 0
        %889 = vmatpush1.bf16.msra.mxu0 %v596
        %890 = vmatprep.subr.bf16.mxu0 0
        %891 = vmatpush1.bf16.msra.mxu0 %v597
        %892 = vmatprep.subr.bf16.mxu0 0
        %893 = vmatpush1.bf16.msra.mxu0 %v598
        %894 = vmatprep.subr.bf16.mxu0 0
        %895 = vmatpush1.bf16.msra.mxu0 %v599
        %896 = vmatprep.subr.bf16.mxu0 0
        %897 = vmatpush1.bf16.msra.mxu0 %v600
        %898 = vmatprep.mubr.bf16.mxu0 %v835
        %899 = vmatmul.mubr.bf16.gmra.mrb[0].mxu0 %v834
        %v900 = vpop.f32.mrb[0].mxu0
        %v901 = vadd.f32 0.0, %v900
        %v902 = vpop.f32.mrb[0].mxu0
        %v903 = vpop.f32.mrb[0].mxu0
        %v904 = vadd.f32 0.0, %v903
        %v905 = vpop.f32.mrb[0].mxu0
        %906 = vmatprep.mubr.bf16.mxu0 %v839
        %907 = vmatmul.mubr.bf16.gmra.mrb[0].mxu0 %v838
        %v908 = vpop.f32.mrb[0].mxu0
        %v909 = vadd.f32 0.0, %v908
        %v910 = vpop.f32.mrb[0].mxu0
        %v911 = vpop.f32.mrb[0].mxu0
        %v912 = vadd.f32 0.0, %v911
        %v913 = vpop.f32.mrb[0].mxu0
        %914 = vmatprep.mubr.bf16.mxu0 %v843
        %915 = vmatmul.mubr.bf16.gmra.mrb[0].mxu0 %v842
        %v916 = vpop.f32.mrb[0].mxu0
        %v917 = vadd.f32 0.0, %v916
        %v918 = vpop.f32.mrb[0].mxu0
        %v919 = vpop.f32.mrb[0].mxu0
        %v920 = vadd.f32 0.0, %v919
        %v921 = vpop.f32.mrb[0].mxu0
        %922 = vmatprep.mubr.bf16.mxu0 %v847
        %923 = vmatmul.mubr.bf16.gmra.mrb[0].mxu0 %v846
        %v924 = vpop.f32.mrb[0].mxu0
        %v925 = vadd.f32 0.0, %v924
        %v926 = vpop.f32.mrb[0].mxu0
        %v927 = vpop.f32.mrb[0].mxu0
        %v928 = vpop.f32.mrb[0].mxu0
        %929 = vdwg.mxu0
        %930 = vmatprep.subr.bf16.mxu0 0
        %931 = vmatpush1.bf16.msra.mxu0 %v601
        %932 = vmatprep.subr.bf16.mxu0 0
        %933 = vmatpush1.bf16.msra.mxu0 %v602
        %934 = vmatprep.subr.bf16.mxu0 0
        %935 = vmatpush1.bf16.msra.mxu0 %v603
        %936 = vmatprep.subr.bf16.mxu0 0
        %937 = vmatpush1.bf16.msra.mxu0 %v604
        %938 = vmatprep.subr.bf16.mxu0 0
        %939 = vmatpush1.bf16.msra.mxu0 %v605
        %940 = vmatprep.subr.bf16.mxu0 0
        %941 = vmatpush1.bf16.msra.mxu0 %v606
        %942 = vmatprep.subr.bf16.mxu0 0
        %943 = vmatpush1.bf16.msra.mxu0 %v607
        %944 = vmatprep.subr.bf16.mxu0 0
        %945 = vmatpush1.bf16.msra.mxu0 %v608
        %946 = vmatprep.subr.bf16.mxu0 0
        %947 = vmatpush1.bf16.msra.mxu0 %v609
        %948 = vmatprep.subr.bf16.mxu0 0
        %949 = vmatpush1.bf16.msra.mxu0 %v610
        %950 = vmatprep.subr.bf16.mxu0 0
        %951 = vmatpush1.bf16.msra.mxu0 %v611
        %952 = vmatprep.subr.bf16.mxu0 0
        %953 = vmatpush1.bf16.msra.mxu0 %v612
        %954 = vmatprep.subr.bf16.mxu0 0
        %955 = vmatpush1.bf16.msra.mxu0 %v613
        %956 = vmatprep.subr.bf16.mxu0 0
        %957 = vmatpush1.bf16.msra.mxu0 %v614
        %958 = vmatprep.subr.bf16.mxu0 0
        %959 = vmatpush1.bf16.msra.mxu0 %v615
        %960 = vmatprep.subr.bf16.mxu0 0
        %961 = vmatpush1.bf16.msra.mxu0 %v616
        %962 = vmatprep.mubr.bf16.mxu0 %v837
        %963 = vmatmul.mubr.bf16.gmra.mrb[0].mxu0 %v836
        %v964 = vpop.f32.mrb[0].mxu0
        %v965 = vadd.f32 %v901, %v964
        %v966 = vpop.f32.mrb[0].mxu0
        %v967 = vpop.f32.mrb[0].mxu0
        %v968 = vadd.f32 %v904, %v967
        %v969 = vpop.f32.mrb[0].mxu0
        %970 = vmatprep.mubr.bf16.mxu0 %v841
        %971 = vmatmul.mubr.bf16.gmra.mrb[0].mxu0 %v840
        %v972 = vpop.f32.mrb[0].mxu0
        %v973 = vadd.f32 %v909, %v972
        %v974 = vpop.f32.mrb[0].mxu0
        %v975 = vpop.f32.mrb[0].mxu0
        %v976 = vadd.f32 %v912, %v975
        %v977 = vpop.f32.mrb[0].mxu0
        %978 = vmatprep.mubr.bf16.mxu0 %v845
        %979 = vmatmul.mubr.bf16.gmra.mrb[0].mxu0 %v844
        %v980 = vpop.f32.mrb[0].mxu0
        %v981 = vadd.f32 %v917, %v980
        %v982 = vpop.f32.mrb[0].mxu0
        %v983 = vpop.f32.mrb[0].mxu0
        %v984 = vadd.f32 %v920, %v983
        %v985 = vpop.f32.mrb[0].mxu0
        %986 = vmatprep.mubr.bf16.mxu0 %v849
        %987 = vmatmul.mubr.bf16.gmra.mrb[0].mxu0 %v848
        %v988 = vpop.f32.mrb[0].mxu0
        %v989 = vadd.f32 %v925, %v988
        %v990 = vpop.f32.mrb[0].mxu0
        %v991 = vpop.f32.mrb[0].mxu0
        %v992 = vpop.f32.mrb[0].mxu0
        %993 = vdwg.mxu0
        %s994 = scalar_lea.vmem %s276, 224 [#allocation2]
        %v995 = vld [vmem:[%s994] sm:$0xff]
        %v996 = vld [vmem:[%s994 + $0x8] sm:$0xff]
        %v997 = vld [vmem:[%s994 + $0x10] sm:$0xff]
        %v998 = vld [vmem:[%s994 + $0x18] sm:$0xff]
        %v999 = vld [vmem:[%s994 + $0x20] sm:$0xff]
        %v1000 = vld [vmem:[%s994 + $0x28] sm:$0xff]
        %v1001 = vld [vmem:[%s994 + $0x30] sm:$0xff]
        %v1002 = vld [vmem:[%s994 + $0x38] sm:$0xff]
        %v1003 = vld [vmem:[%s994 + $0x40] sm:$0xff]
        %v1004 = vld [vmem:[%s994 + $0x48] sm:$0xff]
        %v1005 = vld [vmem:[%s994 + $0x50] sm:$0xff]
        %v1006 = vld [vmem:[%s994 + $0x58] sm:$0xff]
        %v1007 = vld [vmem:[%s994 + $0x60] sm:$0xff]
        %v1008 = vld [vmem:[%s994 + $0x68] sm:$0xff]
        %v1023 = vunpack.c.l.b16 %v995
        %v1024 = vunpack.c.h.b16 %v995
        %v1025 = vunpack.c.l.b16 %v996
        %v1026 = vunpack.c.h.b16 %v996
        %v1027 = vunpack.c.l.b16 %v997
        %v1028 = vunpack.c.h.b16 %v997
        %v1029 = vunpack.c.l.b16 %v998
        %v1030 = vunpack.c.h.b16 %v998
        %v1031 = vunpack.c.l.b16 %v999
        %v1032 = vunpack.c.h.b16 %v999
        %v1033 = vunpack.c.l.b16 %v1000
        %v1034 = vunpack.c.h.b16 %v1000
        %v1035 = vunpack.c.l.b16 %v1001
        %v1036 = vunpack.c.h.b16 %v1001
        %v1037 = vunpack.c.l.b16 %v1002
        %v1038 = vunpack.c.h.b16 %v1002
        %v1039 = vunpack.c.l.b16 %v1003
        %v1040 = vunpack.c.h.b16 %v1003
        %v1041 = vunpack.c.l.b16 %v1004
        %v1042 = vunpack.c.h.b16 %v1004
        %v1043 = vunpack.c.l.b16 %v1005
        %v1044 = vunpack.c.h.b16 %v1005
        %v1045 = vunpack.c.l.b16 %v1006
        %v1046 = vunpack.c.h.b16 %v1006
        %v1047 = vunpack.c.l.b16 %v1007
        %v1048 = vunpack.c.h.b16 %v1007
        %v1049 = vunpack.c.l.b16 %v1008
        %v1050 = vunpack.c.h.b16 %v1008
        %v1051 = vpack.c.b16 %v1027, %v1023
        %v1052 = vpack.c.b16 %v1028, %v1024
        %v1053 = vpack.c.b16 %v1029, %v1025
        %v1054 = vpack.c.b16 %v1030, %v1026
        %v1055 = vpack.c.b16 %v1035, %v1031
        %v1056 = vpack.c.b16 %v1036, %v1032
        %v1057 = vpack.c.b16 %v1037, %v1033
        %v1058 = vpack.c.b16 %v1038, %v1034
        %v1059 = vpack.c.b16 %v1043, %v1039
        %v1060 = vpack.c.b16 %v1044, %v1040
        %v1061 = vpack.c.b16 %v1045, %v1041
        %v1062 = vpack.c.b16 %v1046, %v1042
        %v1063 = vpack.c.b16 %v1047, %v1047
        %v1064 = vpack.c.b16 %v1048, %v1048
        %v1065 = vpack.c.b16 %v1049, %v1049
        %v1066 = vpack.c.b16 %v1050, %v1050
        %1083 = vmatprep.subr.bf16.mxu0 0
        %1084 = vmatpush1.bf16.msra.mxu0 %v585
        %1085 = vmatprep.subr.bf16.mxu0 0
        %1086 = vmatpush1.bf16.msra.mxu0 %v586
        %1087 = vmatprep.subr.bf16.mxu0 0
        %1088 = vmatpush1.bf16.msra.mxu0 %v587
        %1089 = vmatprep.subr.bf16.mxu0 0
        %1090 = vmatpush1.bf16.msra.mxu0 %v588
        %1091 = vmatprep.subr.bf16.mxu0 0
        %1092 = vmatpush1.bf16.msra.mxu0 %v589
        %1093 = vmatprep.subr.bf16.mxu0 0
        %1094 = vmatpush1.bf16.msra.mxu0 %v590
        %1095 = vmatprep.subr.bf16.mxu0 0
        %1096 = vmatpush1.bf16.msra.mxu0 %v591
        %1097 = vmatprep.subr.bf16.mxu0 0
        %1098 = vmatpush1.bf16.msra.mxu0 %v592
        %1099 = vmatprep.subr.bf16.mxu0 0
        %1100 = vmatpush1.bf16.msra.mxu0 %v593
        %1101 = vmatprep.subr.bf16.mxu0 0
        %1102 = vmatpush1.bf16.msra.mxu0 %v594
        %1103 = vmatprep.subr.bf16.mxu0 0
        %1104 = vmatpush1.bf16.msra.mxu0 %v595
        %1105 = vmatprep.subr.bf16.mxu0 0
        %1106 = vmatpush1.bf16.msra.mxu0 %v596
        %1107 = vmatprep.subr.bf16.mxu0 0
        %1108 = vmatpush1.bf16.msra.mxu0 %v597
        %1109 = vmatprep.subr.bf16.mxu0 0
        %1110 = vmatpush1.bf16.msra.mxu0 %v598
        %1111 = vmatprep.subr.bf16.mxu0 0
        %1112 = vmatpush1.bf16.msra.mxu0 %v599
        %1113 = vmatprep.subr.bf16.mxu0 0
        %1114 = vmatpush1.bf16.msra.mxu0 %v600
        %1115 = vmatprep.mubr.bf16.mxu0 %v1052
        %1116 = vmatmul.mubr.bf16.gmra.mrb[0].mxu0 %v1051
        %v1117 = vpop.f32.mrb[0].mxu0
        %v1118 = vadd.f32 0.0, %v1117
        %v1119 = vpop.f32.mrb[0].mxu0
        %v1120 = vpop.f32.mrb[0].mxu0
        %v1121 = vadd.f32 0.0, %v1120
        %v1122 = vpop.f32.mrb[0].mxu0
        %1123 = vmatprep.mubr.bf16.mxu0 %v1056
        %1124 = vmatmul.mubr.bf16.gmra.mrb[0].mxu0 %v1055
        %v1125 = vpop.f32.mrb[0].mxu0
        %v1126 = vadd.f32 0.0, %v1125
        %v1127 = vpop.f32.mrb[0].mxu0
        %v1128 = vpop.f32.mrb[0].mxu0
        %v1129 = vadd.f32 0.0, %v1128
        %v1130 = vpop.f32.mrb[0].mxu0
        %1131 = vmatprep.mubr.bf16.mxu0 %v1060
        %1132 = vmatmul.mubr.bf16.gmra.mrb[0].mxu0 %v1059
        %v1133 = vpop.f32.mrb[0].mxu0
        %v1134 = vadd.f32 0.0, %v1133
        %v1135 = vpop.f32.mrb[0].mxu0
        %v1136 = vpop.f32.mrb[0].mxu0
        %v1137 = vadd.f32 0.0, %v1136
        %v1138 = vpop.f32.mrb[0].mxu0
        %1139 = vmatprep.mubr.bf16.mxu0 %v1064
        %1140 = vmatmul.mubr.bf16.gmra.mrb[0].mxu0 %v1063
        %v1141 = vpop.f32.mrb[0].mxu0
        %v1142 = vadd.f32 0.0, %v1141
        %v1143 = vpop.f32.mrb[0].mxu0
        %v1144 = vpop.f32.mrb[0].mxu0
        %v1145 = vpop.f32.mrb[0].mxu0
        %1146 = vdwg.mxu0
        %1147 = vmatprep.subr.bf16.mxu0 0
        %1148 = vmatpush1.bf16.msra.mxu0 %v601
        %1149 = vmatprep.subr.bf16.mxu0 0
        %1150 = vmatpush1.bf16.msra.mxu0 %v602
        %1151 = vmatprep.subr.bf16.mxu0 0
        %1152 = vmatpush1.bf16.msra.mxu0 %v603
        %1153 = vmatprep.subr.bf16.mxu0 0
        %1154 = vmatpush1.bf16.msra.mxu0 %v604
        %1155 = vmatprep.subr.bf16.mxu0 0
        %1156 = vmatpush1.bf16.msra.mxu0 %v605
        %1157 = vmatprep.subr.bf16.mxu0 0
        %1158 = vmatpush1.bf16.msra.mxu0 %v606
        %1159 = vmatprep.subr.bf16.mxu0 0
        %1160 = vmatpush1.bf16.msra.mxu0 %v607
        %1161 = vmatprep.subr.bf16.mxu0 0
        %1162 = vmatpush1.bf16.msra.mxu0 %v608
        %1163 = vmatprep.subr.bf16.mxu0 0
        %1164 = vmatpush1.bf16.msra.mxu0 %v609
        %1165 = vmatprep.subr.bf16.mxu0 0
        %1166 = vmatpush1.bf16.msra.mxu0 %v610
        %1167 = vmatprep.subr.bf16.mxu0 0
        %1168 = vmatpush1.bf16.msra.mxu0 %v611
        %1169 = vmatprep.subr.bf16.mxu0 0
        %1170 = vmatpush1.bf16.msra.mxu0 %v612
        %1171 = vmatprep.subr.bf16.mxu0 0
        %1172 = vmatpush1.bf16.msra.mxu0 %v613
        %1173 = vmatprep.subr.bf16.mxu0 0
        %1174 = vmatpush1.bf16.msra.mxu0 %v614
        %1175 = vmatprep.subr.bf16.mxu0 0
        %1176 = vmatpush1.bf16.msra.mxu0 %v615
        %1177 = vmatprep.subr.bf16.mxu0 0
        %1178 = vmatpush1.bf16.msra.mxu0 %v616
        %1179 = vmatprep.mubr.bf16.mxu0 %v1054
        %1180 = vmatmul.mubr.bf16.gmra.mrb[0].mxu0 %v1053
        %v1181 = vpop.f32.mrb[0].mxu0
        %v1182 = vadd.f32 %v1118, %v1181
        %v1183 = vpop.f32.mrb[0].mxu0
        %v1184 = vpop.f32.mrb[0].mxu0
        %v1185 = vadd.f32 %v1121, %v1184
        %v1186 = vpop.f32.mrb[0].mxu0
        %1187 = vmatprep.mubr.bf16.mxu0 %v1058
        %1188 = vmatmul.mubr.bf16.gmra.mrb[0].mxu0 %v1057
        %v1189 = vpop.f32.mrb[0].mxu0
        %v1190 = vadd.f32 %v1126, %v1189
        %v1191 = vpop.f32.mrb[0].mxu0
        %v1192 = vpop.f32.mrb[0].mxu0
        %v1193 = vadd.f32 %v1129, %v1192
        %v1194 = vpop.f32.mrb[0].mxu0
        %1195 = vmatprep.mubr.bf16.mxu0 %v1062
        %1196 = vmatmul.mubr.bf16.gmra.mrb[0].mxu0 %v1061
        %v1197 = vpop.f32.mrb[0].mxu0
        %v1198 = vadd.f32 %v1134, %v1197
        %v1199 = vpop.f32.mrb[0].mxu0
        %v1200 = vpop.f32.mrb[0].mxu0
        %v1201 = vadd.f32 %v1137, %v1200
        %v1202 = vpop.f32.mrb[0].mxu0
        %1203 = vmatprep.mubr.bf16.mxu0 %v1066
        %1204 = vmatmul.mubr.bf16.gmra.mrb[0].mxu0 %v1065
        %v1205 = vpop.f32.mrb[0].mxu0
        %v1206 = vadd.f32 %v1142, %v1205
        %v1207 = vpop.f32.mrb[0].mxu0
        %v1208 = vpop.f32.mrb[0].mxu0
        %v1209 = vpop.f32.mrb[0].mxu0
        %1210 = vdwg.mxu0
        %s1211 = scalar_lea.vmem %s276, 336 [#allocation2]
        %v1212 = vld [vmem:[%s1211] sm:$0xff]
        %v1213 = vld [vmem:[%s1211 + $0x8] sm:$0xff]
        %v1214 = vld [vmem:[%s1211 + $0x10] sm:$0xff]
        %v1215 = vld [vmem:[%s1211 + $0x18] sm:$0xff]
        %v1216 = vld [vmem:[%s1211 + $0x20] sm:$0xff]
        %v1217 = vld [vmem:[%s1211 + $0x28] sm:$0xff]
        %v1218 = vld [vmem:[%s1211 + $0x30] sm:$0xff]
        %v1219 = vld [vmem:[%s1211 + $0x38] sm:$0xff]
        %v1220 = vld [vmem:[%s1211 + $0x40] sm:$0xff]
        %v1221 = vld [vmem:[%s1211 + $0x48] sm:$0xff]
        %v1222 = vld [vmem:[%s1211 + $0x50] sm:$0xff]
        %v1223 = vld [vmem:[%s1211 + $0x58] sm:$0xff]
        %v1224 = vld [vmem:[%s1211 + $0x60] sm:$0xff]
        %v1225 = vld [vmem:[%s1211 + $0x68] sm:$0xff]
        %v1240 = vunpack.c.l.b16 %v1212
        %v1241 = vunpack.c.h.b16 %v1212
        %v1242 = vunpack.c.l.b16 %v1213
        %v1243 = vunpack.c.h.b16 %v1213
        %v1244 = vunpack.c.l.b16 %v1214
        %v1245 = vunpack.c.h.b16 %v1214
        %v1246 = vunpack.c.l.b16 %v1215
        %v1247 = vunpack.c.h.b16 %v1215
        %v1248 = vunpack.c.l.b16 %v1216
        %v1249 = vunpack.c.h.b16 %v1216
        %v1250 = vunpack.c.l.b16 %v1217
        %v1251 = vunpack.c.h.b16 %v1217
        %v1252 = vunpack.c.l.b16 %v1218
        %v1253 = vunpack.c.h.b16 %v1218
        %v1254 = vunpack.c.l.b16 %v1219
        %v1255 = vunpack.c.h.b16 %v1219
        %v1256 = vunpack.c.l.b16 %v1220
        %v1257 = vunpack.c.h.b16 %v1220
        %v1258 = vunpack.c.l.b16 %v1221
        %v1259 = vunpack.c.h.b16 %v1221
        %v1260 = vunpack.c.l.b16 %v1222
        %v1261 = vunpack.c.h.b16 %v1222
        %v1262 = vunpack.c.l.b16 %v1223
        %v1263 = vunpack.c.h.b16 %v1223
        %v1264 = vunpack.c.l.b16 %v1224
        %v1265 = vunpack.c.h.b16 %v1224
        %v1266 = vunpack.c.l.b16 %v1225
        %v1267 = vunpack.c.h.b16 %v1225
        %v1268 = vpack.c.b16 %v1244, %v1240
        %v1269 = vpack.c.b16 %v1245, %v1241
        %v1270 = vpack.c.b16 %v1246, %v1242
        %v1271 = vpack.c.b16 %v1247, %v1243
        %v1272 = vpack.c.b16 %v1252, %v1248
        %v1273 = vpack.c.b16 %v1253, %v1249
        %v1274 = vpack.c.b16 %v1254, %v1250
        %v1275 = vpack.c.b16 %v1255, %v1251
        %v1276 = vpack.c.b16 %v1260, %v1256
        %v1277 = vpack.c.b16 %v1261, %v1257
        %v1278 = vpack.c.b16 %v1262, %v1258
        %v1279 = vpack.c.b16 %v1263, %v1259
        %v1280 = vpack.c.b16 %v1264, %v1264
        %v1281 = vpack.c.b16 %v1265, %v1265
        %v1282 = vpack.c.b16 %v1266, %v1266
        %v1283 = vpack.c.b16 %v1267, %v1267
        %1300 = vmatprep.subr.bf16.mxu0 0
        %1301 = vmatpush1.bf16.msra.mxu0 %v585
        %1302 = vmatprep.subr.bf16.mxu0 0
        %1303 = vmatpush1.bf16.msra.mxu0 %v586
        %1304 = vmatprep.subr.bf16.mxu0 0
        %1305 = vmatpush1.bf16.msra.mxu0 %v587
        %1306 = vmatprep.subr.bf16.mxu0 0
        %1307 = vmatpush1.bf16.msra.mxu0 %v588
        %1308 = vmatprep.subr.bf16.mxu0 0
        %1309 = vmatpush1.bf16.msra.mxu0 %v589
        %1310 = vmatprep.subr.bf16.mxu0 0
        %1311 = vmatpush1.bf16.msra.mxu0 %v590
        %1312 = vmatprep.subr.bf16.mxu0 0
        %1313 = vmatpush1.bf16.msra.mxu0 %v591
        %1314 = vmatprep.subr.bf16.mxu0 0
        %1315 = vmatpush1.bf16.msra.mxu0 %v592
        %1316 = vmatprep.subr.bf16.mxu0 0
        %1317 = vmatpush1.bf16.msra.mxu0 %v593
        %1318 = vmatprep.subr.bf16.mxu0 0
        %1319 = vmatpush1.bf16.msra.mxu0 %v594
        %1320 = vmatprep.subr.bf16.mxu0 0
        %1321 = vmatpush1.bf16.msra.mxu0 %v595
        %1322 = vmatprep.subr.bf16.mxu0 0
        %1323 = vmatpush1.bf16.msra.mxu0 %v596
        %1324 = vmatprep.subr.bf16.mxu0 0
        %1325 = vmatpush1.bf16.msra.mxu0 %v597
        %1326 = vmatprep.subr.bf16.mxu0 0
        %1327 = vmatpush1.bf16.msra.mxu0 %v598
        %1328 = vmatprep.subr.bf16.mxu0 0
        %1329 = vmatpush1.bf16.msra.mxu0 %v599
        %1330 = vmatprep.subr.bf16.mxu0 0
        %1331 = vmatpush1.bf16.msra.mxu0 %v600
        %1332 = vmatprep.mubr.bf16.mxu0 %v1269
        %1333 = vmatmul.mubr.bf16.gmra.mrb[0].mxu0 %v1268
        %v1334 = vpop.f32.mrb[0].mxu0
        %v1335 = vadd.f32 0.0, %v1334
        %v1336 = vpop.f32.mrb[0].mxu0
        %v1337 = vpop.f32.mrb[0].mxu0
        %v1338 = vadd.f32 0.0, %v1337
        %v1339 = vpop.f32.mrb[0].mxu0
        %1340 = vmatprep.mubr.bf16.mxu0 %v1273
        %1341 = vmatmul.mubr.bf16.gmra.mrb[0].mxu0 %v1272
        %v1342 = vpop.f32.mrb[0].mxu0
        %v1343 = vadd.f32 0.0, %v1342
        %v1344 = vpop.f32.mrb[0].mxu0
        %v1345 = vpop.f32.mrb[0].mxu0
        %v1346 = vadd.f32 0.0, %v1345
        %v1347 = vpop.f32.mrb[0].mxu0
        %1348 = vmatprep.mubr.bf16.mxu0 %v1277
        %1349 = vmatmul.mubr.bf16.gmra.mrb[0].mxu0 %v1276
        %v1350 = vpop.f32.mrb[0].mxu0
        %v1351 = vadd.f32 0.0, %v1350
        %v1352 = vpop.f32.mrb[0].mxu0
        %v1353 = vpop.f32.mrb[0].mxu0
        %v1354 = vadd.f32 0.0, %v1353
        %v1355 = vpop.f32.mrb[0].mxu0
        %1356 = vmatprep.mubr.bf16.mxu0 %v1281
        %1357 = vmatmul.mubr.bf16.gmra.mrb[0].mxu0 %v1280
        %v1358 = vpop.f32.mrb[0].mxu0
        %v1359 = vadd.f32 0.0, %v1358
        %v1360 = vpop.f32.mrb[0].mxu0
        %v1361 = vpop.f32.mrb[0].mxu0
        %v1362 = vpop.f32.mrb[0].mxu0
        %1363 = vdwg.mxu0
        %1364 = vmatprep.subr.bf16.mxu0 0
        %1365 = vmatpush1.bf16.msra.mxu0 %v601
        %1366 = vmatprep.subr.bf16.mxu0 0
        %1367 = vmatpush1.bf16.msra.mxu0 %v602
        %1368 = vmatprep.subr.bf16.mxu0 0
        %1369 = vmatpush1.bf16.msra.mxu0 %v603
        %1370 = vmatprep.subr.bf16.mxu0 0
        %1371 = vmatpush1.bf16.msra.mxu0 %v604
        %1372 = vmatprep.subr.bf16.mxu0 0
        %1373 = vmatpush1.bf16.msra.mxu0 %v605
        %1374 = vmatprep.subr.bf16.mxu0 0
        %1375 = vmatpush1.bf16.msra.mxu0 %v606
        %1376 = vmatprep.subr.bf16.mxu0 0
        %1377 = vmatpush1.bf16.msra.mxu0 %v607
        %1378 = vmatprep.subr.bf16.mxu0 0
        %1379 = vmatpush1.bf16.msra.mxu0 %v608
        %1380 = vmatprep.subr.bf16.mxu0 0
        %1381 = vmatpush1.bf16.msra.mxu0 %v609
        %1382 = vmatprep.subr.bf16.mxu0 0
        %1383 = vmatpush1.bf16.msra.mxu0 %v610
        %1384 = vmatprep.subr.bf16.mxu0 0
        %1385 = vmatpush1.bf16.msra.mxu0 %v611
        %1386 = vmatprep.subr.bf16.mxu0 0
        %1387 = vmatpush1.bf16.msra.mxu0 %v612
        %1388 = vmatprep.subr.bf16.mxu0 0
        %1389 = vmatpush1.bf16.msra.mxu0 %v613
        %1390 = vmatprep.subr.bf16.mxu0 0
        %1391 = vmatpush1.bf16.msra.mxu0 %v614
        %1392 = vmatprep.subr.bf16.mxu0 0
        %1393 = vmatpush1.bf16.msra.mxu0 %v615
        %1394 = vmatprep.subr.bf16.mxu0 0
        %1395 = vmatpush1.bf16.msra.mxu0 %v616
        %1396 = vmatprep.mubr.bf16.mxu0 %v1271
        %1397 = vmatmul.mubr.bf16.gmra.mrb[0].mxu0 %v1270
        %v1398 = vpop.f32.mrb[0].mxu0
        %v1399 = vadd.f32 %v1335, %v1398
        %v1400 = vpop.f32.mrb[0].mxu0
        %v1401 = vpop.f32.mrb[0].mxu0
        %v1402 = vadd.f32 %v1338, %v1401
        %v1403 = vpop.f32.mrb[0].mxu0
        %1404 = vmatprep.mubr.bf16.mxu0 %v1275
        %1405 = vmatmul.mubr.bf16.gmra.mrb[0].mxu0 %v1274
        %v1406 = vpop.f32.mrb[0].mxu0
        %v1407 = vadd.f32 %v1343, %v1406
        %v1408 = vpop.f32.mrb[0].mxu0
        %v1409 = vpop.f32.mrb[0].mxu0
        %v1410 = vadd.f32 %v1346, %v1409
        %v1411 = vpop.f32.mrb[0].mxu0
        %1412 = vmatprep.mubr.bf16.mxu0 %v1279
        %1413 = vmatmul.mubr.bf16.gmra.mrb[0].mxu0 %v1278
        %v1414 = vpop.f32.mrb[0].mxu0
        %v1415 = vadd.f32 %v1351, %v1414
        %v1416 = vpop.f32.mrb[0].mxu0
        %v1417 = vpop.f32.mrb[0].mxu0
        %v1418 = vadd.f32 %v1354, %v1417
        %v1419 = vpop.f32.mrb[0].mxu0
        %1420 = vmatprep.mubr.bf16.mxu0 %v1283
        %1421 = vmatmul.mubr.bf16.gmra.mrb[0].mxu0 %v1282
        %v1422 = vpop.f32.mrb[0].mxu0
        %v1423 = vadd.f32 %v1359, %v1422
        %v1424 = vpop.f32.mrb[0].mxu0
        %v1425 = vpop.f32.mrb[0].mxu0
        %v1426 = vpop.f32.mrb[0].mxu0
        %1427 = vdwg.mxu0
        %v1428 = vmax.f32 %v748, %v965
        %v1429 = vmax.f32 %v751, %v968
        %v1430 = vmax.f32 %v756, %v973
        %v1431 = vmax.f32 %v759, %v976
        %v1432 = vmax.f32 %v764, %v981
        %v1433 = vmax.f32 %v767, %v984
        %v1434 = vmax.f32 %v772, %v989
        %v1435 = vmax.f32 %v1182, %v1399
        %v1436 = vmax.f32 %v1185, %v1402
        %v1437 = vmax.f32 %v1190, %v1407
        %v1438 = vmax.f32 %v1193, %v1410
        %v1439 = vmax.f32 %v1198, %v1415
        %v1440 = vmax.f32 %v1201, %v1418
        %v1441 = vmax.f32 %v1206, %v1423
        %v1442 = vmax.f32 %v1428, %v1435
        %v1443 = vmax.f32 %v1429, %v1436
        %v1444 = vmax.f32 %v1430, %v1437
        %v1445 = vmax.f32 %v1431, %v1438
        %v1446 = vmax.f32 %v1432, %v1439
        %v1447 = vmax.f32 %v1433, %v1440
        %v1448 = vmax.f32 %v1434, %v1441
        %v1449 = vld [vmem:[%s2] sm:$0x1]
        %v1451 = vlaneseq
        %v1452 = vshrl.u32 %v1451, 7
        %v1453 = vsub.s32 0, %v1452
        %v1454 = vrot.slane %v1449, %v1453
        %v1456 = vadd.f32 %v1442, %v1454
        %v1457 = vadd.f32 %v1443, %v1454
        %v1458 = vadd.f32 %v1444, %v1454
        %v1459 = vadd.f32 %v1445, %v1454
        %v1460 = vadd.f32 %v1446, %v1454
        %v1461 = vadd.f32 %v1447, %v1454
        %v1462 = vadd.f32 %v1448, %v1454
        %v1463 = vmax.f32 %v1456, 0.0
        %v1464 = vmax.f32 %v1457, 0.0
        %v1465 = vmax.f32 %v1458, 0.0
        %v1466 = vmax.f32 %v1459, 0.0
        %v1467 = vmax.f32 %v1460, 0.0
        %v1468 = vmax.f32 %v1461, 0.0
        %v1469 = vmax.f32 %v1462, 0.0
        %v1470 = vpack.c.bf16 %v1464, %v1463
        %v1471 = vpack.c.bf16 %v1466, %v1465
        %v1472 = vpack.c.bf16 %v1468, %v1467
        %v1473 = vpack.c.bf16 %v1469, %v1469
        %v1478 = vunpack.c.l.b16 %v1470
        %v1479 = vunpack.c.h.b16 %v1470
        %v1480 = vunpack.c.l.b16 %v1471
        %v1481 = vunpack.c.h.b16 %v1471
        %v1482 = vunpack.c.l.b16 %v1472
        %v1483 = vunpack.c.h.b16 %v1472
        %v1484 = vunpack.c.l.b16 %v1473
        %v1485 = vpack.c.b16 %v1478, %v1478
        %v1486 = vpack.c.b16 %v1479, %v1479
        %v1487 = vpack.c.b16 %v1480, %v1480
        %v1488 = vpack.c.b16 %v1481, %v1481
        %v1489 = vpack.c.b16 %v1482, %v1482
        %v1490 = vpack.c.b16 %v1483, %v1483
        %v1491 = vpack.c.b16 %v1484, %v1484
        %1499 = vst [vmem:[%s302] sm:$0xf] %v1485
        %1500 = vst [vmem:[%s302 + $0x4] sm:$0xf] %v1486
        %1501 = vst [vmem:[%s302 + $0x8] sm:$0xf] %v1487
        %1502 = vst [vmem:[%s302 + $0xc] sm:$0xf] %v1488
        %1503 = vst [vmem:[%s302 + $0x10] sm:$0xf] %v1489
        %1504 = vst [vmem:[%s302 + $0x14] sm:$0xf] %v1490
        %1505 = vst [vmem:[%s302 + $0x18] sm:$0xf] %v1491
        %s1506 = smul.u32 7, %s14
        %p1507 = scmp.lt.s32.totalorder %s1506, 13
        %s1508 = scalar_select %p1507, %s1506, 13
        %s1509 = smul.addr %s1508, 4
        %s1510 = scalar_lea.vmem %s3, %s1509
        // Predicated region
        $region56: #{student_cnn_cifar10_forward.4} parent=50 // pred_check
          %p1511 = pneg %p100
        $region57: #{student_cnn_cifar10_forward.4} parent=50 // pred_check_branch
          %1513 = sbr.rel (%p1511) target = $region59
        $region58: #{student_cnn_cifar10_forward.4} parent=50 // pred_region
          %s1514 = smul.u32 7, %s14
        $region59: #{student_cnn_cifar10_forward.4} parent=50 // pred_fallthru
          _
      $region51: #{student_cnn_cifar10_forward.4} parent=5 // pred_fallthru
        _
      %p1515 = scmp.le.s32.totalorder 2, %s9
      // Predicated region
      $region60: #{student_cnn_cifar10_forward.4} parent=5 // pred_check
        %p1516 = pneg %p1515
      $region61: #{student_cnn_cifar10_forward.4} parent=5 // pred_check_branch
        %1518 = sbr.rel (%p1516) target = $region63
      $region62: #{student_cnn_cifar10_forward.4} parent=5 // pred_region
        %s1519 = ssub.s32 %s9, 2
        // Predicated region
        $region64: #{student_cnn_cifar10_forward.4} parent=62 // pred_check
          %p1520 = pneg %p106
        $region65: #{student_cnn_cifar10_forward.4} parent=62 // pred_check_branch
          %1522 = sbr.rel (%p1520) target = $region67
        $region66: #{student_cnn_cifar10_forward.4} parent=62 // pred_region
          %s1523 = smul.u32 7, %s15
          %p1524 = scmp.lt.s32.totalorder %s1523, 13
          %s1525 = scalar_select %p1524, %s1523, 13
          %s1526 = smul.addr %s1525, 4
          %s1527 = scalar_lea.vmem %s3, %s1526
        $region67: #{student_cnn_cifar10_forward.4} parent=62 // pred_fallthru
          _
      $region63: #{student_cnn_cifar10_forward.4} parent=5 // pred_fallthru
        _
    $region6: #{student_cnn_cifar10_forward.4} parent=1 // loop_footer
      %s13 = sadd.s32 1, %s9
    $region7: #{student_cnn_cifar10_forward.4} parent=1 // loop_footer_branch
      %8 = sbr.rel target = $region3
    $region8: #{student_cnn_cifar10_forward.4} parent=1 // loop_exit
      _

// kernel: student_cnn_cifar10_forward.5
$region0: #{student_cnn_cifar10_forward.5}
  #allocation0 [shape = 'u32[]', space=smem, size = 0x4, offset = 0x4, fixed_abs, tag = 'smem constant byte address 0x4 - core index']
  #allocation1 [shape = 'u32[144,128]{1,0:T(1,128)}', space=vmem, size = 0x12000, scoped, tag = 'internal scratch']
  %s0 = inlined_call_operand.vmem [shape: bf16[8,512], index: 0, kind: input, shape index: {}]
  %s1 = inlined_call_operand.vmem [shape: bf16[512,256], index: 1, kind: input, shape index: {}]
  %s2 = inlined_call_operand.vmem [shape: f32[1,256], index: 2, kind: input, shape index: {}]
  %s3 = inlined_call_operand.vmem [shape: bf16[256,128], index: 3, kind: input, shape index: {}]
  %s4 = inlined_call_operand.vmem [shape: f32[1,128], index: 4, kind: input, shape index: {}]
  %s5 = inlined_call_operand.vmem [shape: bf16[128,128], index: 5, kind: input, shape index: {}]
  %s6 = inlined_call_operand.vmem [shape: f32[1,128], index: 6, kind: input, shape index: {}]
  %s7 = inlined_call_operand.vmem [shape: f32[8,128], index: 7, kind: output, shape index: {}]
  %s8 = sld [smem:[#allocation0]]
  $region38: #{student_cnn_cifar10_forward.5} parent=0
    _
  %s10 = ssub.s32 1, %s8
  %s11 = scalar_select 0, %s10, %s8
  // Predicated region
  $region2: #{student_cnn_cifar10_forward.5} parent=0 // pred_check
    _
  $region3: #{student_cnn_cifar10_forward.5} parent=0 // pred_check_branch
    %13 = sbr.rel (0) target = $region5
  $region4: #{student_cnn_cifar10_forward.5} parent=0 // pred_region
    _
  $region5: #{student_cnn_cifar10_forward.5} parent=0 // pred_fallthru
    _
  // Predicated region
  $region6: #{student_cnn_cifar10_forward.5} parent=0 // pred_check
    _
  $region7: #{student_cnn_cifar10_forward.5} parent=0 // pred_check_branch
    %15 = sbr.rel (0) target = $region9
  $region8: #{student_cnn_cifar10_forward.5} parent=0 // pred_region
    _
  $region9: #{student_cnn_cifar10_forward.5} parent=0 // pred_fallthru
    _
  // Predicated region
  $region10: #{student_cnn_cifar10_forward.5} parent=0 // pred_check
    _
  $region11: #{student_cnn_cifar10_forward.5} parent=0 // pred_check_branch
    %17 = sbr.rel (0) target = $region13
  $region12: #{student_cnn_cifar10_forward.5} parent=0 // pred_region
    _
  $region13: #{student_cnn_cifar10_forward.5} parent=0 // pred_fallthru
    _
  // Predicated region
  $region14: #{student_cnn_cifar10_forward.5} parent=0 // pred_check
    _
  $region15: #{student_cnn_cifar10_forward.5} parent=0 // pred_check_branch
    %19 = sbr.rel (0) target = $region17
  $region16: #{student_cnn_cifar10_forward.5} parent=0 // pred_region
    _
  $region17: #{student_cnn_cifar10_forward.5} parent=0 // pred_fallthru
    _
  // Predicated region
  $region18: #{student_cnn_cifar10_forward.5} parent=0 // pred_check
    _
  $region19: #{student_cnn_cifar10_forward.5} parent=0 // pred_check_branch
    %21 = sbr.rel (0) target = $region21
  $region20: #{student_cnn_cifar10_forward.5} parent=0 // pred_region
    _
  $region21: #{student_cnn_cifar10_forward.5} parent=0 // pred_fallthru
    _
  // Predicated region
  $region22: #{student_cnn_cifar10_forward.5} parent=0 // pred_check
    _
  $region23: #{student_cnn_cifar10_forward.5} parent=0 // pred_check_branch
    %23 = sbr.rel (0) target = $region25
  $region24: #{student_cnn_cifar10_forward.5} parent=0 // pred_region
    _
  $region25: #{student_cnn_cifar10_forward.5} parent=0 // pred_fallthru
    _
  // Predicated region
  $region26: #{student_cnn_cifar10_forward.5} parent=0 // pred_check
    _
  $region27: #{student_cnn_cifar10_forward.5} parent=0 // pred_check_branch
    %25 = sbr.rel (0) target = $region29
  $region28: #{student_cnn_cifar10_forward.5} parent=0 // pred_region
    _
  $region29: #{student_cnn_cifar10_forward.5} parent=0 // pred_fallthru
    _
  %v27 = vld [vmem:[%s0] sm:$0xff]
  %v28 = vld [vmem:[%s0 + $0x8] sm:$0xff]
  %v29 = vld [vmem:[%s1] sm:$0xff]
  %v30 = vld [vmem:[%s1 + $0x8] sm:$0xff]
  %v31 = vld [vmem:[%s1 + $0x10] sm:$0xff]
  %v32 = vld [vmem:[%s1 + $0x18] sm:$0xff]
  %v33 = vld [vmem:[%s1 + $0x20] sm:$0xff]
  %v34 = vld [vmem:[%s1 + $0x28] sm:$0xff]
  %v35 = vld [vmem:[%s1 + $0x30] sm:$0xff]
  %v36 = vld [vmem:[%s1 + $0x38] sm:$0xff]
  %v37 = vld [vmem:[%s1 + $0x40] sm:$0xff]
  %v38 = vld [vmem:[%s1 + $0x48] sm:$0xff]
  %v39 = vld [vmem:[%s1 + $0x50] sm:$0xff]
  %v40 = vld [vmem:[%s1 + $0x58] sm:$0xff]
  %v41 = vld [vmem:[%s1 + $0x60] sm:$0xff]
  %v42 = vld [vmem:[%s1 + $0x68] sm:$0xff]
  %v43 = vld [vmem:[%s1 + $0x70] sm:$0xff]
  %v44 = vld [vmem:[%s1 + $0x78] sm:$0xff]
  %v45 = vld [vmem:[%s1 + $0x80] sm:$0xff]
  %v46 = vld [vmem:[%s1 + $0x88] sm:$0xff]
  %v47 = vld [vmem:[%s1 + $0x90] sm:$0xff]
  %v48 = vld [vmem:[%s1 + $0x98] sm:$0xff]
  %v49 = vld [vmem:[%s1 + $0xa0] sm:$0xff]
  %v50 = vld [vmem:[%s1 + $0xa8] sm:$0xff]
  %v51 = vld [vmem:[%s1 + $0xb0] sm:$0xff]
  %v52 = vld [vmem:[%s1 + $0xb8] sm:$0xff]
  %v53 = vld [vmem:[%s1 + $0xc0] sm:$0xff]
  %v54 = vld [vmem:[%s1 + $0xc8] sm:$0xff]
  %v55 = vld [vmem:[%s1 + $0xd0] sm:$0xff]
  %v56 = vld [vmem:[%s1 + $0xd8] sm:$0xff]
  %v57 = vld [vmem:[%s1 + $0xe0] sm:$0xff]
  %v58 = vld [vmem:[%s1 + $0xe8] sm:$0xff]
  %v59 = vld [vmem:[%s1 + $0xf0] sm:$0xff]
  %v60 = vld [vmem:[%s1 + $0xf8] sm:$0xff]
  %v61 = vld [vmem:[%s1 + $0x100] sm:$0xff]
  %v62 = vld [vmem:[%s1 + $0x108] sm:$0xff]
  %v63 = vld [vmem:[%s1 + $0x110] sm:$0xff]
  %v64 = vld [vmem:[%s1 + $0x118] sm:$0xff]
  %v65 = vld [vmem:[%s1 + $0x120] sm:$0xff]
  %v66 = vld [vmem:[%s1 + $0x128] sm:$0xff]
  %v67 = vld [vmem:[%s1 + $0x130] sm:$0xff]
  %v68 = vld [vmem:[%s1 + $0x138] sm:$0xff]
  %v69 = vld [vmem:[%s1 + $0x140] sm:$0xff]
  %v70 = vld [vmem:[%s1 + $0x148] sm:$0xff]
  %v71 = vld [vmem:[%s1 + $0x150] sm:$0xff]
  %v72 = vld [vmem:[%s1 + $0x158] sm:$0xff]
  %v73 = vld [vmem:[%s1 + $0x160] sm:$0xff]
  %v74 = vld [vmem:[%s1 + $0x168] sm:$0xff]
  %v75 = vld [vmem:[%s1 + $0x170] sm:$0xff]
  %v76 = vld [vmem:[%s1 + $0x178] sm:$0xff]
  %v77 = vld [vmem:[%s1 + $0x180] sm:$0xff]
  %v78 = vld [vmem:[%s1 + $0x188] sm:$0xff]
  %v79 = vld [vmem:[%s1 + $0x190] sm:$0xff]
  %v80 = vld [vmem:[%s1 + $0x198] sm:$0xff]
  %v81 = vld [vmem:[%s1 + $0x1a0] sm:$0xff]
  %v82 = vld [vmem:[%s1 + $0x1a8] sm:$0xff]
  %v83 = vld [vmem:[%s1 + $0x1b0] sm:$0xff]
  %v84 = vld [vmem:[%s1 + $0x1b8] sm:$0xff]
  %v85 = vld [vmem:[%s1 + $0x1c0] sm:$0xff]
  %v86 = vld [vmem:[%s1 + $0x1c8] sm:$0xff]
  %v87 = vld [vmem:[%s1 + $0x1d0] sm:$0xff]
  %v88 = vld [vmem:[%s1 + $0x1d8] sm:$0xff]
  %v89 = vld [vmem:[%s1 + $0x1e0] sm:$0xff]
  %v90 = vld [vmem:[%s1 + $0x1e8] sm:$0xff]
  %v91 = vld [vmem:[%s1 + $0x1f0] sm:$0xff]
  %v92 = vld [vmem:[%s1 + $0x1f8] sm:$0xff]
  %v93 = vld [vmem:[%s2] sm:$0x3]
  %v95 = vlaneseq
  %v96 = vshrl.u32 %v95, 7
  %v97 = vsub.s32 0, %v96
  %v98 = vrot.slane %v93, %v97
  %v99 = vlaneseq
  %v100 = vshrl.u32 %v99, 7
  %v101 = vsub.s32 1, %v100
  %v102 = vrot.slane %v93, %v101
  %v107 = vunpack.c.l.b16 %v27
  %v108 = vunpack.c.h.b16 %v27
  %v109 = vunpack.c.l.b16 %v28
  %v110 = vunpack.c.h.b16 %v28
  %v111 = vpack.c.b16 %v107, %v107
  %v112 = vpack.c.b16 %v108, %v108
  %v113 = vpack.c.b16 %v109, %v109
  %v114 = vpack.c.b16 %v110, %v110
  %v183 = vunpack.c.l.b16 %v29
  %v184 = vunpack.c.h.b16 %v29
  %v185 = vunpack.c.l.b16 %v30
  %v186 = vunpack.c.h.b16 %v30
  %v187 = vunpack.c.l.b16 %v31
  %v188 = vunpack.c.h.b16 %v31
  %v189 = vunpack.c.l.b16 %v32
  %v190 = vunpack.c.h.b16 %v32
  %v191 = vunpack.c.l.b16 %v33
  %v192 = vunpack.c.h.b16 %v33
  %v193 = vunpack.c.l.b16 %v34
  %v194 = vunpack.c.h.b16 %v34
  %v195 = vunpack.c.l.b16 %v35
  %v196 = vunpack.c.h.b16 %v35
  %v197 = vunpack.c.l.b16 %v36
  %v198 = vunpack.c.h.b16 %v36
  %v199 = vunpack.c.l.b16 %v37
  %v200 = vunpack.c.h.b16 %v37
  %v201 = vunpack.c.l.b16 %v38
  %v202 = vunpack.c.h.b16 %v38
  %v203 = vunpack.c.l.b16 %v39
  %v204 = vunpack.c.h.b16 %v39
  %v205 = vunpack.c.l.b16 %v40
  %v206 = vunpack.c.h.b16 %v40
  %v207 = vunpack.c.l.b16 %v41
  %v208 = vunpack.c.h.b16 %v41
  %v209 = vunpack.c.l.b16 %v42
  %v210 = vunpack.c.h.b16 %v42
  %v211 = vunpack.c.l.b16 %v43
  %v212 = vunpack.c.h.b16 %v43
  %v213 = vunpack.c.l.b16 %v44
  %v214 = vunpack.c.h.b16 %v44
  %v215 = vunpack.c.l.b16 %v45
  %v216 = vunpack.c.h.b16 %v45
  %v217 = vunpack.c.l.b16 %v46
  %v218 = vunpack.c.h.b16 %v46
  %v219 = vunpack.c.l.b16 %v47
  %v220 = vunpack.c.h.b16 %v47
  %v221 = vunpack.c.l.b16 %v48
  %v222 = vunpack.c.h.b16 %v48
  %v223 = vunpack.c.l.b16 %v49
  %v224 = vunpack.c.h.b16 %v49
  %v225 = vunpack.c.l.b16 %v50
  %v226 = vunpack.c.h.b16 %v50
  %v227 = vunpack.c.l.b16 %v51
  %v228 = vunpack.c.h.b16 %v51
  %v229 = vunpack.c.l.b16 %v52
  %v230 = vunpack.c.h.b16 %v52
  %v231 = vunpack.c.l.b16 %v53
  %v232 = vunpack.c.h.b16 %v53
  %v233 = vunpack.c.l.b16 %v54
  %v234 = vunpack.c.h.b16 %v54
  %v235 = vunpack.c.l.b16 %v55
  %v236 = vunpack.c.h.b16 %v55
  %v237 = vunpack.c.l.b16 %v56
  %v238 = vunpack.c.h.b16 %v56
  %v239 = vunpack.c.l.b16 %v57
  %v240 = vunpack.c.h.b16 %v57
  %v241 = vunpack.c.l.b16 %v58
  %v242 = vunpack.c.h.b16 %v58
  %v243 = vunpack.c.l.b16 %v59
  %v244 = vunpack.c.h.b16 %v59
  %v245 = vunpack.c.l.b16 %v60
  %v246 = vunpack.c.h.b16 %v60
  %v247 = vunpack.c.l.b16 %v61
  %v248 = vunpack.c.h.b16 %v61
  %v249 = vunpack.c.l.b16 %v62
  %v250 = vunpack.c.h.b16 %v62
  %v251 = vunpack.c.l.b16 %v63
  %v252 = vunpack.c.h.b16 %v63
  %v253 = vunpack.c.l.b16 %v64
  %v254 = vunpack.c.h.b16 %v64
  %v255 = vunpack.c.l.b16 %v65
  %v256 = vunpack.c.h.b16 %v65
  %v257 = vunpack.c.l.b16 %v66
  %v258 = vunpack.c.h.b16 %v66
  %v259 = vunpack.c.l.b16 %v67
  %v260 = vunpack.c.h.b16 %v67
  %v261 = vunpack.c.l.b16 %v68
  %v262 = vunpack.c.h.b16 %v68
  %v263 = vunpack.c.l.b16 %v69
  %v264 = vunpack.c.h.b16 %v69
  %v265 = vunpack.c.l.b16 %v70
  %v266 = vunpack.c.h.b16 %v70
  %v267 = vunpack.c.l.b16 %v71
  %v268 = vunpack.c.h.b16 %v71
  %v269 = vunpack.c.l.b16 %v72
  %v270 = vunpack.c.h.b16 %v72
  %v271 = vunpack.c.l.b16 %v73
  %v272 = vunpack.c.h.b16 %v73
  %v273 = vunpack.c.l.b16 %v74
  %v274 = vunpack.c.h.b16 %v74
  %v275 = vunpack.c.l.b16 %v75
  %v276 = vunpack.c.h.b16 %v75
  %v277 = vunpack.c.l.b16 %v76
  %v278 = vunpack.c.h.b16 %v76
  %v279 = vunpack.c.l.b16 %v77
  %v280 = vunpack.c.h.b16 %v77
  %v281 = vunpack.c.l.b16 %v78
  %v282 = vunpack.c.h.b16 %v78
  %v283 = vunpack.c.l.b16 %v79
  %v284 = vunpack.c.h.b16 %v79
  %v285 = vunpack.c.l.b16 %v80
  %v286 = vunpack.c.h.b16 %v80
  %v287 = vunpack.c.l.b16 %v81
  %v288 = vunpack.c.h.b16 %v81
  %v289 = vunpack.c.l.b16 %v82
  %v290 = vunpack.c.h.b16 %v82
  %v291 = vunpack.c.l.b16 %v83
  %v292 = vunpack.c.h.b16 %v83
  %v293 = vunpack.c.l.b16 %v84
  %v294 = vunpack.c.h.b16 %v84
  %v295 = vunpack.c.l.b16 %v85
  %v296 = vunpack.c.h.b16 %v85
  %v297 = vunpack.c.l.b16 %v86
  %v298 = vunpack.c.h.b16 %v86
  %v299 = vunpack.c.l.b16 %v87
  %v300 = vunpack.c.h.b16 %v87
  %v301 = vunpack.c.l.b16 %v88
  %v302 = vunpack.c.h.b16 %v88
  %v303 = vunpack.c.l.b16 %v89
  %v304 = vunpack.c.h.b16 %v89
  %v305 = vunpack.c.l.b16 %v90
  %v306 = vunpack.c.h.b16 %v90
  %v307 = vunpack.c.l.b16 %v91
  %v308 = vunpack.c.h.b16 %v91
  %v309 = vunpack.c.l.b16 %v92
  %v310 = vunpack.c.h.b16 %v92
  %v311 = vpack.c.b16 %v185, %v183
  %v312 = vpack.c.b16 %v186, %v184
  %v313 = vpack.c.b16 %v189, %v187
  %v314 = vpack.c.b16 %v190, %v188
  %v315 = vpack.c.b16 %v193, %v191
  %v316 = vpack.c.b16 %v194, %v192
  %v317 = vpack.c.b16 %v197, %v195
  %v318 = vpack.c.b16 %v198, %v196
  %v319 = vpack.c.b16 %v201, %v199
  %v320 = vpack.c.b16 %v202, %v200
  %v321 = vpack.c.b16 %v205, %v203
  %v322 = vpack.c.b16 %v206, %v204
  %v323 = vpack.c.b16 %v209, %v207
  %v324 = vpack.c.b16 %v210, %v208
  %v325 = vpack.c.b16 %v213, %v211
  %v326 = vpack.c.b16 %v214, %v212
  %v327 = vpack.c.b16 %v217, %v215
  %v328 = vpack.c.b16 %v218, %v216
  %v329 = vpack.c.b16 %v221, %v219
  %v330 = vpack.c.b16 %v222, %v220
  %v331 = vpack.c.b16 %v225, %v223
  %v332 = vpack.c.b16 %v226, %v224
  %v333 = vpack.c.b16 %v229, %v227
  %v334 = vpack.c.b16 %v230, %v228
  %v335 = vpack.c.b16 %v233, %v231
  %v336 = vpack.c.b16 %v234, %v232
  %v337 = vpack.c.b16 %v237, %v235
  %v338 = vpack.c.b16 %v238, %v236
  %v339 = vpack.c.b16 %v241, %v239
  %v340 = vpack.c.b16 %v242, %v240
  %v341 = vpack.c.b16 %v245, %v243
  %v342 = vpack.c.b16 %v246, %v244
  %v343 = vpack.c.b16 %v249, %v247
  %v344 = vpack.c.b16 %v250, %v248
  %v345 = vpack.c.b16 %v253, %v251
  %v346 = vpack.c.b16 %v254, %v252
  %v347 = vpack.c.b16 %v257, %v255
  %v348 = vpack.c.b16 %v258, %v256
  %v349 = vpack.c.b16 %v261, %v259
  %v350 = vpack.c.b16 %v262, %v260
  %v351 = vpack.c.b16 %v265, %v263
  %v352 = vpack.c.b16 %v266, %v264
  %v353 = vpack.c.b16 %v269, %v267
  %v354 = vpack.c.b16 %v270, %v268
  %v355 = vpack.c.b16 %v273, %v271
  %v356 = vpack.c.b16 %v274, %v272
  %v357 = vpack.c.b16 %v277, %v275
  %v358 = vpack.c.b16 %v278, %v276
  %v359 = vpack.c.b16 %v281, %v279
  %v360 = vpack.c.b16 %v282, %v280
  %v361 = vpack.c.b16 %v285, %v283
  %v362 = vpack.c.b16 %v286, %v284
  %v363 = vpack.c.b16 %v289, %v287
  %v364 = vpack.c.b16 %v290, %v288
  %v365 = vpack.c.b16 %v293, %v291
  %v366 = vpack.c.b16 %v294, %v292
  %v367 = vpack.c.b16 %v297, %v295
  %v368 = vpack.c.b16 %v298, %v296
  %v369 = vpack.c.b16 %v301, %v299
  %v370 = vpack.c.b16 %v302, %v300
  %v371 = vpack.c.b16 %v305, %v303
  %v372 = vpack.c.b16 %v306, %v304
  %v373 = vpack.c.b16 %v309, %v307
  %v374 = vpack.c.b16 %v310, %v308
  %439 = vmatprep.subr.bf16.mxu0 %v312
  %440 = vmatpush1.bf16.msra.mxu0 %v311
  %441 = vmatprep.subr.bf16.mxu0 %v314
  %442 = vmatpush1.bf16.msra.mxu0 %v313
  %443 = vmatprep.subr.bf16.mxu0 %v316
  %444 = vmatpush1.bf16.msra.mxu0 %v315
  %445 = vmatprep.subr.bf16.mxu0 %v318
  %446 = vmatpush1.bf16.msra.mxu0 %v317
  %447 = vmatprep.subr.bf16.mxu0 %v320
  %448 = vmatpush1.bf16.msra.mxu0 %v319
  %449 = vmatprep.subr.bf16.mxu0 %v322
  %450 = vmatpush1.bf16.msra.mxu0 %v321
  %451 = vmatprep.subr.bf16.mxu0 %v324
  %452 = vmatpush1.bf16.msra.mxu0 %v323
  %453 = vmatprep.subr.bf16.mxu0 %v326
  %454 = vmatpush1.bf16.msra.mxu0 %v325
  %455 = vmatprep.subr.bf16.mxu0 %v328
  %456 = vmatpush1.bf16.msra.mxu0 %v327
  %457 = vmatprep.subr.bf16.mxu0 %v330
  %458 = vmatpush1.bf16.msra.mxu0 %v329
  %459 = vmatprep.subr.bf16.mxu0 %v332
  %460 = vmatpush1.bf16.msra.mxu0 %v331
  %461 = vmatprep.subr.bf16.mxu0 %v334
  %462 = vmatpush1.bf16.msra.mxu0 %v333
  %463 = vmatprep.subr.bf16.mxu0 %v336
  %464 = vmatpush1.bf16.msra.mxu0 %v335
  %465 = vmatprep.subr.bf16.mxu0 %v338
  %466 = vmatpush1.bf16.msra.mxu0 %v337
  %467 = vmatprep.subr.bf16.mxu0 %v340
  %468 = vmatpush1.bf16.msra.mxu0 %v339
  %469 = vmatprep.subr.bf16.mxu0 %v342
  %470 = vmatpush1.bf16.msra.mxu0 %v341
  %471 = vmatprep.mubr.bf16.mxu0 %v112
  %472 = vmatmul.mubr.bf16.gmra.mrb[0].mxu0 %v111
  %v473 = vpop.f32.mrb[0].mxu0
  %v474 = vadd.f32 %v98, %v473
  %v475 = vpop.f32.mrb[0].mxu0
  %v476 = vadd.f32 %v102, %v475
  %v477 = vpop.f32.mrb[0].mxu0
  %v478 = vpop.f32.mrb[0].mxu0
  %479 = vdwg.mxu0
  %480 = vmatprep.subr.bf16.mxu0 %v344
  %481 = vmatpush1.bf16.msra.mxu0 %v343
  %482 = vmatprep.subr.bf16.mxu0 %v346
  %483 = vmatpush1.bf16.msra.mxu0 %v345
  %484 = vmatprep.subr.bf16.mxu0 %v348
  %485 = vmatpush1.bf16.msra.mxu0 %v347
  %486 = vmatprep.subr.bf16.mxu0 %v350
  %487 = vmatpush1.bf16.msra.mxu0 %v349
  %488 = vmatprep.subr.bf16.mxu0 %v352
  %489 = vmatpush1.bf16.msra.mxu0 %v351
  %490 = vmatprep.subr.bf16.mxu0 %v354
  %491 = vmatpush1.bf16.msra.mxu0 %v353
  %492 = vmatprep.subr.bf16.mxu0 %v356
  %493 = vmatpush1.bf16.msra.mxu0 %v355
  %494 = vmatprep.subr.bf16.mxu0 %v358
  %495 = vmatpush1.bf16.msra.mxu0 %v357
  %496 = vmatprep.subr.bf16.mxu0 %v360
  %497 = vmatpush1.bf16.msra.mxu0 %v359
  %498 = vmatprep.subr.bf16.mxu0 %v362
  %499 = vmatpush1.bf16.msra.mxu0 %v361
  %500 = vmatprep.subr.bf16.mxu0 %v364
  %501 = vmatpush1.bf16.msra.mxu0 %v363
  %502 = vmatprep.subr.bf16.mxu0 %v366
  %503 = vmatpush1.bf16.msra.mxu0 %v365
  %504 = vmatprep.subr.bf16.mxu0 %v368
  %505 = vmatpush1.bf16.msra.mxu0 %v367
  %506 = vmatprep.subr.bf16.mxu0 %v370
  %507 = vmatpush1.bf16.msra.mxu0 %v369
  %508 = vmatprep.subr.bf16.mxu0 %v372
  %509 = vmatpush1.bf16.msra.mxu0 %v371
  %510 = vmatprep.subr.bf16.mxu0 %v374
  %511 = vmatpush1.bf16.msra.mxu0 %v373
  %512 = vmatprep.mubr.bf16.mxu0 %v114
  %513 = vmatmul.mubr.bf16.gmra.mrb[0].mxu0 %v113
  %v514 = vpop.f32.mrb[0].mxu0
  %v515 = vadd.f32 %v474, %v514
  %v516 = vpop.f32.mrb[0].mxu0
  %v517 = vadd.f32 %v476, %v516
  %v518 = vpop.f32.mrb[0].mxu0
  %v519 = vpop.f32.mrb[0].mxu0
  %520 = vdwg.mxu0
  %v521 = vmax.f32 %v515, 0.0
  %v522 = vmax.f32 %v517, 0.0
  %v523 = vpack.c.bf16 %v521, %v521
  %v524 = vpack.c.bf16 %v522, %v522
  %v525 = vld [vmem:[%s3] sm:$0xf]
  %v526 = vld [vmem:[%s3 + $0x4] sm:$0xf]
  %v527 = vld [vmem:[%s3 + $0x8] sm:$0xf]
  %v528 = vld [vmem:[%s3 + $0xc] sm:$0xf]
  %v529 = vld [vmem:[%s3 + $0x10] sm:$0xf]
  %v530 = vld [vmem:[%s3 + $0x14] sm:$0xf]
  %v531 = vld [vmem:[%s3 + $0x18] sm:$0xf]
  %v532 = vld [vmem:[%s3 + $0x1c] sm:$0xf]
  %v533 = vld [vmem:[%s3 + $0x20] sm:$0xf]
  %v534 = vld [vmem:[%s3 + $0x24] sm:$0xf]
  %v535 = vld [vmem:[%s3 + $0x28] sm:$0xf]
  %v536 = vld [vmem:[%s3 + $0x2c] sm:$0xf]
  %v537 = vld [vmem:[%s3 + $0x30] sm:$0xf]
  %v538 = vld [vmem:[%s3 + $0x34] sm:$0xf]
  %v539 = vld [vmem:[%s3 + $0x38] sm:$0xf]
  %v540 = vld [vmem:[%s3 + $0x3c] sm:$0xf]
  %v541 = vld [vmem:[%s3 + $0x40] sm:$0xf]
  %v542 = vld [vmem:[%s3 + $0x44] sm:$0xf]
  %v543 = vld [vmem:[%s3 + $0x48] sm:$0xf]
  %v544 = vld [vmem:[%s3 + $0x4c] sm:$0xf]
  %v545 = vld [vmem:[%s3 + $0x50] sm:$0xf]
  %v546 = vld [vmem:[%s3 + $0x54] sm:$0xf]
  %v547 = vld [vmem:[%s3 + $0x58] sm:$0xf]
  %v548 = vld [vmem:[%s3 + $0x5c] sm:$0xf]
  %v549 = vld [vmem:[%s3 + $0x60] sm:$0xf]
  %v550 = vld [vmem:[%s3 + $0x64] sm:$0xf]
  %v551 = vld [vmem:[%s3 + $0x68] sm:$0xf]
  %v552 = vld [vmem:[%s3 + $0x6c] sm:$0xf]
  %v553 = vld [vmem:[%s3 + $0x70] sm:$0xf]
  %v554 = vld [vmem:[%s3 + $0x74] sm:$0xf]
  %v555 = vld [vmem:[%s3 + $0x78] sm:$0xf]
  %v556 = vld [vmem:[%s3 + $0x7c] sm:$0xf]
  %v557 = vld [vmem:[%s4] sm:$0x1]
  %v559 = vlaneseq
  %v560 = vshrl.u32 %v559, 7
  %v561 = vsub.s32 0, %v560
  %v562 = vrot.slane %v557, %v561
  %v596 = vunpack.c.l.b16 %v525
  %v597 = vunpack.c.l.b16 %v526
  %v598 = vunpack.c.l.b16 %v527
  %v599 = vunpack.c.l.b16 %v528
  %v600 = vunpack.c.l.b16 %v529
  %v601 = vunpack.c.l.b16 %v530
  %v602 = vunpack.c.l.b16 %v531
  %v603 = vunpack.c.l.b16 %v532
  %v604 = vunpack.c.l.b16 %v533
  %v605 = vunpack.c.l.b16 %v534
  %v606 = vunpack.c.l.b16 %v535
  %v607 = vunpack.c.l.b16 %v536
  %v608 = vunpack.c.l.b16 %v537
  %v609 = vunpack.c.l.b16 %v538
  %v610 = vunpack.c.l.b16 %v539
  %v611 = vunpack.c.l.b16 %v540
  %v612 = vunpack.c.l.b16 %v541
  %v613 = vunpack.c.l.b16 %v542
  %v614 = vunpack.c.l.b16 %v543
  %v615 = vunpack.c.l.b16 %v544
  %v616 = vunpack.c.l.b16 %v545
  %v617 = vunpack.c.l.b16 %v546
  %v618 = vunpack.c.l.b16 %v547
  %v619 = vunpack.c.l.b16 %v548
  %v620 = vunpack.c.l.b16 %v549
  %v621 = vunpack.c.l.b16 %v550
  %v622 = vunpack.c.l.b16 %v551
  %v623 = vunpack.c.l.b16 %v552
  %v624 = vunpack.c.l.b16 %v553
  %v625 = vunpack.c.l.b16 %v554
  %v626 = vunpack.c.l.b16 %v555
  %v627 = vunpack.c.l.b16 %v556
  %v628 = vpack.c.b16 %v597, %v596
  %v629 = vpack.c.b16 %v599, %v598
  %v630 = vpack.c.b16 %v601, %v600
  %v631 = vpack.c.b16 %v603, %v602
  %v632 = vpack.c.b16 %v605, %v604
  %v633 = vpack.c.b16 %v607, %v606
  %v634 = vpack.c.b16 %v609, %v608
  %v635 = vpack.c.b16 %v611, %v610
  %v636 = vpack.c.b16 %v613, %v612
  %v637 = vpack.c.b16 %v615, %v614
  %v638 = vpack.c.b16 %v617, %v616
  %v639 = vpack.c.b16 %v619, %v618
  %v640 = vpack.c.b16 %v621, %v620
  %v641 = vpack.c.b16 %v623, %v622
  %v642 = vpack.c.b16 %v625, %v624
  %v643 = vpack.c.b16 %v627, %v626
  %660 = vmatprep.subr.bf16.mxu0 0
  %661 = vmatpush1.bf16.msra.mxu0 %v628
  %662 = vmatprep.subr.bf16.mxu0 0
  %663 = vmatpush1.bf16.msra.mxu0 %v629
  %664 = vmatprep.subr.bf16.mxu0 0
  %665 = vmatpush1.bf16.msra.mxu0 %v630
  %666 = vmatprep.subr.bf16.mxu0 0
  %667 = vmatpush1.bf16.msra.mxu0 %v631
  %668 = vmatprep.subr.bf16.mxu0 0
  %669 = vmatpush1.bf16.msra.mxu0 %v632
  %670 = vmatprep.subr.bf16.mxu0 0
  %671 = vmatpush1.bf16.msra.mxu0 %v633
  %672 = vmatprep.subr.bf16.mxu0 0
  %673 = vmatpush1.bf16.msra.mxu0 %v634
  %674 = vmatprep.subr.bf16.mxu0 0
  %675 = vmatpush1.bf16.msra.mxu0 %v635
  %676 = vmatprep.subr.bf16.mxu0 0
  %677 = vmatpush1.bf16.msra.mxu0 %v636
  %678 = vmatprep.subr.bf16.mxu0 0
  %679 = vmatpush1.bf16.msra.mxu0 %v637
  %680 = vmatprep.subr.bf16.mxu0 0
  %681 = vmatpush1.bf16.msra.mxu0 %v638
  %682 = vmatprep.subr.bf16.mxu0 0
  %683 = vmatpush1.bf16.msra.mxu0 %v639
  %684 = vmatprep.subr.bf16.mxu0 0
  %685 = vmatpush1.bf16.msra.mxu0 %v640
  %686 = vmatprep.subr.bf16.mxu0 0
  %687 = vmatpush1.bf16.msra.mxu0 %v641
  %688 = vmatprep.subr.bf16.mxu0 0
  %689 = vmatpush1.bf16.msra.mxu0 %v642
  %690 = vmatprep.subr.bf16.mxu0 0
  %691 = vmatpush1.bf16.msra.mxu0 %v643
  %692 = vmatprep.mubr.bf16.mxu0 %v524
  %693 = vmatmul.mubr.bf16.gmra.mrb[0].mxu0 %v523
  %v694 = vpop.f32.mrb[0].mxu0
  %v695 = vadd.f32 %v562, %v694
  %v696 = vpop.f32.mrb[0].mxu0
  %v697 = vpop.f32.mrb[0].mxu0
  %v698 = vpop.f32.mrb[0].mxu0
  %699 = vdwg.mxu0
  %v700 = vmax.f32 %v695, 0.0
  %v701 = vpack.c.bf16 %v700, %v700
  %v702 = vld [vmem:[%s5] sm:$0xf]
  %v703 = vld [vmem:[%s5 + $0x4] sm:$0xf]
  %v704 = vld [vmem:[%s5 + $0x8] sm:$0xf]
  %v705 = vld [vmem:[%s5 + $0xc] sm:$0xf]
  %v706 = vld [vmem:[%s5 + $0x10] sm:$0xf]
  %v707 = vld [vmem:[%s5 + $0x14] sm:$0xf]
  %v708 = vld [vmem:[%s5 + $0x18] sm:$0xf]
  %v709 = vld [vmem:[%s5 + $0x1c] sm:$0xf]
  %v710 = vld [vmem:[%s5 + $0x20] sm:$0xf]
  %v711 = vld [vmem:[%s5 + $0x24] sm:$0xf]
  %v712 = vld [vmem:[%s5 + $0x28] sm:$0xf]
  %v713 = vld [vmem:[%s5 + $0x2c] sm:$0xf]
  %v714 = vld [vmem:[%s5 + $0x30] sm:$0xf]
  %v715 = vld [vmem:[%s5 + $0x34] sm:$0xf]
  %v716 = vld [vmem:[%s5 + $0x38] sm:$0xf]
  %v717 = vld [vmem:[%s5 + $0x3c] sm:$0xf]
  %v718 = vld [vmem:[%s6] sm:$0x1]
  %v720 = vlaneseq
  %v721 = vshrl.u32 %v720, 7
  %v722 = vsub.s32 0, %v721
  %v723 = vrot.slane %v718, %v722
  %v741 = vunpack.c.l.b16 %v702
  %v742 = vunpack.c.l.b16 %v703
  %v743 = vunpack.c.l.b16 %v704
  %v744 = vunpack.c.l.b16 %v705
  %v745 = vunpack.c.l.b16 %v706
  %v746 = vunpack.c.l.b16 %v707
  %v747 = vunpack.c.l.b16 %v708
  %v748 = vunpack.c.l.b16 %v709
  %v749 = vunpack.c.l.b16 %v710
  %v750 = vunpack.c.l.b16 %v711
  %v751 = vunpack.c.l.b16 %v712
  %v752 = vunpack.c.l.b16 %v713
  %v753 = vunpack.c.l.b16 %v714
  %v754 = vunpack.c.l.b16 %v715
  %v755 = vunpack.c.l.b16 %v716
  %v756 = vunpack.c.l.b16 %v717
  %v757 = vpack.c.b16 %v742, %v741
  %v758 = vpack.c.b16 %v744, %v743
  %v759 = vpack.c.b16 %v746, %v745
  %v760 = vpack.c.b16 %v748, %v747
  %v761 = vpack.c.b16 %v750, %v749
  %v762 = vpack.c.b16 %v752, %v751
  %v763 = vpack.c.b16 %v754, %v753
  %v764 = vpack.c.b16 %v756, %v755
  %773 = vmatprep.subr.bf16.mxu0 0
  %774 = vmatpush1.bf16.msra.mxu0 %v757
  %775 = vmatprep.subr.bf16.mxu0 0
  %776 = vmatpush1.bf16.msra.mxu0 %v758
  %777 = vmatprep.subr.bf16.mxu0 0
  %778 = vmatpush1.bf16.msra.mxu0 %v759
  %779 = vmatprep.subr.bf16.mxu0 0
  %780 = vmatpush1.bf16.msra.mxu0 %v760
  %781 = vmatprep.subr.bf16.mxu0 0
  %782 = vmatpush1.bf16.msra.mxu0 %v761
  %783 = vmatprep.subr.bf16.mxu0 0
  %784 = vmatpush1.bf16.msra.mxu0 %v762
  %785 = vmatprep.subr.bf16.mxu0 0
  %786 = vmatpush1.bf16.msra.mxu0 %v763
  %787 = vmatprep.subr.bf16.mxu0 0
  %788 = vmatpush1.bf16.msra.mxu0 %v764
  %789 = vmatprep.subr.bf16.mxu0 0
  %790 = vmatpush1.bf16.msra.mxu0 0
  %791 = vmatprep.subr.bf16.mxu0 0
  %792 = vmatpush1.bf16.msra.mxu0 0
  %793 = vmatprep.subr.bf16.mxu0 0
  %794 = vmatpush1.bf16.msra.mxu0 0
  %795 = vmatprep.subr.bf16.mxu0 0
  %796 = vmatpush1.bf16.msra.mxu0 0
  %797 = vmatprep.subr.bf16.mxu0 0
  %798 = vmatpush1.bf16.msra.mxu0 0
  %799 = vmatprep.subr.bf16.mxu0 0
  %800 = vmatpush1.bf16.msra.mxu0 0
  %801 = vmatprep.subr.bf16.mxu0 0
  %802 = vmatpush1.bf16.msra.mxu0 0
  %803 = vmatprep.subr.bf16.mxu0 0
  %804 = vmatpush1.bf16.msra.mxu0 0
  %805 = vmatprep.mubr.bf16.mxu0 0
  %806 = vmatmul.mubr.bf16.gmra.mrb[0].mxu0 %v701
  %v807 = vpop.f32.mrb[0].mxu0
  %v808 = vadd.f32 %v723, %v807
  %v809 = vpop.f32.mrb[0].mxu0
  %v810 = vpop.f32.mrb[0].mxu0
  %v811 = vpop.f32.mrb[0].mxu0
  %812 = vdwg.mxu0
  %813 = vst [vmem:[%s7] sm:$0xff] %v808
  // Predicated region
  $region30: #{student_cnn_cifar10_forward.5} parent=0 // pred_check
    _
  $region31: #{student_cnn_cifar10_forward.5} parent=0 // pred_check_branch
    %815 = sbr.rel (0) target = $region33
  $region32: #{student_cnn_cifar10_forward.5} parent=0 // pred_region
    _
  $region33: #{student_cnn_cifar10_forward.5} parent=0 // pred_fallthru
    _
  // Predicated region
  $region34: #{student_cnn_cifar10_forward.5} parent=0 // pred_check
    _
  $region35: #{student_cnn_cifar10_forward.5} parent=0 // pred_check_branch
    %817 = sbr.rel (0) target = $region37
  $region36: #{student_cnn_cifar10_forward.5} parent=0 // pred_region
    _
  $region37: #{student_cnn_cifar10_forward.5} parent=0 // pred_fallthru
    _

</llo_original>
